<compile_context>
chip_gen: v7x
topology: tpu7x:2x2x1
jax: 0.10.0
libtpu: 0.0.40
codegen_flags: <defaults>
</compile_context>

<pallas_src>
from functools import partial

import jax
import jax.numpy as jnp
from jax.experimental import pallas as pl
from jax.experimental.pallas import tpu as pltpu


# ----------------------------------------------------------------------------
# Per-chip budget (review: don't hard-code 48 MiB / TM=256; v7x has 64 MiB/TC)
# ----------------------------------------------------------------------------
def _phys_vmem_bytes():
    try:
        return int(pltpu.get_tpu_info().vmem_capacity_bytes)
    except Exception:
        return 64 * 1024 * 1024          # assume the smallest (v7x per-TC)


_VMEM_LIMIT = min(int(_phys_vmem_bytes()) * 5 // 8, 96 * 1024 * 1024)
_TM = 512                                # row tile for M-tiled matmul kernels


def _compiler_params(n_parallel_axes=1):
    return pltpu.CompilerParams(
        dimension_semantics=("parallel",) * n_parallel_axes,
        vmem_limit_bytes=_VMEM_LIMIT,
    )


def _row_tile(m):
    """Largest multiple-of-8 tile <= _TM that divides m, preferring >= 2 grid
    steps so the 'parallel' M axis still shards across both v7x TensorCores."""
    if m <= 8 or m % 8 != 0:
        return m
    cap = (min(_TM, m // 2) // 8) * 8
    for t in range(cap, 7, -8):
        if m % t == 0:
            return t
    return m


# ----------------------------------------------------------------------------
# Shared softmax-attention helper (runs on VMEM values inside kernels)
# ----------------------------------------------------------------------------
def _sdpa(q, k, v, scale):
    s = jax.lax.dot_general(
        q.astype(jnp.bfloat16), k.astype(jnp.bfloat16),
        (((1,), (1,)), ((), ())), preferred_element_type=jnp.float32) * scale
    s = s - jnp.max(s, axis=-1, keepdims=True)
    p = jnp.exp(s)
    inv = pl.reciprocal(jnp.sum(p, axis=-1, keepdims=True), approx=False)
    return jnp.dot((p * inv).astype(jnp.bfloat16), v.astype(jnp.bfloat16),
                   preferred_element_type=jnp.float32)


# ----------------------------------------------------------------------------
# Fused encoder layer attention:
#   RMSNorm -> qkv proj -> rotary -> SDPA -> out proj (+bias) -> +residual
# One grid step per batch element; single lane-dense (S, D) store.
# ----------------------------------------------------------------------------
def _encoder_attn_kernel(x_ref, g_ref, wqkv_ref, cos_ref, sin_ref, rot_ref,
                         wout_ref, bout_ref, o_ref, *, heads, dh, scale):
    x = x_ref[0]                                          # (S, D) f32
    D = heads * dh
    # x-transformers RMSNorm: x / (||x|| * dim^-0.5).clamp(1e-8) * g
    nrm = jnp.sqrt(jnp.sum(x * x, axis=-1, keepdims=True)) * (D ** -0.5)
    xn = x / jnp.maximum(nrm, 1e-8) * g_ref[...]
    qkv = jnp.dot(xn.astype(jnp.bfloat16), wqkv_ref[...],
                  preferred_element_type=jnp.float32)     # (S, 3D) in VMEM only
    cos = cos_ref[...]                                    # (S, dh), 1 past rot
    sin = sin_ref[...]                                    # (S, dh), 0 past rot
    rot = rot_ref[...]                                    # (dh, dh) rotate_half
    w_out = wout_ref[...]
    acc = x + bout_ref[...]                               # residual + out bias
    # TODO(synk): flash-style KV tiling for long S; heads could also be batched
    # through one dot_general to fill the 256-wide MXU on v6e/v7x.
    for h in range(heads):
        q = qkv[:, h * dh:(h + 1) * dh]
        k = qkv[:, D + h * dh:D + (h + 1) * dh]
        v = qkv[:, 2 * D + h * dh:2 * D + (h + 1) * dh]
        # rotary: x*cos + rotate_half(x)*sin with rotate_half as a tiny matmul
        q = q * cos + jnp.dot(q.astype(jnp.bfloat16), rot,
                              preferred_element_type=jnp.float32) * sin
        k = k * cos + jnp.dot(k.astype(jnp.bfloat16), rot,
                              preferred_element_type=jnp.float32) * sin
        o_h = _sdpa(q, k, v, scale)                       # (S, dh)
        # fold this head straight into the out-projection -> full-width add,
        # no sub-128-lane stores anywhere.
        acc = acc + jnp.dot(o_h.astype(jnp.bfloat16),
                            w_out[h * dh:(h + 1) * dh, :],
                            preferred_element_type=jnp.float32)
    o_ref[0] = acc


def encoder_attention_layer(h, g, w_qkv, w_out, b_out, cos, sin, rot,
                            *, heads, dh):
    B, S, D = h.shape
    scale = float(dh) ** -0.5
    flops = int(B * (2 * S * D * 3 * D + 4 * heads * S * S * dh
                     + 2 * S * D * D + 4 * heads * S * dh * dh))
    bytes_accessed = int(2 * B * S * D * 4 + 4 * D * D * 2 + 3 * S * dh * 4)
    return pl.pallas_call(
        partial(_encoder_attn_kernel, heads=heads, dh=dh, scale=scale),
        grid=(B,),
        out_shape=jax.ShapeDtypeStruct((B, S, D), jnp.float32),
        in_specs=[
            pl.BlockSpec((1, S, D), lambda b: (b, 0, 0)),
            pl.BlockSpec((1, D), lambda b: (0, 0)),
            pl.BlockSpec((D, 3 * D), lambda b: (0, 0)),   # resident weights
            pl.BlockSpec((S, dh), lambda b: (0, 0)),
            pl.BlockSpec((S, dh), lambda b: (0, 0)),
            pl.BlockSpec((dh, dh), lambda b: (0, 0)),
            pl.BlockSpec((D, D), lambda b: (0, 0)),
            pl.BlockSpec((1, D), lambda b: (0, 0)),
        ],
        out_specs=pl.BlockSpec((1, S, D), lambda b: (b, 0, 0)),
        compiler_params=_compiler_params(1),
        cost_estimate=pl.CostEstimate(
            flops=flops,
            transcendentals=int(B * heads * S * S + B * S),
            bytes_accessed=bytes_accessed),
    )(h, g.reshape(1, D), w_qkv, cos, sin, rot, w_out, b_out.reshape(1, D))


# ----------------------------------------------------------------------------
# Fused RMSNorm + GLU feed-forward + residual (ff_glu=True, ff_mult=1), M-tiled
# ----------------------------------------------------------------------------
def _rms_glu_ff_kernel(x_ref, g_ref, w1_ref, b1_ref, w2_ref, b2_ref, o_ref,
                       *, inner):
    x = x_ref[...]
    nrm = jnp.sqrt(jnp.sum(x * x, axis=-1, keepdims=True)) * (x.shape[-1] ** -0.5)
    xn = x / jnp.maximum(nrm, 1e-8) * g_ref[...]
    hmid = (jnp.dot(xn.astype(jnp.bfloat16), w1_ref[...],
                    preferred_element_type=jnp.float32) + b1_ref[...])
    val = hmid[:, :inner]
    gate = hmid[:, inner:]
    # TODO(synk): torch F.gelu is the exact erf GELU; tanh approximation used
    # for guaranteed Mosaic lowering (~1e-3 relative difference).
    y = val * jax.nn.gelu(gate, approximate=True)
    o_ref[...] = (jnp.dot(y.astype(jnp.bfloat16), w2_ref[...],
                          preferred_element_type=jnp.float32)
                  + b2_ref[...] + x)                      # residual = pre-norm x


def glu_ff(x2d, g, w1, b1, w2, b2):
    M, D = x2d.shape
    N2 = w1.shape[1]
    inner = w2.shape[0]
    tm = _row_tile(M)
    grid = (pl.cdiv(M, tm),)
    flops = int(2 * M * D * N2 + 2 * M * inner * D)
    bytes_accessed = int(M * D * 4 * 2 + (D * N2 + inner * D) * 2)
    return pl.pallas_call(
        partial(_rms_glu_ff_kernel, inner=inner),
        grid=grid,
        out_shape=jax.ShapeDtypeStruct((M, D), jnp.float32),
        in_specs=[
            pl.BlockSpec((tm, D), lambda i: (i, 0)),
            pl.BlockSpec((1, D), lambda i: (0, 0)),
            pl.BlockSpec((D, N2), lambda i: (0, 0)),      # resident weights
            pl.BlockSpec((1, N2), lambda i: (0, 0)),
            pl.BlockSpec((inner, D), lambda i: (0, 0)),
            pl.BlockSpec((1, D), lambda i: (0, 0)),
        ],
        out_specs=pl.BlockSpec((tm, D), lambda i: (i, 0)),
        compiler_params=_compiler_params(1),
        cost_estimate=pl.CostEstimate(flops=flops,
                                      transcendentals=int(M * (inner + 1)),
                                      bytes_accessed=bytes_accessed),
    )(x2d, g.reshape(1, D), w1, b1.reshape(1, N2), w2, b2.reshape(1, D))


# ----------------------------------------------------------------------------
# Fused final LayerNorm + pre_combiner conv1 (kernel-size-1 conv == matmul)
# ----------------------------------------------------------------------------
def _ln_linear_kernel(x_ref, g_ref, beta_ref, w_ref, b_ref, o_ref):
    x = x_ref[...]
    mu = jnp.mean(x, axis=-1, keepdims=True)
    var = jnp.mean(jnp.square(x - mu), axis=-1, keepdims=True)
    xn = (x - mu) * jax.lax.rsqrt(var + 1e-5) * g_ref[...] + beta_ref[...]
    o_ref[...] = (jnp.dot(xn.astype(jnp.bfloat16), w_ref[...],
                          preferred_element_type=jnp.float32) + b_ref[...])


def ln_linear(x2d, ln_g, ln_b, w, b):
    M, K = x2d.shape
    N = w.shape[1]
    tm = _row_tile(M)
    grid = (pl.cdiv(M, tm),)
    return pl.pallas_call(
        _ln_linear_kernel,
        grid=grid,
        out_shape=jax.ShapeDtypeStruct((M, N), jnp.float32),
        in_specs=[
            pl.BlockSpec((tm, K), lambda i: (i, 0)),
            pl.BlockSpec((1, K), lambda i: (0, 0)),
            pl.BlockSpec((1, K), lambda i: (0, 0)),
            pl.BlockSpec((K, N), lambda i: (0, 0)),       # resident weight
            pl.BlockSpec((1, N), lambda i: (0, 0)),
        ],
        out_specs=pl.BlockSpec((tm, N), lambda i: (i, 0)),
        compiler_params=_compiler_params(1),
        cost_estimate=pl.CostEstimate(flops=int(2 * M * K * N),
                                      transcendentals=int(M),
                                      bytes_accessed=int(M * (K + N) * 4 + K * N * 2)),
    )(x2d, ln_g.reshape(1, K), ln_b.reshape(1, K), w, b.reshape(1, N))


# ----------------------------------------------------------------------------
# Fused AttentionBlock + eval-mode masked_mean + final 1x1 conv (per batch):
#   GroupNorm(affine folded) -> qkv -> QKVAttentionLegacy -> proj_out
#   -> +residual -> mean over S -> conv2
# ----------------------------------------------------------------------------
def _attnblock_kernel(x_ref, sc_ref, sh_ref, wqkv_ref, bqkv_ref, wproj_ref,
                      bproj_ref, w2_ref, b2_ref, o_ref,
                      *, heads, ch, scale, inv_s):
    x = x_ref[0]                                          # (S, Do) f32
    xn = x * sc_ref[0] + sh_ref[0]                        # folded GroupNorm
    qkv = (jnp.dot(xn.astype(jnp.bfloat16), wqkv_ref[...],
                   preferred_element_type=jnp.float32) + bqkv_ref[...])
    wproj = wproj_ref[...]
    acc = x + bproj_ref[...]                              # residual + proj bias
    for h in range(heads):
        base = 3 * ch * h                                 # QKVAttentionLegacy layout
        q = qkv[:, base:base + ch]
        k = qkv[:, base + ch:base + 2 * ch]
        v = qkv[:, base + 2 * ch:base + 3 * ch]
        o_h = _sdpa(q, k, v, scale)
        acc = acc + jnp.dot(o_h.astype(jnp.bfloat16),
                            wproj[h * ch:(h + 1) * ch, :],
                            preferred_element_type=jnp.float32)
    # eval-mode mask == ones -> masked_mean is a plain mean over S; conv2 is
    # affine so it commutes with the mean -> run it on the pooled row only.
    # TODO(synk): training-mode random mask / dropout paths not implemented.
    pooled = jnp.sum(acc, axis=0, keepdims=True) * inv_s  # (1, Do)
    o_ref[0] = (jnp.dot(pooled.astype(jnp.bfloat16), w2_ref[...],
                        preferred_element_type=jnp.float32) + b2_ref[...])


def attnblock_pool_conv(h, gn_scale, gn_shift, p, *, heads):
    B, S, Do = h.shape
    ch = Do // heads
    scale = float(ch) ** -0.5
    out = pl.pallas_call(
        partial(_attnblock_kernel, heads=heads, ch=ch, scale=scale,
                inv_s=1.0 / S),
        grid=(B,),
        out_shape=jax.ShapeDtypeStruct((B, 1, Do), jnp.float32),
        in_specs=[
            pl.BlockSpec((1, S, Do), lambda b: (b, 0, 0)),
            pl.BlockSpec((1, 1, Do), lambda b: (b, 0, 0)),
            pl.BlockSpec((1, 1, Do), lambda b: (b, 0, 0)),
            pl.BlockSpec((Do, 3 * Do), lambda b: (0, 0)),
            pl.BlockSpec((1, 3 * Do), lambda b: (0, 0)),
            pl.BlockSpec((Do, Do), lambda b: (0, 0)),
            pl.BlockSpec((1, Do), lambda b: (0, 0)),
            pl.BlockSpec((Do, Do), lambda b: (0, 0)),
            pl.BlockSpec((1, Do), lambda b: (0, 0)),
        ],
        out_specs=pl.BlockSpec((1, 1, Do), lambda b: (b, 0, 0)),
        compiler_params=_compiler_params(1),
        cost_estimate=pl.CostEstimate(
            flops=int(B * (2 * S * Do * 3 * Do + 4 * heads * S * S * ch
                           + 2 * S * Do * Do + 2 * Do * Do)),
            transcendentals=int(B * heads * S * S),
            bytes_accessed=int(B * S * Do * 4 + B * Do * 4 + 5 * Do * Do * 2)),
    )(h, gn_scale.reshape(B, 1, Do), gn_shift.reshape(B, 1, Do),
      p["attnblk_qkv_w"], p["attnblk_qkv_b"].reshape(1, 3 * Do),
      p["attnblk_proj_w"], p["attnblk_proj_b"].reshape(1, Do),
      p["conv2_w"], p["conv2_b"].reshape(1, Do))
    return out.reshape(B, Do)


# ----------------------------------------------------------------------------
# Plain-JAX glue (tiny cross-sequence reductions / constant tables)
# ----------------------------------------------------------------------------
def groupnorm_affine(h, gamma, beta, groups=32, eps=1e-5):
    """Fold torch GroupNorm(32, C) on channels-last (B, S, C) into a per-(b, c)
    affine: xn = x * scale + shift.  Tiny reduction -> stays in XLA."""
    B, S, C = h.shape
    xg = h.reshape(B, S, groups, C // groups)
    mu = jnp.mean(xg, axis=(1, 3))                        # (B, groups)
    var = jnp.mean(jnp.square(xg - mu[:, None, :, None]), axis=(1, 3))
    rstd = jax.lax.rsqrt(var + eps)
    mu = jnp.repeat(mu, C // groups, axis=1)              # (B, C)
    rstd = jnp.repeat(rstd, C // groups, axis=1)
    scale = rstd * gamma[None, :]
    shift = beta[None, :] - mu * scale
    return scale, shift


def rotary_tables(seq_len, dh, rot_dim):
    """Full-head-width cos/sin tables (cos=1, sin=0 past rot_dim) plus the
    constant rotate_half matrix so the kernel needs no lane slicing/concat."""
    half = rot_dim // 2
    inv_freq = 1.0 / (10000.0 ** (jnp.arange(0, rot_dim, 2, dtype=jnp.float32)
                                  / rot_dim))
    t = jnp.arange(seq_len, dtype=jnp.float32)
    freqs = jnp.einsum("i,j->ij", t, inv_freq)            # (S, half)
    emb = jnp.concatenate([freqs, freqs], axis=-1)        # (S, rot_dim)
    cos = jnp.cos(emb)
    sin = jnp.sin(emb)
    if rot_dim < dh:                                      # passthrough channels
        cos = jnp.concatenate(
            [cos, jnp.ones((seq_len, dh - rot_dim), jnp.float32)], axis=-1)
        sin = jnp.concatenate(
            [sin, jnp.zeros((seq_len, dh - rot_dim), jnp.float32)], axis=-1)
    # rotate_half(x) == x @ rot:  rh[j] = -x[j+half] (j<half), x[j-half] (else)
    rot = jnp.zeros((dh, dh), jnp.float32)
    idx = jnp.arange(half)
    rot = rot.at[idx + half, idx].set(-1.0)
    rot = rot.at[idx, idx + half].set(1.0)
    return cos, sin, rot.astype(jnp.bfloat16)


# ----------------------------------------------------------------------------
# Forward pass
# ----------------------------------------------------------------------------
def collapsing_transformer_forward(x, params, *, heads):
    B, S, D = x.shape
    dh = D // heads
    rot_dim = min(32, dh)
    cos, sin, rot = rotary_tables(S, dh, rot_dim)

    # ContinuousTransformerWrapper (use_pos_emb=False, identity projections)
    h = x
    for lp in params["layers"]:
        # pre-RMSNorm rotary self-attention; out-projection + residual fused
        h = encoder_attention_layer(h, lp["attn_norm_g"], lp["w_qkv"],
                                    lp["w_out"], lp["b_out"], cos, sin, rot,
                                    heads=heads, dh=dh)
        # pre-RMSNorm GLU feed-forward + residual (dropout inactive in eval)
        h = glu_ff(h.reshape(B * S, D), lp["ff_norm_g"], lp["ff_w1"],
                   lp["ff_b1"], lp["ff_w2"], lp["ff_b2"]).reshape(B, S, D)

    # final LayerNorm fused with pre_combiner conv1 (1x1 conv == matmul)
    Do = params["conv1_w"].shape[1]
    h = ln_linear(h.reshape(B * S, D), params["final_ln_g"],
                  params["final_ln_b"], params["conv1_w"],
                  params["conv1_b"]).reshape(B, S, Do)

    # AttentionBlock + masked_mean(mask==ones) + conv2, one fused kernel.
    gsc, gsh = groupnorm_affine(h, params["gn_g"], params["gn_b"], groups=32)
    return attnblock_pool_conv(h, gsc, gsh, params, heads=heads)


# ----------------------------------------------------------------------------
# Deterministic parameter init (shapes per CollapsingTransformer.__init__)
# Matmul weights stored in bf16 (MXU operands); biases/norm params in f32.
# ----------------------------------------------------------------------------
def init_params(key, model_dim, output_dims, heads, depth):
    D, Do = model_dim, output_dims
    dh = D // heads
    inner = D  # ff_mult = 1
    keys = iter(jax.random.split(key, 8 + 4 * depth))

    def w(shape, scale=0.02):
        return (jax.random.normal(next(keys), shape, jnp.float32) * scale
                ).astype(jnp.bfloat16)

    params = {"layers": []}
    for _ in range(depth):
        params["layers"].append({
            "attn_norm_g": jnp.ones((D,), jnp.float32),
            "w_qkv": w((D, 3 * heads * dh)),
            "w_out": w((heads * dh, D)),
            "b_out": jnp.zeros((D,), jnp.float32),
            "ff_norm_g": jnp.ones((D,), jnp.float32),
            "ff_w1": w((D, 2 * inner)),
            "ff_b1": jnp.zeros((2 * inner,), jnp.float32),
            "ff_w2": w((inner, D)),
            "ff_b2": jnp.zeros((D,), jnp.float32),
        })
    params["final_ln_g"] = jnp.ones((D,), jnp.float32)
    params["final_ln_b"] = jnp.zeros((D,), jnp.float32)
    params["conv1_w"] = w((D, Do))
    params["conv1_b"] = jnp.zeros((Do,), jnp.float32)
    params["gn_g"] = jnp.ones((Do,), jnp.float32)
    params["gn_b"] = jnp.zeros((Do,), jnp.float32)
    params["attnblk_qkv_w"] = w((Do, 3 * Do))
    params["attnblk_qkv_b"] = jnp.zeros((3 * Do,), jnp.float32)
    # TODO(synk): torch zero-inits proj_out (zero_module); small random here so
    # the fused path is exercised.
    params["attnblk_proj_w"] = w((Do, Do))
    params["attnblk_proj_b"] = jnp.zeros((Do,), jnp.float32)
    params["conv2_w"] = w((Do, Do))
    params["conv2_b"] = jnp.zeros((Do,), jnp.float32)
    return params


if __name__ == "__main__":
    B, S = 2, 8
    model_dim, output_dims, heads, depth = 32, 32, 4, 2

    key = jax.random.PRNGKey(0)
    kx, kp = jax.random.split(key)
    x = jax.random.normal(kx, (B, S, model_dim), jnp.float32)
    params = init_params(kp, model_dim, output_dims, heads, depth)

    fwd = jax.jit(partial(collapsing_transformer_forward, heads=heads))
    out = jax.block_until_ready(fwd(x, params))
    assert out.shape == (B, output_dims), out.shape
    assert bool(jnp.all(jnp.isfinite(out)))
    print("KERNEL_OK")
</pallas_src>

<mosaic_0001>
module attributes {stable_mosaic.version = 11 : i64} {
  func.func @_ln_linear_kernel(%arg0: i32, %arg1: memref<8x32xf32, #tpu.memory_space<vmem>>, %arg2: memref<1x32xf32, #tpu.memory_space<vmem>>, %arg3: memref<1x32xf32, #tpu.memory_space<vmem>>, %arg4: memref<32x32xbf16, #tpu.memory_space<vmem>>, %arg5: memref<1x32xf32, #tpu.memory_space<vmem>>, %arg6: memref<8x32xf32, #tpu.memory_space<vmem>>) attributes {dimension_semantics = [#tpu.dimension_semantics<parallel>], iteration_bounds = array<i64: 2>, scalar_prefetch = 0 : i64, scratch_operands = 0 : i64, tpu.core_type = #tpu.core_type<tc>, window_params = [{transform_indices = @transform_0, window_bounds = array<i64: 8, 32>}, {pipeline_mode = #tpu.pipeline_mode<synchronous>, transform_indices = @transform_1, window_bounds = array<i64: 1, 32>}, {pipeline_mode = #tpu.pipeline_mode<synchronous>, transform_indices = @transform_2, window_bounds = array<i64: 1, 32>}, {pipeline_mode = #tpu.pipeline_mode<synchronous>, transform_indices = @transform_3, window_bounds = array<i64: 32, 32>}, {pipeline_mode = #tpu.pipeline_mode<synchronous>, transform_indices = @transform_4, window_bounds = array<i64: 1, 32>}, {transform_indices = @transform_5, window_bounds = array<i64: 8, 32>}]} {
    %c0 = arith.constant 0 : index
    %c0_0 = arith.constant 0 : index
    %0 = vector.load %arg1[%c0, %c0_0] : memref<8x32xf32, #tpu.memory_space<vmem>>, vector<8x32xf32>
    %cst = arith.constant dense<0.000000e+00> : vector<8xf32>
    %1 = vector.multi_reduction <add>, %0, %cst [1] : vector<8x32xf32> to vector<8xf32>
    %2 = vector.shape_cast %1 : vector<8xf32> to vector<8x1xf32>
    %cst_1 = arith.constant 3.200000e+01 : f32
    %3 = vector.broadcast %cst_1 : f32 to vector<8x1xf32>
    %4 = arith.divf %2, %3 : vector<8x1xf32>
    %5 = vector.broadcast %4 : vector<8x1xf32> to vector<8x32xf32>
    %6 = arith.subf %0, %5 : vector<8x32xf32>
    %7 = arith.mulf %6, %6 : vector<8x32xf32>
    %cst_2 = arith.constant dense<0.000000e+00> : vector<8xf32>
    %8 = vector.multi_reduction <add>, %7, %cst_2 [1] : vector<8x32xf32> to vector<8xf32>
    %9 = vector.shape_cast %8 : vector<8xf32> to vector<8x1xf32>
    %cst_3 = arith.constant 3.200000e+01 : f32
    %10 = vector.broadcast %cst_3 : f32 to vector<8x1xf32>
    %11 = arith.divf %9, %10 : vector<8x1xf32>
    %12 = vector.broadcast %4 : vector<8x1xf32> to vector<8x32xf32>
    %13 = arith.subf %0, %12 : vector<8x32xf32>
    %cst_4 = arith.constant 9.99999974E-6 : f32
    %14 = vector.broadcast %cst_4 : f32 to vector<8x1xf32>
    %15 = arith.addf %11, %14 : vector<8x1xf32>
    %16 = math.rsqrt %15 : vector<8x1xf32>
    %17 = vector.broadcast %16 : vector<8x1xf32> to vector<8x32xf32>
    %18 = arith.mulf %13, %17 : vector<8x32xf32>
    %c0_5 = arith.constant 0 : index
    %c0_6 = arith.constant 0 : index
    %19 = vector.load %arg2[%c0_5, %c0_6] : memref<1x32xf32, #tpu.memory_space<vmem>>, vector<1x32xf32>
    %20 = vector.broadcast %19 : vector<1x32xf32> to vector<8x32xf32>
    %21 = arith.mulf %18, %20 : vector<8x32xf32>
    %c0_7 = arith.constant 0 : index
    %c0_8 = arith.constant 0 : index
    %22 = vector.load %arg3[%c0_7, %c0_8] : memref<1x32xf32, #tpu.memory_space<vmem>>, vector<1x32xf32>
    %23 = vector.broadcast %22 : vector<1x32xf32> to vector<8x32xf32>
    %24 = arith.addf %21, %23 : vector<8x32xf32>
    %25 = arith.truncf %24 : vector<8x32xf32> to vector<8x32xbf16>
    %c0_9 = arith.constant 0 : index
    %c0_10 = arith.constant 0 : index
    %26 = vector.load %arg4[%c0_9, %c0_10] : memref<32x32xbf16, #tpu.memory_space<vmem>>, vector<32x32xbf16>
    %cst_11 = arith.constant dense<0.000000e+00> : vector<8x32xf32>
    %27 = tpu.matmul %25, %26, %cst_11 {dimension_numbers = #tpu.dot_dimension_numbers<[1], [0], [0], [1], [0, 0, 1, 1], [], []>} : vector<8x32xbf16>, vector<32x32xbf16>, vector<8x32xf32> -> vector<8x32xf32>
    %c0_12 = arith.constant 0 : index
    %c0_13 = arith.constant 0 : index
    %28 = vector.load %arg5[%c0_12, %c0_13] : memref<1x32xf32, #tpu.memory_space<vmem>>, vector<1x32xf32>
    %29 = vector.broadcast %28 : vector<1x32xf32> to vector<8x32xf32>
    %30 = arith.addf %27, %29 : vector<8x32xf32>
    %c0_14 = arith.constant 0 : index
    %c0_15 = arith.constant 0 : index
    %31 = vector.load %arg6[%c0_14, %c0_15] : memref<8x32xf32, #tpu.memory_space<vmem>>, vector<8x32xf32>
    tpu.vector_store %arg6[%c0_14, %c0_15], %30 {strides = array<i32>} : memref<8x32xf32, #tpu.memory_space<vmem>>, vector<8x32xf32>,
    return
  }
  func.func @transform_0(%arg0: i32) -> (i32, i32) {
    %c0_i32 = arith.constant 0 : i32
    %c0_i32_0 = arith.constant 0 : i32
    return %arg0, %c0_i32 : i32, i32
  }
  func.func @transform_1(%arg0: i32) -> (i32, i32) {
    %c0_i32 = arith.constant 0 : i32
    %c0_i32_0 = arith.constant 0 : i32
    %c0_i32_1 = arith.constant 0 : i32
    return %c0_i32, %c0_i32_0 : i32, i32
  }
  func.func @transform_2(%arg0: i32) -> (i32, i32) {
    %c0_i32 = arith.constant 0 : i32
    %c0_i32_0 = arith.constant 0 : i32
    %c0_i32_1 = arith.constant 0 : i32
    return %c0_i32, %c0_i32_0 : i32, i32
  }
  func.func @transform_3(%arg0: i32) -> (i32, i32) {
    %c0_i32 = arith.constant 0 : i32
    %c0_i32_0 = arith.constant 0 : i32
    %c0_i32_1 = arith.constant 0 : i32
    return %c0_i32, %c0_i32_0 : i32, i32
  }
  func.func @transform_4(%arg0: i32) -> (i32, i32) {
    %c0_i32 = arith.constant 0 : i32
    %c0_i32_0 = arith.constant 0 : i32
    %c0_i32_1 = arith.constant 0 : i32
    return %c0_i32, %c0_i32_0 : i32, i32
  }
  func.func @transform_5(%arg0: i32) -> (i32, i32) {
    %c0_i32 = arith.constant 0 : i32
    %c0_i32_0 = arith.constant 0 : i32
    return %arg0, %c0_i32 : i32, i32
  }
}

module attributes {stable_mosaic.version = 11 : i64} {
  func.func @_encoder_attn_kernel(%arg0: i32, %arg1: memref<1x8x32xf32, #tpu.memory_space<vmem>>, %arg2: memref<1x32xf32, #tpu.memory_space<vmem>>, %arg3: memref<32x96xbf16, #tpu.memory_space<vmem>>, %arg4: memref<8x8xf32, #tpu.memory_space<vmem>>, %arg5: memref<8x8xf32, #tpu.memory_space<vmem>>, %arg6: memref<8x8xbf16, #tpu.memory_space<vmem>>, %arg7: memref<32x32xbf16, #tpu.memory_space<vmem>>, %arg8: memref<1x32xf32, #tpu.memory_space<vmem>>, %arg9: memref<1x8x32xf32, #tpu.memory_space<vmem>>) attributes {dimension_semantics = [#tpu.dimension_semantics<parallel>], iteration_bounds = array<i64: 2>, scalar_prefetch = 0 : i64, scratch_operands = 0 : i64, tpu.core_type = #tpu.core_type<tc>, window_params = [{transform_indices = @transform_0, window_bounds = array<i64: 1, 8, 32>}, {pipeline_mode = #tpu.pipeline_mode<synchronous>, transform_indices = @transform_1, window_bounds = array<i64: 1, 32>}, {pipeline_mode = #tpu.pipeline_mode<synchronous>, transform_indices = @transform_2, window_bounds = array<i64: 32, 96>}, {pipeline_mode = #tpu.pipeline_mode<synchronous>, transform_indices = @transform_3, window_bounds = array<i64: 8, 8>}, {pipeline_mode = #tpu.pipeline_mode<synchronous>, transform_indices = @transform_4, window_bounds = array<i64: 8, 8>}, {pipeline_mode = #tpu.pipeline_mode<synchronous>, transform_indices = @transform_5, window_bounds = array<i64: 8, 8>}, {pipeline_mode = #tpu.pipeline_mode<synchronous>, transform_indices = @transform_6, window_bounds = array<i64: 32, 32>}, {pipeline_mode = #tpu.pipeline_mode<synchronous>, transform_indices = @transform_7, window_bounds = array<i64: 1, 32>}, {transform_indices = @transform_8, window_bounds = array<i64: 1, 8, 32>}]} {
    %c0 = arith.constant 0 : index
    %c0_0 = arith.constant 0 : index
    %c0_1 = arith.constant 0 : index
    %0 = vector.load %arg1[%c0, %c0_0, %c0_1] : memref<1x8x32xf32, #tpu.memory_space<vmem>>, vector<1x8x32xf32>
    %1 = vector.shape_cast %0 : vector<1x8x32xf32> to vector<8x32xf32>
    %2 = arith.mulf %1, %1 : vector<8x32xf32>
    %cst = arith.constant dense<0.000000e+00> : vector<8xf32>
    %3 = vector.multi_reduction <add>, %2, %cst [1] : vector<8x32xf32> to vector<8xf32>
    %4 = vector.shape_cast %3 : vector<8xf32> to vector<8x1xf32>
    %5 = math.sqrt %4 : vector<8x1xf32>
    %cst_2 = arith.constant 0.176776692 : f32
    %6 = vector.broadcast %cst_2 : f32 to vector<8x1xf32>
    %7 = arith.mulf %5, %6 : vector<8x1xf32>
    %cst_3 = arith.constant 9.99999993E-9 : f32
    %8 = vector.broadcast %cst_3 : f32 to vector<8x1xf32>
    %9 = arith.maximumf %7, %8 : vector<8x1xf32>
    %10 = vector.broadcast %9 : vector<8x1xf32> to vector<8x32xf32>
    %11 = arith.divf %1, %10 : vector<8x32xf32>
    %c0_4 = arith.constant 0 : index
    %c0_5 = arith.constant 0 : index
    %12 = vector.load %arg2[%c0_4, %c0_5] : memref<1x32xf32, #tpu.memory_space<vmem>>, vector<1x32xf32>
    %13 = vector.broadcast %12 : vector<1x32xf32> to vector<8x32xf32>
    %14 = arith.mulf %11, %13 : vector<8x32xf32>
    %15 = arith.truncf %14 : vector<8x32xf32> to vector<8x32xbf16>
    %c0_6 = arith.constant 0 : index
    %c0_7 = arith.constant 0 : index
    %16 = vector.load %arg3[%c0_6, %c0_7] : memref<32x96xbf16, #tpu.memory_space<vmem>>, vector<32x96xbf16>
    %cst_8 = arith.constant dense<0.000000e+00> : vector<8x96xf32>
    %17 = tpu.matmul %15, %16, %cst_8 {dimension_numbers = #tpu.dot_dimension_numbers<[1], [0], [0], [1], [0, 0, 1, 1], [], []>} : vector<8x32xbf16>, vector<32x96xbf16>, vector<8x96xf32> -> vector<8x96xf32>
    %c0_9 = arith.constant 0 : index
    %c0_10 = arith.constant 0 : index
    %18 = vector.load %arg4[%c0_9, %c0_10] : memref<8x8xf32, #tpu.memory_space<vmem>>, vector<8x8xf32>
    %c0_11 = arith.constant 0 : index
    %c0_12 = arith.constant 0 : index
    %19 = vector.load %arg5[%c0_11, %c0_12] : memref<8x8xf32, #tpu.memory_space<vmem>>, vector<8x8xf32>
    %c0_13 = arith.constant 0 : index
    %c0_14 = arith.constant 0 : index
    %20 = vector.load %arg6[%c0_13, %c0_14] : memref<8x8xbf16, #tpu.memory_space<vmem>>, vector<8x8xbf16>
    %c0_15 = arith.constant 0 : index
    %c0_16 = arith.constant 0 : index
    %21 = vector.load %arg7[%c0_15, %c0_16] : memref<32x32xbf16, #tpu.memory_space<vmem>>, vector<32x32xbf16>
    %c0_17 = arith.constant 0 : index
    %c0_18 = arith.constant 0 : index
    %22 = vector.load %arg8[%c0_17, %c0_18] : memref<1x32xf32, #tpu.memory_space<vmem>>, vector<1x32xf32>
    %23 = vector.broadcast %22 : vector<1x32xf32> to vector<8x32xf32>
    %24 = arith.addf %1, %23 : vector<8x32xf32>
    %25 = vector.extract_strided_slice %17 {offsets = [0, 0], sizes = [8, 8], strides = [1, 1]} : vector<8x96xf32> to vector<8x8xf32>
    %26 = vector.extract_strided_slice %17 {offsets = [0, 32], sizes = [8, 8], strides = [1, 1]} : vector<8x96xf32> to vector<8x8xf32>
    %27 = vector.extract_strided_slice %17 {offsets = [0, 64], sizes = [8, 8], strides = [1, 1]} : vector<8x96xf32> to vector<8x8xf32>
    %28 = arith.mulf %25, %18 : vector<8x8xf32>
    %29 = arith.truncf %25 : vector<8x8xf32> to vector<8x8xbf16>
    %cst_19 = arith.constant dense<0.000000e+00> : vector<8x8xf32>
    %30 = tpu.matmul %29, %20, %cst_19 {dimension_numbers = #tpu.dot_dimension_numbers<[1], [0], [0], [1], [0, 0, 1, 1], [], []>} : vector<8x8xbf16>, vector<8x8xbf16>, vector<8x8xf32> -> vector<8x8xf32>
    %31 = arith.mulf %30, %19 : vector<8x8xf32>
    %32 = arith.addf %28, %31 : vector<8x8xf32>
    %33 = arith.mulf %26, %18 : vector<8x8xf32>
    %34 = arith.truncf %26 : vector<8x8xf32> to vector<8x8xbf16>
    %cst_20 = arith.constant dense<0.000000e+00> : vector<8x8xf32>
    %35 = tpu.matmul %34, %20, %cst_20 {dimension_numbers = #tpu.dot_dimension_numbers<[1], [0], [0], [1], [0, 0, 1, 1], [], []>} : vector<8x8xbf16>, vector<8x8xbf16>, vector<8x8xf32> -> vector<8x8xf32>
    %36 = arith.mulf %35, %19 : vector<8x8xf32>
    %37 = arith.addf %33, %36 : vector<8x8xf32>
    %38 = arith.truncf %32 : vector<8x8xf32> to vector<8x8xbf16>
    %39 = arith.truncf %37 : vector<8x8xf32> to vector<8x8xbf16>
    %cst_21 = arith.constant dense<0.000000e+00> : vector<8x8xf32>
    %40 = tpu.matmul %38, %39, %cst_21 {dimension_numbers = #tpu.dot_dimension_numbers<[1], [1], [0], [0], [0, 0, 1, 0], [], []>} : vector<8x8xbf16>, vector<8x8xbf16>, vector<8x8xf32> -> vector<8x8xf32>
    %cst_22 = arith.constant 0.353553385 : f32
    %41 = vector.broadcast %cst_22 : f32 to vector<8x8xf32>
    %42 = arith.mulf %40, %41 : vector<8x8xf32>
    %cst_23 = arith.constant dense<0xFF800000> : vector<8xf32>
    %43 = vector.multi_reduction <maximumf>, %42, %cst_23 [1] : vector<8x8xf32> to vector<8xf32>
    %44 = vector.shape_cast %43 : vector<8xf32> to vector<8x1xf32>
    %45 = vector.broadcast %44 : vector<8x1xf32> to vector<8x8xf32>
    %46 = arith.subf %42, %45 : vector<8x8xf32>
    %47 = math.exp %46 : vector<8x8xf32>
    %cst_24 = arith.constant dense<0.000000e+00> : vector<8xf32>
    %48 = vector.multi_reduction <add>, %47, %cst_24 [1] : vector<8x8xf32> to vector<8xf32>
    %49 = vector.shape_cast %48 : vector<8xf32> to vector<8x1xf32>
    %50 = tpu.reciprocal %49 : vector<8x1xf32> -> vector<8x1xf32>
    %51 = vector.broadcast %50 : vector<8x1xf32> to vector<8x8xf32>
    %52 = arith.mulf %47, %51 : vector<8x8xf32>
    %53 = arith.truncf %52 : vector<8x8xf32> to vector<8x8xbf16>
    %54 = arith.truncf %27 : vector<8x8xf32> to vector<8x8xbf16>
    %cst_25 = arith.constant dense<0.000000e+00> : vector<8x8xf32>
    %55 = tpu.matmul %53, %54, %cst_25 {dimension_numbers = #tpu.dot_dimension_numbers<[1], [0], [0], [1], [0, 0, 1, 1], [], []>} : vector<8x8xbf16>, vector<8x8xbf16>, vector<8x8xf32> -> vector<8x8xf32>
    %56 = arith.truncf %55 : vector<8x8xf32> to vector<8x8xbf16>
    %57 = vector.extract_strided_slice %21 {offsets = [0, 0], sizes = [8, 32], strides = [1, 1]} : vector<32x32xbf16> to vector<8x32xbf16>
    %cst_26 = arith.constant dense<0.000000e+00> : vector<8x32xf32>
    %58 = tpu.matmul %56, %57, %cst_26 {dimension_numbers = #tpu.dot_dimension_numbers<[1], [0], [0], [1], [0, 0, 1, 1], [], []>} : vector<8x8xbf16>, vector<8x32xbf16>, vector<8x32xf32> -> vector<8x32xf32>
    %59 = arith.addf %24, %58 : vector<8x32xf32>
    %60 = vector.extract_strided_slice %17 {offsets = [0, 8], sizes = [8, 8], strides = [1, 1]} : vector<8x96xf32> to vector<8x8xf32>
    %61 = vector.extract_strided_slice %17 {offsets = [0, 40], sizes = [8, 8], strides = [1, 1]} : vector<8x96xf32> to vector<8x8xf32>
    %62 = vector.extract_strided_slice %17 {offsets = [0, 72], sizes = [8, 8], strides = [1, 1]} : vector<8x96xf32> to vector<8x8xf32>
    %63 = arith.mulf %60, %18 : vector<8x8xf32>
    %64 = arith.truncf %60 : vector<8x8xf32> to vector<8x8xbf16>
    %cst_27 = arith.constant dense<0.000000e+00> : vector<8x8xf32>
    %65 = tpu.matmul %64, %20, %cst_27 {dimension_numbers = #tpu.dot_dimension_numbers<[1], [0], [0], [1], [0, 0, 1, 1], [], []>} : vector<8x8xbf16>, vector<8x8xbf16>, vector<8x8xf32> -> vector<8x8xf32>
    %66 = arith.mulf %65, %19 : vector<8x8xf32>
    %67 = arith.addf %63, %66 : vector<8x8xf32>
    %68 = arith.mulf %61, %18 : vector<8x8xf32>
    %69 = arith.truncf %61 : vector<8x8xf32> to vector<8x8xbf16>
    %cst_28 = arith.constant dense<0.000000e+00> : vector<8x8xf32>
    %70 = tpu.matmul %69, %20, %cst_28 {dimension_numbers = #tpu.dot_dimension_numbers<[1], [0], [0], [1], [0, 0, 1, 1], [], []>} : vector<8x8xbf16>, vector<8x8xbf16>, vector<8x8xf32> -> vector<8x8xf32>
    %71 = arith.mulf %70, %19 : vector<8x8xf32>
    %72 = arith.addf %68, %71 : vector<8x8xf32>
    %73 = arith.truncf %67 : vector<8x8xf32> to vector<8x8xbf16>
    %74 = arith.truncf %72 : vector<8x8xf32> to vector<8x8xbf16>
    %cst_29 = arith.constant dense<0.000000e+00> : vector<8x8xf32>
    %75 = tpu.matmul %73, %74, %cst_29 {dimension_numbers = #tpu.dot_dimension_numbers<[1], [1], [0], [0], [0, 0, 1, 0], [], []>} : vector<8x8xbf16>, vector<8x8xbf16>, vector<8x8xf32> -> vector<8x8xf32>
    %cst_30 = arith.constant 0.353553385 : f32
    %76 = vector.broadcast %cst_30 : f32 to vector<8x8xf32>
    %77 = arith.mulf %75, %76 : vector<8x8xf32>
    %cst_31 = arith.constant dense<0xFF800000> : vector<8xf32>
    %78 = vector.multi_reduction <maximumf>, %77, %cst_31 [1] : vector<8x8xf32> to vector<8xf32>
    %79 = vector.shape_cast %78 : vector<8xf32> to vector<8x1xf32>
    %80 = vector.broadcast %79 : vector<8x1xf32> to vector<8x8xf32>
    %81 = arith.subf %77, %80 : vector<8x8xf32>
    %82 = math.exp %81 : vector<8x8xf32>
    %cst_32 = arith.constant dense<0.000000e+00> : vector<8xf32>
    %83 = vector.multi_reduction <add>, %82, %cst_32 [1] : vector<8x8xf32> to vector<8xf32>
    %84 = vector.shape_cast %83 : vector<8xf32> to vector<8x1xf32>
    %85 = tpu.reciprocal %84 : vector<8x1xf32> -> vector<8x1xf32>
    %86 = vector.broadcast %85 : vector<8x1xf32> to vector<8x8xf32>
    %87 = arith.mulf %82, %86 : vector<8x8xf32>
    %88 = arith.truncf %87 : vector<8x8xf32> to vector<8x8xbf16>
    %89 = arith.truncf %62 : vector<8x8xf32> to vector<8x8xbf16>
    %cst_33 = arith.constant dense<0.000000e+00> : vector<8x8xf32>
    %90 = tpu.matmul %88, %89, %cst_33 {dimension_numbers = #tpu.dot_dimension_numbers<[1], [0], [0], [1], [0, 0, 1, 1], [], []>} : vector<8x8xbf16>, vector<8x8xbf16>, vector<8x8xf32> -> vector<8x8xf32>
    %91 = arith.truncf %90 : vector<8x8xf32> to vector<8x8xbf16>
    %92 = vector.extract_strided_slice %21 {offsets = [8, 0], sizes = [8, 32], strides = [1, 1]} : vector<32x32xbf16> to vector<8x32xbf16>
    %cst_34 = arith.constant dense<0.000000e+00> : vector<8x32xf32>
    %93 = tpu.matmul %91, %92, %cst_34 {dimension_numbers = #tpu.dot_dimension_numbers<[1], [0], [0], [1], [0, 0, 1, 1], [], []>} : vector<8x8xbf16>, vector<8x32xbf16>, vector<8x32xf32> -> vector<8x32xf32>
    %94 = arith.addf %59, %93 : vector<8x32xf32>
    %95 = vector.extract_strided_slice %17 {offsets = [0, 16], sizes = [8, 8], strides = [1, 1]} : vector<8x96xf32> to vector<8x8xf32>
    %96 = vector.extract_strided_slice %17 {offsets = [0, 48], sizes = [8, 8], strides = [1, 1]} : vector<8x96xf32> to vector<8x8xf32>
    %97 = vector.extract_strided_slice %17 {offsets = [0, 80], sizes = [8, 8], strides = [1, 1]} : vector<8x96xf32> to vector<8x8xf32>
    %98 = arith.mulf %95, %18 : vector<8x8xf32>
    %99 = arith.truncf %95 : vector<8x8xf32> to vector<8x8xbf16>
    %cst_35 = arith.constant dense<0.000000e+00> : vector<8x8xf32>
    %100 = tpu.matmul %99, %20, %cst_35 {dimension_numbers = #tpu.dot_dimension_numbers<[1], [0], [0], [1], [0, 0, 1, 1], [], []>} : vector<8x8xbf16>, vector<8x8xbf16>, vector<8x8xf32> -> vector<8x8xf32>
    %101 = arith.mulf %100, %19 : vector<8x8xf32>
    %102 = arith.addf %98, %101 : vector<8x8xf32>
    %103 = arith.mulf %96, %18 : vector<8x8xf32>
    %104 = arith.truncf %96 : vector<8x8xf32> to vector<8x8xbf16>
    %cst_36 = arith.constant dense<0.000000e+00> : vector<8x8xf32>
    %105 = tpu.matmul %104, %20, %cst_36 {dimension_numbers = #tpu.dot_dimension_numbers<[1], [0], [0], [1], [0, 0, 1, 1], [], []>} : vector<8x8xbf16>, vector<8x8xbf16>, vector<8x8xf32> -> vector<8x8xf32>
    %106 = arith.mulf %105, %19 : vector<8x8xf32>
    %107 = arith.addf %103, %106 : vector<8x8xf32>
    %108 = arith.truncf %102 : vector<8x8xf32> to vector<8x8xbf16>
    %109 = arith.truncf %107 : vector<8x8xf32> to vector<8x8xbf16>
    %cst_37 = arith.constant dense<0.000000e+00> : vector<8x8xf32>
    %110 = tpu.matmul %108, %109, %cst_37 {dimension_numbers = #tpu.dot_dimension_numbers<[1], [1], [0], [0], [0, 0, 1, 0], [], []>} : vector<8x8xbf16>, vector<8x8xbf16>, vector<8x8xf32> -> vector<8x8xf32>
    %cst_38 = arith.constant 0.353553385 : f32
    %111 = vector.broadcast %cst_38 : f32 to vector<8x8xf32>
    %112 = arith.mulf %110, %111 : vector<8x8xf32>
    %cst_39 = arith.constant dense<0xFF800000> : vector<8xf32>
    %113 = vector.multi_reduction <maximumf>, %112, %cst_39 [1] : vector<8x8xf32> to vector<8xf32>
    %114 = vector.shape_cast %113 : vector<8xf32> to vector<8x1xf32>
    %115 = vector.broadcast %114 : vector<8x1xf32> to vector<8x8xf32>
    %116 = arith.subf %112, %115 : vector<8x8xf32>
    %117 = math.exp %116 : vector<8x8xf32>
    %cst_40 = arith.constant dense<0.000000e+00> : vector<8xf32>
    %118 = vector.multi_reduction <add>, %117, %cst_40 [1] : vector<8x8xf32> to vector<8xf32>
    %119 = vector.shape_cast %118 : vector<8xf32> to vector<8x1xf32>
    %120 = tpu.reciprocal %119 : vector<8x1xf32> -> vector<8x1xf32>
    %121 = vector.broadcast %120 : vector<8x1xf32> to vector<8x8xf32>
    %122 = arith.mulf %117, %121 : vector<8x8xf32>
    %123 = arith.truncf %122 : vector<8x8xf32> to vector<8x8xbf16>
    %124 = arith.truncf %97 : vector<8x8xf32> to vector<8x8xbf16>
    %cst_41 = arith.constant dense<0.000000e+00> : vector<8x8xf32>
    %125 = tpu.matmul %123, %124, %cst_41 {dimension_numbers = #tpu.dot_dimension_numbers<[1], [0], [0], [1], [0, 0, 1, 1], [], []>} : vector<8x8xbf16>, vector<8x8xbf16>, vector<8x8xf32> -> vector<8x8xf32>
    %126 = arith.truncf %125 : vector<8x8xf32> to vector<8x8xbf16>
    %127 = vector.extract_strided_slice %21 {offsets = [16, 0], sizes = [8, 32], strides = [1, 1]} : vector<32x32xbf16> to vector<8x32xbf16>
    %cst_42 = arith.constant dense<0.000000e+00> : vector<8x32xf32>
    %128 = tpu.matmul %126, %127, %cst_42 {dimension_numbers = #tpu.dot_dimension_numbers<[1], [0], [0], [1], [0, 0, 1, 1], [], []>} : vector<8x8xbf16>, vector<8x32xbf16>, vector<8x32xf32> -> vector<8x32xf32>
    %129 = arith.addf %94, %128 : vector<8x32xf32>
    %130 = vector.extract_strided_slice %17 {offsets = [0, 24], sizes = [8, 8], strides = [1, 1]} : vector<8x96xf32> to vector<8x8xf32>
    %131 = vector.extract_strided_slice %17 {offsets = [0, 56], sizes = [8, 8], strides = [1, 1]} : vector<8x96xf32> to vector<8x8xf32>
    %132 = vector.extract_strided_slice %17 {offsets = [0, 88], sizes = [8, 8], strides = [1, 1]} : vector<8x96xf32> to vector<8x8xf32>
    %133 = arith.mulf %130, %18 : vector<8x8xf32>
    %134 = arith.truncf %130 : vector<8x8xf32> to vector<8x8xbf16>
    %cst_43 = arith.constant dense<0.000000e+00> : vector<8x8xf32>
    %135 = tpu.matmul %134, %20, %cst_43 {dimension_numbers = #tpu.dot_dimension_numbers<[1], [0], [0], [1], [0, 0, 1, 1], [], []>} : vector<8x8xbf16>, vector<8x8xbf16>, vector<8x8xf32> -> vector<8x8xf32>
    %136 = arith.mulf %135, %19 : vector<8x8xf32>
    %137 = arith.addf %133, %136 : vector<8x8xf32>
    %138 = arith.mulf %131, %18 : vector<8x8xf32>
    %139 = arith.truncf %131 : vector<8x8xf32> to vector<8x8xbf16>
    %cst_44 = arith.constant dense<0.000000e+00> : vector<8x8xf32>
    %140 = tpu.matmul %139, %20, %cst_44 {dimension_numbers = #tpu.dot_dimension_numbers<[1], [0], [0], [1], [0, 0, 1, 1], [], []>} : vector<8x8xbf16>, vector<8x8xbf16>, vector<8x8xf32> -> vector<8x8xf32>
    %141 = arith.mulf %140, %19 : vector<8x8xf32>
    %142 = arith.addf %138, %141 : vector<8x8xf32>
    %143 = arith.truncf %137 : vector<8x8xf32> to vector<8x8xbf16>
    %144 = arith.truncf %142 : vector<8x8xf32> to vector<8x8xbf16>
    %cst_45 = arith.constant dense<0.000000e+00> : vector<8x8xf32>
    %145 = tpu.matmul %143, %144, %cst_45 {dimension_numbers = #tpu.dot_dimension_numbers<[1], [1], [0], [0], [0, 0, 1, 0], [], []>} : vector<8x8xbf16>, vector<8x8xbf16>, vector<8x8xf32> -> vector<8x8xf32>
    %cst_46 = arith.constant 0.353553385 : f32
    %146 = vector.broadcast %cst_46 : f32 to vector<8x8xf32>
    %147 = arith.mulf %145, %146 : vector<8x8xf32>
    %cst_47 = arith.constant dense<0xFF800000> : vector<8xf32>
    %148 = vector.multi_reduction <maximumf>, %147, %cst_47 [1] : vector<8x8xf32> to vector<8xf32>
    %149 = vector.shape_cast %148 : vector<8xf32> to vector<8x1xf32>
    %150 = vector.broadcast %149 : vector<8x1xf32> to vector<8x8xf32>
    %151 = arith.subf %147, %150 : vector<8x8xf32>
    %152 = math.exp %151 : vector<8x8xf32>
    %cst_48 = arith.constant dense<0.000000e+00> : vector<8xf32>
    %153 = vector.multi_reduction <add>, %152, %cst_48 [1] : vector<8x8xf32> to vector<8xf32>
    %154 = vector.shape_cast %153 : vector<8xf32> to vector<8x1xf32>
    %155 = tpu.reciprocal %154 : vector<8x1xf32> -> vector<8x1xf32>
    %156 = vector.broadcast %155 : vector<8x1xf32> to vector<8x8xf32>
    %157 = arith.mulf %152, %156 : vector<8x8xf32>
    %158 = arith.truncf %157 : vector<8x8xf32> to vector<8x8xbf16>
    %159 = arith.truncf %132 : vector<8x8xf32> to vector<8x8xbf16>
    %cst_49 = arith.constant dense<0.000000e+00> : vector<8x8xf32>
    %160 = tpu.matmul %158, %159, %cst_49 {dimension_numbers = #tpu.dot_dimension_numbers<[1], [0], [0], [1], [0, 0, 1, 1], [], []>} : vector<8x8xbf16>, vector<8x8xbf16>, vector<8x8xf32> -> vector<8x8xf32>
    %161 = arith.truncf %160 : vector<8x8xf32> to vector<8x8xbf16>
    %162 = vector.extract_strided_slice %21 {offsets = [24, 0], sizes = [8, 32], strides = [1, 1]} : vector<32x32xbf16> to vector<8x32xbf16>
    %cst_50 = arith.constant dense<0.000000e+00> : vector<8x32xf32>
    %163 = tpu.matmul %161, %162, %cst_50 {dimension_numbers = #tpu.dot_dimension_numbers<[1], [0], [0], [1], [0, 0, 1, 1], [], []>} : vector<8x8xbf16>, vector<8x32xbf16>, vector<8x32xf32> -> vector<8x32xf32>
    %164 = arith.addf %129, %163 : vector<8x32xf32>
    %c0_51 = arith.constant 0 : index
    %c0_52 = arith.constant 0 : index
    %c0_53 = arith.constant 0 : index
    %165 = vector.load %arg9[%c0_51, %c0_52, %c0_53] : memref<1x8x32xf32, #tpu.memory_space<vmem>>, vector<1x8x32xf32>
    %166 = vector.shape_cast %165 : vector<1x8x32xf32> to vector<8x32xf32>
    %167 = vector.shape_cast %164 : vector<8x32xf32> to vector<1x8x32xf32>
    tpu.vector_store %arg9[%c0_51, %c0_52, %c0_53], %167 {strides = array<i32>} : memref<1x8x32xf32, #tpu.memory_space<vmem>>, vector<1x8x32xf32>,
    return
  }
  func.func @transform_0(%arg0: i32) -> (i32, i32, i32) {
    %c0_i32 = arith.constant 0 : i32
    %c0_i32_0 = arith.constant 0 : i32
    %c0_i32_1 = arith.constant 0 : i32
    return %arg0, %c0_i32, %c0_i32_0 : i32, i32, i32
  }
  func.func @transform_1(%arg0: i32) -> (i32, i32) {
    %c0_i32 = arith.constant 0 : i32
    %c0_i32_0 = arith.constant 0 : i32
    %c0_i32_1 = arith.constant 0 : i32
    return %c0_i32, %c0_i32_0 : i32, i32
  }
  func.func @transform_2(%arg0: i32) -> (i32, i32) {
    %c0_i32 = arith.constant 0 : i32
    %c0_i32_0 = arith.constant 0 : i32
    %c0_i32_1 = arith.constant 0 : i32
    return %c0_i32, %c0_i32_0 : i32, i32
  }
  func.func @transform_3(%arg0: i32) -> (i32, i32) {
    %c0_i32 = arith.constant 0 : i32
    %c0_i32_0 = arith.constant 0 : i32
    %c0_i32_1 = arith.constant 0 : i32
    return %c0_i32, %c0_i32_0 : i32, i32
  }
  func.func @transform_4(%arg0: i32) -> (i32, i32) {
    %c0_i32 = arith.constant 0 : i32
    %c0_i32_0 = arith.constant 0 : i32
    %c0_i32_1 = arith.constant 0 : i32
    return %c0_i32, %c0_i32_0 : i32, i32
  }
  func.func @transform_5(%arg0: i32) -> (i32, i32) {
    %c0_i32 = arith.constant 0 : i32
    %c0_i32_0 = arith.constant 0 : i32
    %c0_i32_1 = arith.constant 0 : i32
    return %c0_i32, %c0_i32_0 : i32, i32
  }
  func.func @transform_6(%arg0: i32) -> (i32, i32) {
    %c0_i32 = arith.constant 0 : i32
    %c0_i32_0 = arith.constant 0 : i32
    %c0_i32_1 = arith.constant 0 : i32
    return %c0_i32, %c0_i32_0 : i32, i32
  }
  func.func @transform_7(%arg0: i32) -> (i32, i32) {
    %c0_i32 = arith.constant 0 : i32
    %c0_i32_0 = arith.constant 0 : i32
    %c0_i32_1 = arith.constant 0 : i32
    return %c0_i32, %c0_i32_0 : i32, i32
  }
  func.func @transform_8(%arg0: i32) -> (i32, i32, i32) {
    %c0_i32 = arith.constant 0 : i32
    %c0_i32_0 = arith.constant 0 : i32
    %c0_i32_1 = arith.constant 0 : i32
    return %arg0, %c0_i32, %c0_i32_0 : i32, i32, i32
  }
}

module attributes {stable_mosaic.version = 11 : i64} {
  func.func @_rms_glu_ff_kernel(%arg0: i32, %arg1: memref<8x32xf32, #tpu.memory_space<vmem>>, %arg2: memref<1x32xf32, #tpu.memory_space<vmem>>, %arg3: memref<32x64xbf16, #tpu.memory_space<vmem>>, %arg4: memref<1x64xf32, #tpu.memory_space<vmem>>, %arg5: memref<32x32xbf16, #tpu.memory_space<vmem>>, %arg6: memref<1x32xf32, #tpu.memory_space<vmem>>, %arg7: memref<8x32xf32, #tpu.memory_space<vmem>>) attributes {dimension_semantics = [#tpu.dimension_semantics<parallel>], iteration_bounds = array<i64: 2>, scalar_prefetch = 0 : i64, scratch_operands = 0 : i64, tpu.core_type = #tpu.core_type<tc>, window_params = [{transform_indices = @transform_0, window_bounds = array<i64: 8, 32>}, {pipeline_mode = #tpu.pipeline_mode<synchronous>, transform_indices = @transform_1, window_bounds = array<i64: 1, 32>}, {pipeline_mode = #tpu.pipeline_mode<synchronous>, transform_indices = @transform_2, window_bounds = array<i64: 32, 64>}, {pipeline_mode = #tpu.pipeline_mode<synchronous>, transform_indices = @transform_3, window_bounds = array<i64: 1, 64>}, {pipeline_mode = #tpu.pipeline_mode<synchronous>, transform_indices = @transform_4, window_bounds = array<i64: 32, 32>}, {pipeline_mode = #tpu.pipeline_mode<synchronous>, transform_indices = @transform_5, window_bounds = array<i64: 1, 32>}, {transform_indices = @transform_6, window_bounds = array<i64: 8, 32>}]} {
    %c0 = arith.constant 0 : index
    %c0_0 = arith.constant 0 : index
    %0 = vector.load %arg1[%c0, %c0_0] : memref<8x32xf32, #tpu.memory_space<vmem>>, vector<8x32xf32>
    %1 = arith.mulf %0, %0 : vector<8x32xf32>
    %cst = arith.constant dense<0.000000e+00> : vector<8xf32>
    %2 = vector.multi_reduction <add>, %1, %cst [1] : vector<8x32xf32> to vector<8xf32>
    %3 = vector.shape_cast %2 : vector<8xf32> to vector<8x1xf32>
    %4 = math.sqrt %3 : vector<8x1xf32>
    %cst_1 = arith.constant 0.176776692 : f32
    %5 = vector.broadcast %cst_1 : f32 to vector<8x1xf32>
    %6 = arith.mulf %4, %5 : vector<8x1xf32>
    %cst_2 = arith.constant 9.99999993E-9 : f32
    %7 = vector.broadcast %cst_2 : f32 to vector<8x1xf32>
    %8 = arith.maximumf %6, %7 : vector<8x1xf32>
    %9 = vector.broadcast %8 : vector<8x1xf32> to vector<8x32xf32>
    %10 = arith.divf %0, %9 : vector<8x32xf32>
    %c0_3 = arith.constant 0 : index
    %c0_4 = arith.constant 0 : index
    %11 = vector.load %arg2[%c0_3, %c0_4] : memref<1x32xf32, #tpu.memory_space<vmem>>, vector<1x32xf32>
    %12 = vector.broadcast %11 : vector<1x32xf32> to vector<8x32xf32>
    %13 = arith.mulf %10, %12 : vector<8x32xf32>
    %14 = arith.truncf %13 : vector<8x32xf32> to vector<8x32xbf16>
    %c0_5 = arith.constant 0 : index
    %c0_6 = arith.constant 0 : index
    %15 = vector.load %arg3[%c0_5, %c0_6] : memref<32x64xbf16, #tpu.memory_space<vmem>>, vector<32x64xbf16>
    %cst_7 = arith.constant dense<0.000000e+00> : vector<8x64xf32>
    %16 = tpu.matmul %14, %15, %cst_7 {dimension_numbers = #tpu.dot_dimension_numbers<[1], [0], [0], [1], [0, 0, 1, 1], [], []>} : vector<8x32xbf16>, vector<32x64xbf16>, vector<8x64xf32> -> vector<8x64xf32>
    %c0_8 = arith.constant 0 : index
    %c0_9 = arith.constant 0 : index
    %17 = vector.load %arg4[%c0_8, %c0_9] : memref<1x64xf32, #tpu.memory_space<vmem>>, vector<1x64xf32>
    %18 = vector.broadcast %17 : vector<1x64xf32> to vector<8x64xf32>
    %19 = arith.addf %16, %18 : vector<8x64xf32>
    %20 = vector.extract_strided_slice %19 {offsets = [0, 0], sizes = [8, 32], strides = [1, 1]} : vector<8x64xf32> to vector<8x32xf32>
    %21 = vector.extract_strided_slice %19 {offsets = [0, 32], sizes = [8, 32], strides = [1, 1]} : vector<8x64xf32> to vector<8x32xf32>
    %22 = arith.mulf %21, %21 : vector<8x32xf32>
    %23 = arith.mulf %21, %22 : vector<8x32xf32>
    %cst_10 = arith.constant 4.471500e-02 : f32
    %24 = vector.broadcast %cst_10 : f32 to vector<8x32xf32>
    %25 = arith.mulf %24, %23 : vector<8x32xf32>
    %26 = arith.addf %21, %25 : vector<8x32xf32>
    %cst_11 = arith.constant 0.797884583 : f32
    %27 = vector.broadcast %cst_11 : f32 to vector<8x32xf32>
    %28 = arith.mulf %27, %26 : vector<8x32xf32>
    %29 = math.tanh %28 : vector<8x32xf32>
    %cst_12 = arith.constant 1.000000e+00 : f32
    %30 = vector.broadcast %cst_12 : f32 to vector<8x32xf32>
    %31 = arith.addf %30, %29 : vector<8x32xf32>
    %cst_13 = arith.constant 5.000000e-01 : f32
    %32 = vector.broadcast %cst_13 : f32 to vector<8x32xf32>
    %33 = arith.mulf %32, %31 : vector<8x32xf32>
    %34 = arith.mulf %21, %33 : vector<8x32xf32>
    %35 = arith.mulf %20, %34 : vector<8x32xf32>
    %36 = arith.truncf %35 : vector<8x32xf32> to vector<8x32xbf16>
    %c0_14 = arith.constant 0 : index
    %c0_15 = arith.constant 0 : index
    %37 = vector.load %arg5[%c0_14, %c0_15] : memref<32x32xbf16, #tpu.memory_space<vmem>>, vector<32x32xbf16>
    %cst_16 = arith.constant dense<0.000000e+00> : vector<8x32xf32>
    %38 = tpu.matmul %36, %37, %cst_16 {dimension_numbers = #tpu.dot_dimension_numbers<[1], [0], [0], [1], [0, 0, 1, 1], [], []>} : vector<8x32xbf16>, vector<32x32xbf16>, vector<8x32xf32> -> vector<8x32xf32>
    %c0_17 = arith.constant 0 : index
    %c0_18 = arith.constant 0 : index
    %39 = vector.load %arg6[%c0_17, %c0_18] : memref<1x32xf32, #tpu.memory_space<vmem>>, vector<1x32xf32>
    %40 = vector.broadcast %39 : vector<1x32xf32> to vector<8x32xf32>
    %41 = arith.addf %38, %40 : vector<8x32xf32>
    %42 = arith.addf %41, %0 : vector<8x32xf32>
    %c0_19 = arith.constant 0 : index
    %c0_20 = arith.constant 0 : index
    %43 = vector.load %arg7[%c0_19, %c0_20] : memref<8x32xf32, #tpu.memory_space<vmem>>, vector<8x32xf32>
    tpu.vector_store %arg7[%c0_19, %c0_20], %42 {strides = array<i32>} : memref<8x32xf32, #tpu.memory_space<vmem>>, vector<8x32xf32>,
    return
  }
  func.func @transform_0(%arg0: i32) -> (i32, i32) {
    %c0_i32 = arith.constant 0 : i32
    %c0_i32_0 = arith.constant 0 : i32
    return %arg0, %c0_i32 : i32, i32
  }
  func.func @transform_1(%arg0: i32) -> (i32, i32) {
    %c0_i32 = arith.constant 0 : i32
    %c0_i32_0 = arith.constant 0 : i32
    %c0_i32_1 = arith.constant 0 : i32
    return %c0_i32, %c0_i32_0 : i32, i32
  }
  func.func @transform_2(%arg0: i32) -> (i32, i32) {
    %c0_i32 = arith.constant 0 : i32
    %c0_i32_0 = arith.constant 0 : i32
    %c0_i32_1 = arith.constant 0 : i32
    return %c0_i32, %c0_i32_0 : i32, i32
  }
  func.func @transform_3(%arg0: i32) -> (i32, i32) {
    %c0_i32 = arith.constant 0 : i32
    %c0_i32_0 = arith.constant 0 : i32
    %c0_i32_1 = arith.constant 0 : i32
    return %c0_i32, %c0_i32_0 : i32, i32
  }
  func.func @transform_4(%arg0: i32) -> (i32, i32) {
    %c0_i32 = arith.constant 0 : i32
    %c0_i32_0 = arith.constant 0 : i32
    %c0_i32_1 = arith.constant 0 : i32
    return %c0_i32, %c0_i32_0 : i32, i32
  }
  func.func @transform_5(%arg0: i32) -> (i32, i32) {
    %c0_i32 = arith.constant 0 : i32
    %c0_i32_0 = arith.constant 0 : i32
    %c0_i32_1 = arith.constant 0 : i32
    return %c0_i32, %c0_i32_0 : i32, i32
  }
  func.func @transform_6(%arg0: i32) -> (i32, i32) {
    %c0_i32 = arith.constant 0 : i32
    %c0_i32_0 = arith.constant 0 : i32
    return %arg0, %c0_i32 : i32, i32
  }
}

module attributes {stable_mosaic.version = 11 : i64} {
  func.func @_attnblock_kernel(%arg0: i32, %arg1: memref<1x8x32xf32, #tpu.memory_space<vmem>>, %arg2: memref<1x1x32xf32, #tpu.memory_space<vmem>>, %arg3: memref<1x1x32xf32, #tpu.memory_space<vmem>>, %arg4: memref<32x96xbf16, #tpu.memory_space<vmem>>, %arg5: memref<1x96xf32, #tpu.memory_space<vmem>>, %arg6: memref<32x32xbf16, #tpu.memory_space<vmem>>, %arg7: memref<1x32xf32, #tpu.memory_space<vmem>>, %arg8: memref<32x32xbf16, #tpu.memory_space<vmem>>, %arg9: memref<1x32xf32, #tpu.memory_space<vmem>>, %arg10: memref<1x1x32xf32, #tpu.memory_space<vmem>>) attributes {dimension_semantics = [#tpu.dimension_semantics<parallel>], iteration_bounds = array<i64: 2>, scalar_prefetch = 0 : i64, scratch_operands = 0 : i64, tpu.core_type = #tpu.core_type<tc>, window_params = [{transform_indices = @transform_0, window_bounds = array<i64: 1, 8, 32>}, {transform_indices = @transform_1, window_bounds = array<i64: 1, 1, 32>}, {transform_indices = @transform_2, window_bounds = array<i64: 1, 1, 32>}, {pipeline_mode = #tpu.pipeline_mode<synchronous>, transform_indices = @transform_3, window_bounds = array<i64: 32, 96>}, {pipeline_mode = #tpu.pipeline_mode<synchronous>, transform_indices = @transform_4, window_bounds = array<i64: 1, 96>}, {pipeline_mode = #tpu.pipeline_mode<synchronous>, transform_indices = @transform_5, window_bounds = array<i64: 32, 32>}, {pipeline_mode = #tpu.pipeline_mode<synchronous>, transform_indices = @transform_6, window_bounds = array<i64: 1, 32>}, {pipeline_mode = #tpu.pipeline_mode<synchronous>, transform_indices = @transform_7, window_bounds = array<i64: 32, 32>}, {pipeline_mode = #tpu.pipeline_mode<synchronous>, transform_indices = @transform_8, window_bounds = array<i64: 1, 32>}, {transform_indices = @transform_9, window_bounds = array<i64: 1, 1, 32>}]} {
    %c0 = arith.constant 0 : index
    %c0_0 = arith.constant 0 : index
    %c0_1 = arith.constant 0 : index
    %0 = vector.load %arg1[%c0, %c0_0, %c0_1] : memref<1x8x32xf32, #tpu.memory_space<vmem>>, vector<1x8x32xf32>
    %1 = vector.shape_cast %0 : vector<1x8x32xf32> to vector<8x32xf32>
    %c0_2 = arith.constant 0 : index
    %c0_3 = arith.constant 0 : index
    %c0_4 = arith.constant 0 : index
    %2 = vector.load %arg2[%c0_2, %c0_3, %c0_4] : memref<1x1x32xf32, #tpu.memory_space<vmem>>, vector<1x1x32xf32>
    %3 = vector.shape_cast %2 : vector<1x1x32xf32> to vector<1x32xf32>
    %4 = vector.broadcast %3 : vector<1x32xf32> to vector<8x32xf32>
    %5 = arith.mulf %1, %4 : vector<8x32xf32>
    %c0_5 = arith.constant 0 : index
    %c0_6 = arith.constant 0 : index
    %c0_7 = arith.constant 0 : index
    %6 = vector.load %arg3[%c0_5, %c0_6, %c0_7] : memref<1x1x32xf32, #tpu.memory_space<vmem>>, vector<1x1x32xf32>
    %7 = vector.shape_cast %6 : vector<1x1x32xf32> to vector<1x32xf32>
    %8 = vector.broadcast %7 : vector<1x32xf32> to vector<8x32xf32>
    %9 = arith.addf %5, %8 : vector<8x32xf32>
    %10 = arith.truncf %9 : vector<8x32xf32> to vector<8x32xbf16>
    %c0_8 = arith.constant 0 : index
    %c0_9 = arith.constant 0 : index
    %11 = vector.load %arg4[%c0_8, %c0_9] : memref<32x96xbf16, #tpu.memory_space<vmem>>, vector<32x96xbf16>
    %cst = arith.constant dense<0.000000e+00> : vector<8x96xf32>
    %12 = tpu.matmul %10, %11, %cst {dimension_numbers = #tpu.dot_dimension_numbers<[1], [0], [0], [1], [0, 0, 1, 1], [], []>} : vector<8x32xbf16>, vector<32x96xbf16>, vector<8x96xf32> -> vector<8x96xf32>
    %c0_10 = arith.constant 0 : index
    %c0_11 = arith.constant 0 : index
    %13 = vector.load %arg5[%c0_10, %c0_11] : memref<1x96xf32, #tpu.memory_space<vmem>>, vector<1x96xf32>
    %14 = vector.broadcast %13 : vector<1x96xf32> to vector<8x96xf32>
    %15 = arith.addf %12, %14 : vector<8x96xf32>
    %c0_12 = arith.constant 0 : index
    %c0_13 = arith.constant 0 : index
    %16 = vector.load %arg6[%c0_12, %c0_13] : memref<32x32xbf16, #tpu.memory_space<vmem>>, vector<32x32xbf16>
    %c0_14 = arith.constant 0 : index
    %c0_15 = arith.constant 0 : index
    %17 = vector.load %arg7[%c0_14, %c0_15] : memref<1x32xf32, #tpu.memory_space<vmem>>, vector<1x32xf32>
    %18 = vector.broadcast %17 : vector<1x32xf32> to vector<8x32xf32>
    %19 = arith.addf %1, %18 : vector<8x32xf32>
    %20 = vector.extract_strided_slice %15 {offsets = [0, 0], sizes = [8, 8], strides = [1, 1]} : vector<8x96xf32> to vector<8x8xf32>
    %21 = vector.extract_strided_slice %15 {offsets = [0, 8], sizes = [8, 8], strides = [1, 1]} : vector<8x96xf32> to vector<8x8xf32>
    %22 = vector.extract_strided_slice %15 {offsets = [0, 16], sizes = [8, 8], strides = [1, 1]} : vector<8x96xf32> to vector<8x8xf32>
    %23 = arith.truncf %20 : vector<8x8xf32> to vector<8x8xbf16>
    %24 = arith.truncf %21 : vector<8x8xf32> to vector<8x8xbf16>
    %cst_16 = arith.constant dense<0.000000e+00> : vector<8x8xf32>
    %25 = tpu.matmul %23, %24, %cst_16 {dimension_numbers = #tpu.dot_dimension_numbers<[1], [1], [0], [0], [0, 0, 1, 0], [], []>} : vector<8x8xbf16>, vector<8x8xbf16>, vector<8x8xf32> -> vector<8x8xf32>
    %cst_17 = arith.constant 0.353553385 : f32
    %26 = vector.broadcast %cst_17 : f32 to vector<8x8xf32>
    %27 = arith.mulf %25, %26 : vector<8x8xf32>
    %cst_18 = arith.constant dense<0xFF800000> : vector<8xf32>
    %28 = vector.multi_reduction <maximumf>, %27, %cst_18 [1] : vector<8x8xf32> to vector<8xf32>
    %29 = vector.shape_cast %28 : vector<8xf32> to vector<8x1xf32>
    %30 = vector.broadcast %29 : vector<8x1xf32> to vector<8x8xf32>
    %31 = arith.subf %27, %30 : vector<8x8xf32>
    %32 = math.exp %31 : vector<8x8xf32>
    %cst_19 = arith.constant dense<0.000000e+00> : vector<8xf32>
    %33 = vector.multi_reduction <add>, %32, %cst_19 [1] : vector<8x8xf32> to vector<8xf32>
    %34 = vector.shape_cast %33 : vector<8xf32> to vector<8x1xf32>
    %35 = tpu.reciprocal %34 : vector<8x1xf32> -> vector<8x1xf32>
    %36 = vector.broadcast %35 : vector<8x1xf32> to vector<8x8xf32>
    %37 = arith.mulf %32, %36 : vector<8x8xf32>
    %38 = arith.truncf %37 : vector<8x8xf32> to vector<8x8xbf16>
    %39 = arith.truncf %22 : vector<8x8xf32> to vector<8x8xbf16>
    %cst_20 = arith.constant dense<0.000000e+00> : vector<8x8xf32>
    %40 = tpu.matmul %38, %39, %cst_20 {dimension_numbers = #tpu.dot_dimension_numbers<[1], [0], [0], [1], [0, 0, 1, 1], [], []>} : vector<8x8xbf16>, vector<8x8xbf16>, vector<8x8xf32> -> vector<8x8xf32>
    %41 = arith.truncf %40 : vector<8x8xf32> to vector<8x8xbf16>
    %42 = vector.extract_strided_slice %16 {offsets = [0, 0], sizes = [8, 32], strides = [1, 1]} : vector<32x32xbf16> to vector<8x32xbf16>
    %cst_21 = arith.constant dense<0.000000e+00> : vector<8x32xf32>
    %43 = tpu.matmul %41, %42, %cst_21 {dimension_numbers = #tpu.dot_dimension_numbers<[1], [0], [0], [1], [0, 0, 1, 1], [], []>} : vector<8x8xbf16>, vector<8x32xbf16>, vector<8x32xf32> -> vector<8x32xf32>
    %44 = arith.addf %19, %43 : vector<8x32xf32>
    %45 = vector.extract_strided_slice %15 {offsets = [0, 24], sizes = [8, 8], strides = [1, 1]} : vector<8x96xf32> to vector<8x8xf32>
    %46 = vector.extract_strided_slice %15 {offsets = [0, 32], sizes = [8, 8], strides = [1, 1]} : vector<8x96xf32> to vector<8x8xf32>
    %47 = vector.extract_strided_slice %15 {offsets = [0, 40], sizes = [8, 8], strides = [1, 1]} : vector<8x96xf32> to vector<8x8xf32>
    %48 = arith.truncf %45 : vector<8x8xf32> to vector<8x8xbf16>
    %49 = arith.truncf %46 : vector<8x8xf32> to vector<8x8xbf16>
    %cst_22 = arith.constant dense<0.000000e+00> : vector<8x8xf32>
    %50 = tpu.matmul %48, %49, %cst_22 {dimension_numbers = #tpu.dot_dimension_numbers<[1], [1], [0], [0], [0, 0, 1, 0], [], []>} : vector<8x8xbf16>, vector<8x8xbf16>, vector<8x8xf32> -> vector<8x8xf32>
    %cst_23 = arith.constant 0.353553385 : f32
    %51 = vector.broadcast %cst_23 : f32 to vector<8x8xf32>
    %52 = arith.mulf %50, %51 : vector<8x8xf32>
    %cst_24 = arith.constant dense<0xFF800000> : vector<8xf32>
    %53 = vector.multi_reduction <maximumf>, %52, %cst_24 [1] : vector<8x8xf32> to vector<8xf32>
    %54 = vector.shape_cast %53 : vector<8xf32> to vector<8x1xf32>
    %55 = vector.broadcast %54 : vector<8x1xf32> to vector<8x8xf32>
    %56 = arith.subf %52, %55 : vector<8x8xf32>
    %57 = math.exp %56 : vector<8x8xf32>
    %cst_25 = arith.constant dense<0.000000e+00> : vector<8xf32>
    %58 = vector.multi_reduction <add>, %57, %cst_25 [1] : vector<8x8xf32> to vector<8xf32>
    %59 = vector.shape_cast %58 : vector<8xf32> to vector<8x1xf32>
    %60 = tpu.reciprocal %59 : vector<8x1xf32> -> vector<8x1xf32>
    %61 = vector.broadcast %60 : vector<8x1xf32> to vector<8x8xf32>
    %62 = arith.mulf %57, %61 : vector<8x8xf32>
    %63 = arith.truncf %62 : vector<8x8xf32> to vector<8x8xbf16>
    %64 = arith.truncf %47 : vector<8x8xf32> to vector<8x8xbf16>
    %cst_26 = arith.constant dense<0.000000e+00> : vector<8x8xf32>
    %65 = tpu.matmul %63, %64, %cst_26 {dimension_numbers = #tpu.dot_dimension_numbers<[1], [0], [0], [1], [0, 0, 1, 1], [], []>} : vector<8x8xbf16>, vector<8x8xbf16>, vector<8x8xf32> -> vector<8x8xf32>
    %66 = arith.truncf %65 : vector<8x8xf32> to vector<8x8xbf16>
    %67 = vector.extract_strided_slice %16 {offsets = [8, 0], sizes = [8, 32], strides = [1, 1]} : vector<32x32xbf16> to vector<8x32xbf16>
    %cst_27 = arith.constant dense<0.000000e+00> : vector<8x32xf32>
    %68 = tpu.matmul %66, %67, %cst_27 {dimension_numbers = #tpu.dot_dimension_numbers<[1], [0], [0], [1], [0, 0, 1, 1], [], []>} : vector<8x8xbf16>, vector<8x32xbf16>, vector<8x32xf32> -> vector<8x32xf32>
    %69 = arith.addf %44, %68 : vector<8x32xf32>
    %70 = vector.extract_strided_slice %15 {offsets = [0, 48], sizes = [8, 8], strides = [1, 1]} : vector<8x96xf32> to vector<8x8xf32>
    %71 = vector.extract_strided_slice %15 {offsets = [0, 56], sizes = [8, 8], strides = [1, 1]} : vector<8x96xf32> to vector<8x8xf32>
    %72 = vector.extract_strided_slice %15 {offsets = [0, 64], sizes = [8, 8], strides = [1, 1]} : vector<8x96xf32> to vector<8x8xf32>
    %73 = arith.truncf %70 : vector<8x8xf32> to vector<8x8xbf16>
    %74 = arith.truncf %71 : vector<8x8xf32> to vector<8x8xbf16>
    %cst_28 = arith.constant dense<0.000000e+00> : vector<8x8xf32>
    %75 = tpu.matmul %73, %74, %cst_28 {dimension_numbers = #tpu.dot_dimension_numbers<[1], [1], [0], [0], [0, 0, 1, 0], [], []>} : vector<8x8xbf16>, vector<8x8xbf16>, vector<8x8xf32> -> vector<8x8xf32>
    %cst_29 = arith.constant 0.353553385 : f32
    %76 = vector.broadcast %cst_29 : f32 to vector<8x8xf32>
    %77 = arith.mulf %75, %76 : vector<8x8xf32>
    %cst_30 = arith.constant dense<0xFF800000> : vector<8xf32>
    %78 = vector.multi_reduction <maximumf>, %77, %cst_30 [1] : vector<8x8xf32> to vector<8xf32>
    %79 = vector.shape_cast %78 : vector<8xf32> to vector<8x1xf32>
    %80 = vector.broadcast %79 : vector<8x1xf32> to vector<8x8xf32>
    %81 = arith.subf %77, %80 : vector<8x8xf32>
    %82 = math.exp %81 : vector<8x8xf32>
    %cst_31 = arith.constant dense<0.000000e+00> : vector<8xf32>
    %83 = vector.multi_reduction <add>, %82, %cst_31 [1] : vector<8x8xf32> to vector<8xf32>
    %84 = vector.shape_cast %83 : vector<8xf32> to vector<8x1xf32>
    %85 = tpu.reciprocal %84 : vector<8x1xf32> -> vector<8x1xf32>
    %86 = vector.broadcast %85 : vector<8x1xf32> to vector<8x8xf32>
    %87 = arith.mulf %82, %86 : vector<8x8xf32>
    %88 = arith.truncf %87 : vector<8x8xf32> to vector<8x8xbf16>
    %89 = arith.truncf %72 : vector<8x8xf32> to vector<8x8xbf16>
    %cst_32 = arith.constant dense<0.000000e+00> : vector<8x8xf32>
    %90 = tpu.matmul %88, %89, %cst_32 {dimension_numbers = #tpu.dot_dimension_numbers<[1], [0], [0], [1], [0, 0, 1, 1], [], []>} : vector<8x8xbf16>, vector<8x8xbf16>, vector<8x8xf32> -> vector<8x8xf32>
    %91 = arith.truncf %90 : vector<8x8xf32> to vector<8x8xbf16>
    %92 = vector.extract_strided_slice %16 {offsets = [16, 0], sizes = [8, 32], strides = [1, 1]} : vector<32x32xbf16> to vector<8x32xbf16>
    %cst_33 = arith.constant dense<0.000000e+00> : vector<8x32xf32>
    %93 = tpu.matmul %91, %92, %cst_33 {dimension_numbers = #tpu.dot_dimension_numbers<[1], [0], [0], [1], [0, 0, 1, 1], [], []>} : vector<8x8xbf16>, vector<8x32xbf16>, vector<8x32xf32> -> vector<8x32xf32>
    %94 = arith.addf %69, %93 : vector<8x32xf32>
    %95 = vector.extract_strided_slice %15 {offsets = [0, 72], sizes = [8, 8], strides = [1, 1]} : vector<8x96xf32> to vector<8x8xf32>
    %96 = vector.extract_strided_slice %15 {offsets = [0, 80], sizes = [8, 8], strides = [1, 1]} : vector<8x96xf32> to vector<8x8xf32>
    %97 = vector.extract_strided_slice %15 {offsets = [0, 88], sizes = [8, 8], strides = [1, 1]} : vector<8x96xf32> to vector<8x8xf32>
    %98 = arith.truncf %95 : vector<8x8xf32> to vector<8x8xbf16>
    %99 = arith.truncf %96 : vector<8x8xf32> to vector<8x8xbf16>
    %cst_34 = arith.constant dense<0.000000e+00> : vector<8x8xf32>
    %100 = tpu.matmul %98, %99, %cst_34 {dimension_numbers = #tpu.dot_dimension_numbers<[1], [1], [0], [0], [0, 0, 1, 0], [], []>} : vector<8x8xbf16>, vector<8x8xbf16>, vector<8x8xf32> -> vector<8x8xf32>
    %cst_35 = arith.constant 0.353553385 : f32
    %101 = vector.broadcast %cst_35 : f32 to vector<8x8xf32>
    %102 = arith.mulf %100, %101 : vector<8x8xf32>
    %cst_36 = arith.constant dense<0xFF800000> : vector<8xf32>
    %103 = vector.multi_reduction <maximumf>, %102, %cst_36 [1] : vector<8x8xf32> to vector<8xf32>
    %104 = vector.shape_cast %103 : vector<8xf32> to vector<8x1xf32>
    %105 = vector.broadcast %104 : vector<8x1xf32> to vector<8x8xf32>
    %106 = arith.subf %102, %105 : vector<8x8xf32>
    %107 = math.exp %106 : vector<8x8xf32>
    %cst_37 = arith.constant dense<0.000000e+00> : vector<8xf32>
    %108 = vector.multi_reduction <add>, %107, %cst_37 [1] : vector<8x8xf32> to vector<8xf32>
    %109 = vector.shape_cast %108 : vector<8xf32> to vector<8x1xf32>
    %110 = tpu.reciprocal %109 : vector<8x1xf32> -> vector<8x1xf32>
    %111 = vector.broadcast %110 : vector<8x1xf32> to vector<8x8xf32>
    %112 = arith.mulf %107, %111 : vector<8x8xf32>
    %113 = arith.truncf %112 : vector<8x8xf32> to vector<8x8xbf16>
    %114 = arith.truncf %97 : vector<8x8xf32> to vector<8x8xbf16>
    %cst_38 = arith.constant dense<0.000000e+00> : vector<8x8xf32>
    %115 = tpu.matmul %113, %114, %cst_38 {dimension_numbers = #tpu.dot_dimension_numbers<[1], [0], [0], [1], [0, 0, 1, 1], [], []>} : vector<8x8xbf16>, vector<8x8xbf16>, vector<8x8xf32> -> vector<8x8xf32>
    %116 = arith.truncf %115 : vector<8x8xf32> to vector<8x8xbf16>
    %117 = vector.extract_strided_slice %16 {offsets = [24, 0], sizes = [8, 32], strides = [1, 1]} : vector<32x32xbf16> to vector<8x32xbf16>
    %cst_39 = arith.constant dense<0.000000e+00> : vector<8x32xf32>
    %118 = tpu.matmul %116, %117, %cst_39 {dimension_numbers = #tpu.dot_dimension_numbers<[1], [0], [0], [1], [0, 0, 1, 1], [], []>} : vector<8x8xbf16>, vector<8x32xbf16>, vector<8x32xf32> -> vector<8x32xf32>
    %119 = arith.addf %94, %118 : vector<8x32xf32>
    %cst_40 = arith.constant dense<0.000000e+00> : vector<32xf32>
    %120 = vector.multi_reduction <add>, %119, %cst_40 [0] : vector<8x32xf32> to vector<32xf32>
    %121 = vector.shape_cast %120 : vector<32xf32> to vector<1x32xf32>
    %cst_41 = arith.constant 1.250000e-01 : f32
    %122 = vector.broadcast %cst_41 : f32 to vector<1x32xf32>
    %123 = arith.mulf %121, %122 : vector<1x32xf32>
    %124 = arith.truncf %123 : vector<1x32xf32> to vector<1x32xbf16>
    %c0_42 = arith.constant 0 : index
    %c0_43 = arith.constant 0 : index
    %125 = vector.load %arg8[%c0_42, %c0_43] : memref<32x32xbf16, #tpu.memory_space<vmem>>, vector<32x32xbf16>
    %cst_44 = arith.constant dense<0.000000e+00> : vector<1x32xf32>
    %126 = tpu.matmul %124, %125, %cst_44 {dimension_numbers = #tpu.dot_dimension_numbers<[1], [0], [0], [1], [0, 0, 1, 1], [], []>} : vector<1x32xbf16>, vector<32x32xbf16>, vector<1x32xf32> -> vector<1x32xf32>
    %c0_45 = arith.constant 0 : index
    %c0_46 = arith.constant 0 : index
    %127 = vector.load %arg9[%c0_45, %c0_46] : memref<1x32xf32, #tpu.memory_space<vmem>>, vector<1x32xf32>
    %128 = arith.addf %126, %127 : vector<1x32xf32>
    %c0_47 = arith.constant 0 : index
    %c0_48 = arith.constant 0 : index
    %c0_49 = arith.constant 0 : index
    %129 = vector.load %arg10[%c0_47, %c0_48, %c0_49] : memref<1x1x32xf32, #tpu.memory_space<vmem>>, vector<1x1x32xf32>
    %130 = vector.shape_cast %129 : vector<1x1x32xf32> to vector<1x32xf32>
    %131 = vector.shape_cast %128 : vector<1x32xf32> to vector<1x1x32xf32>
    tpu.vector_store %arg10[%c0_47, %c0_48, %c0_49], %131 {strides = array<i32>} : memref<1x1x32xf32, #tpu.memory_space<vmem>>, vector<1x1x32xf32>,
    return
  }
  func.func @transform_0(%arg0: i32) -> (i32, i32, i32) {
    %c0_i32 = arith.constant 0 : i32
    %c0_i32_0 = arith.constant 0 : i32
    %c0_i32_1 = arith.constant 0 : i32
    return %arg0, %c0_i32, %c0_i32_0 : i32, i32, i32
  }
  func.func @transform_1(%arg0: i32) -> (i32, i32, i32) {
    %c0_i32 = arith.constant 0 : i32
    %c0_i32_0 = arith.constant 0 : i32
    %c0_i32_1 = arith.constant 0 : i32
    return %arg0, %c0_i32, %c0_i32_0 : i32, i32, i32
  }
  func.func @transform_2(%arg0: i32) -> (i32, i32, i32) {
    %c0_i32 = arith.constant 0 : i32
    %c0_i32_0 = arith.constant 0 : i32
    %c0_i32_1 = arith.constant 0 : i32
    return %arg0, %c0_i32, %c0_i32_0 : i32, i32, i32
  }
  func.func @transform_3(%arg0: i32) -> (i32, i32) {
    %c0_i32 = arith.constant 0 : i32
    %c0_i32_0 = arith.constant 0 : i32
    %c0_i32_1 = arith.constant 0 : i32
    return %c0_i32, %c0_i32_0 : i32, i32
  }
  func.func @transform_4(%arg0: i32) -> (i32, i32) {
    %c0_i32 = arith.constant 0 : i32
    %c0_i32_0 = arith.constant 0 : i32
    %c0_i32_1 = arith.constant 0 : i32
    return %c0_i32, %c0_i32_0 : i32, i32
  }
  func.func @transform_5(%arg0: i32) -> (i32, i32) {
    %c0_i32 = arith.constant 0 : i32
    %c0_i32_0 = arith.constant 0 : i32
    %c0_i32_1 = arith.constant 0 : i32
    return %c0_i32, %c0_i32_0 : i32, i32
  }
  func.func @transform_6(%arg0: i32) -> (i32, i32) {
    %c0_i32 = arith.constant 0 : i32
    %c0_i32_0 = arith.constant 0 : i32
    %c0_i32_1 = arith.constant 0 : i32
    return %c0_i32, %c0_i32_0 : i32, i32
  }
  func.func @transform_7(%arg0: i32) -> (i32, i32) {
    %c0_i32 = arith.constant 0 : i32
    %c0_i32_0 = arith.constant 0 : i32
    %c0_i32_1 = arith.constant 0 : i32
    return %c0_i32, %c0_i32_0 : i32, i32
  }
  func.func @transform_8(%arg0: i32) -> (i32, i32) {
    %c0_i32 = arith.constant 0 : i32
    %c0_i32_0 = arith.constant 0 : i32
    %c0_i32_1 = arith.constant 0 : i32
    return %c0_i32, %c0_i32_0 : i32, i32
  }
  func.func @transform_9(%arg0: i32) -> (i32, i32, i32) {
    %c0_i32 = arith.constant 0 : i32
    %c0_i32_0 = arith.constant 0 : i32
    %c0_i32_1 = arith.constant 0 : i32
    return %arg0, %c0_i32, %c0_i32_0 : i32, i32, i32
  }
}

</mosaic_0001>

<llo_original>
// kernel: collapsing_transformer_forward.10
$region0: #{collapsing_transformer_forward.10}
  #allocation0 [shape = 'u32[]', space=smem, size = 0x4, offset = 0x4, fixed_abs, tag = 'smem constant byte address 0x4 - core index']
  #allocation1 [shape = 'u32[144,128]{1,0:T(1,128)}', space=vmem, size = 0x12000, scoped, tag = 'internal scratch']
  %s0 = inlined_call_operand.vmem [shape: f32[16,32], index: 0, kind: input, shape index: {}]
  %s1 = inlined_call_operand.vmem [shape: f32[1,32], index: 1, kind: input, shape index: {}]
  %s2 = inlined_call_operand.vmem [shape: f32[1,32], index: 2, kind: input, shape index: {}]
  %s3 = inlined_call_operand.vmem [shape: bf16[32,32], index: 3, kind: input, shape index: {}]
  %s4 = inlined_call_operand.vmem [shape: f32[1,32], index: 4, kind: input, shape index: {}]
  %s5 = inlined_call_operand.vmem [shape: f32[16,32], index: 5, kind: output, shape index: {}]
  %s6 = sld [smem:[#allocation0]]
  $region53: #{collapsing_transformer_forward.10} parent=0
    _
  %s8 = ssub.s32 1, %s6
  %s9 = scalar_select 0, %s8, %s6
  loop: start=0, step=1, limit=4
  $region2: #{collapsing_transformer_forward.10} parent=0 // loop_pre_header
    _
  $region3: #{collapsing_transformer_forward.10} parent=0 // loop_header
    %s11 = sphi 0, %s15
    %p12 = scmp.ge.s32.totalorder %s11, 4
    %s21 = sphi 0, %s23
    %s24 = sphi 0, %s21
    %s25 = sphi 0, %s24
    %s41 = sphi 0, %s25
    %s45 = sphi 0, %s45
    %s47 = sphi 0, %s45
    %s48 = sphi 0, %s47
    %s62 = sphi 0, %s48
    %s66 = sphi 0, %s66
    %s68 = sphi 0, %s66
    %s69 = sphi 0, %s68
    %s83 = sphi 0, %s69
    %s87 = sphi 0, %s87
    %s89 = sphi 0, %s87
    %s90 = sphi 0, %s89
    %s104 = sphi 0, %s90
    %s108 = sphi 0, %s108
    %s110 = sphi 0, %s108
    %s111 = sphi 0, %s110
    %s125 = sphi 0, %s111
    %s131 = sphi 0, %s133
    %s134 = sphi 0, %s131
    %s135 = sphi 0, %s134
    %s151 = sphi 0, %s135
  $region4: #{collapsing_transformer_forward.10} parent=0 // loop_header_branch
    %14 = sbr.rel (%p12) target = $region8
  $region5: #{collapsing_transformer_forward.10} parent=0 // loop_body
    %s16 = ssub.s32 %s11, 1
    %s17 = ssub.s32 %s11, 2
    %s18 = sadd.s32 %s11, 1
    %s19 = ssub.s32 %s11, %s18
    %p20 = scmp.eq.s32.totalorder %s19, 0
    %s22 = sadd.s32 %s21, 1
    %s23 = scalar_select %p20, %s21, %s22
    %p26 = pneg %p20
    %p27 = scmp.eq.s32.totalorder %s11, 1
    %p28 = por %p26, %p27
    %p29 = scmp.ne.s32.totalorder %s21, %s24
    %p30 = scmp.eq.s32.totalorder %s11, 0
    %p31 = por %p29, %p30
    %p32 = scmp.ne.s32.totalorder %s21, %s24
    %p33 = scmp.eq.s32.totalorder %s16, 1
    %p34 = por %p32, %p33
    %p35 = scmp.ne.s32.totalorder %s24, %s25
    %p36 = scmp.eq.s32.totalorder %s16, 0
    %p37 = por %p35, %p36
    %p38 = scmp.ne.s32.totalorder %s24, %s25
    %p39 = scmp.eq.s32.totalorder %s17, 1
    %p40 = por %p38, %p39
    %p42 = scmp.ne.s32.totalorder %s25, %s41
    %p43 = scmp.eq.s32.totalorder %s17, 0
    %p44 = por %p42, %p43
    %s46 = sadd.s32 %s45, 1
    %p49 = scmp.eq.s32.totalorder %s11, 1
    %p50 = scmp.ne.s32.totalorder %s45, %s47
    %p51 = scmp.eq.s32.totalorder %s11, 0
    %p52 = por %p50, %p51
    %p53 = scmp.ne.s32.totalorder %s45, %s47
    %p54 = scmp.eq.s32.totalorder %s16, 1
    %p55 = por %p53, %p54
    %p56 = scmp.ne.s32.totalorder %s47, %s48
    %p57 = scmp.eq.s32.totalorder %s16, 0
    %p58 = por %p56, %p57
    %p59 = scmp.ne.s32.totalorder %s47, %s48
    %p60 = scmp.eq.s32.totalorder %s17, 1
    %p61 = por %p59, %p60
    %p63 = scmp.ne.s32.totalorder %s48, %s62
    %p64 = scmp.eq.s32.totalorder %s17, 0
    %p65 = por %p63, %p64
    %s67 = sadd.s32 %s66, 1
    %p70 = scmp.eq.s32.totalorder %s11, 1
    %p71 = scmp.ne.s32.totalorder %s66, %s68
    %p72 = scmp.eq.s32.totalorder %s11, 0
    %p73 = por %p71, %p72
    %p74 = scmp.ne.s32.totalorder %s66, %s68
    %p75 = scmp.eq.s32.totalorder %s16, 1
    %p76 = por %p74, %p75
    %p77 = scmp.ne.s32.totalorder %s68, %s69
    %p78 = scmp.eq.s32.totalorder %s16, 0
    %p79 = por %p77, %p78
    %p80 = scmp.ne.s32.totalorder %s68, %s69
    %p81 = scmp.eq.s32.totalorder %s17, 1
    %p82 = por %p80, %p81
    %p84 = scmp.ne.s32.totalorder %s69, %s83
    %p85 = scmp.eq.s32.totalorder %s17, 0
    %p86 = por %p84, %p85
    %s88 = sadd.s32 %s87, 1
    %p91 = scmp.eq.s32.totalorder %s11, 1
    %p92 = scmp.ne.s32.totalorder %s87, %s89
    %p93 = scmp.eq.s32.totalorder %s11, 0
    %p94 = por %p92, %p93
    %p95 = scmp.ne.s32.totalorder %s87, %s89
    %p96 = scmp.eq.s32.totalorder %s16, 1
    %p97 = por %p95, %p96
    %p98 = scmp.ne.s32.totalorder %s89, %s90
    %p99 = scmp.eq.s32.totalorder %s16, 0
    %p100 = por %p98, %p99
    %p101 = scmp.ne.s32.totalorder %s89, %s90
    %p102 = scmp.eq.s32.totalorder %s17, 1
    %p103 = por %p101, %p102
    %p105 = scmp.ne.s32.totalorder %s90, %s104
    %p106 = scmp.eq.s32.totalorder %s17, 0
    %p107 = por %p105, %p106
    %s109 = sadd.s32 %s108, 1
    %p112 = scmp.eq.s32.totalorder %s11, 1
    %p113 = scmp.ne.s32.totalorder %s108, %s110
    %p114 = scmp.eq.s32.totalorder %s11, 0
    %p115 = por %p113, %p114
    %p116 = scmp.ne.s32.totalorder %s108, %s110
    %p117 = scmp.eq.s32.totalorder %s16, 1
    %p118 = por %p116, %p117
    %p119 = scmp.ne.s32.totalorder %s110, %s111
    %p120 = scmp.eq.s32.totalorder %s16, 0
    %p121 = por %p119, %p120
    %p122 = scmp.ne.s32.totalorder %s110, %s111
    %p123 = scmp.eq.s32.totalorder %s17, 1
    %p124 = por %p122, %p123
    %p126 = scmp.ne.s32.totalorder %s111, %s125
    %p127 = scmp.eq.s32.totalorder %s17, 0
    %p128 = por %p126, %p127
    %s129 = ssub.s32 %s11, %s18
    %p130 = scmp.eq.s32.totalorder %s129, 0
    %s132 = sadd.s32 %s131, 1
    %s133 = scalar_select %p130, %s131, %s132
    %p136 = pneg %p130
    %p137 = scmp.eq.s32.totalorder %s11, 1
    %p138 = por %p136, %p137
    %p139 = scmp.ne.s32.totalorder %s131, %s134
    %p140 = scmp.eq.s32.totalorder %s11, 0
    %p141 = por %p139, %p140
    %p142 = scmp.ne.s32.totalorder %s131, %s134
    %p143 = scmp.eq.s32.totalorder %s16, 1
    %p144 = por %p142, %p143
    %p145 = scmp.ne.s32.totalorder %s134, %s135
    %p146 = scmp.eq.s32.totalorder %s16, 0
    %p147 = por %p145, %p146
    %p148 = scmp.ne.s32.totalorder %s134, %s135
    %p149 = scmp.eq.s32.totalorder %s17, 1
    %p150 = por %p148, %p149
    %p152 = scmp.ne.s32.totalorder %s135, %s151
    %p153 = scmp.eq.s32.totalorder %s17, 0
    %p154 = por %p152, %p153
    %p155 = scmp.le.s32.totalorder 1, %s11
    %p156 = scmp.lt.s32.totalorder %s11, 3
    %p157 = pnand %p155, %p156
    %p158 = pneg %p157
    // Predicated region
    $region9: #{collapsing_transformer_forward.10} parent=5 // pred_check
      _
    $region10: #{collapsing_transformer_forward.10} parent=5 // pred_check_branch
      %160 = sbr.rel (%p157) target = $region12
    $region11: #{collapsing_transformer_forward.10} parent=5 // pred_region
      %s161 = ssub.s32 %s11, 1
      // Predicated region
      $region13: #{collapsing_transformer_forward.10} parent=11 // pred_check
        %p162 = pneg %p58
      $region14: #{collapsing_transformer_forward.10} parent=11 // pred_check_branch
        %164 = sbr.rel (%p162) target = $region16
      $region15: #{collapsing_transformer_forward.10} parent=11 // pred_region
        _
      $region16: #{collapsing_transformer_forward.10} parent=11 // pred_fallthru
        _
      // Predicated region
      $region17: #{collapsing_transformer_forward.10} parent=11 // pred_check
        %p165 = pneg %p79
      $region18: #{collapsing_transformer_forward.10} parent=11 // pred_check_branch
        %167 = sbr.rel (%p165) target = $region20
      $region19: #{collapsing_transformer_forward.10} parent=11 // pred_region
        _
      $region20: #{collapsing_transformer_forward.10} parent=11 // pred_fallthru
        _
      // Predicated region
      $region21: #{collapsing_transformer_forward.10} parent=11 // pred_check
        %p168 = pneg %p100
      $region22: #{collapsing_transformer_forward.10} parent=11 // pred_check_branch
        %170 = sbr.rel (%p168) target = $region24
      $region23: #{collapsing_transformer_forward.10} parent=11 // pred_region
        _
      $region24: #{collapsing_transformer_forward.10} parent=11 // pred_fallthru
        _
      // Predicated region
      $region25: #{collapsing_transformer_forward.10} parent=11 // pred_check
        %p171 = pneg %p121
      $region26: #{collapsing_transformer_forward.10} parent=11 // pred_check_branch
        %173 = sbr.rel (%p171) target = $region28
      $region27: #{collapsing_transformer_forward.10} parent=11 // pred_region
        _
      $region28: #{collapsing_transformer_forward.10} parent=11 // pred_fallthru
        _
    $region12: #{collapsing_transformer_forward.10} parent=5 // pred_fallthru
      _
    %p174 = scmp.lt.s32.totalorder %s11, 2
    // Predicated region
    $region29: #{collapsing_transformer_forward.10} parent=5 // pred_check
      %p175 = pneg %p174
    $region30: #{collapsing_transformer_forward.10} parent=5 // pred_check_branch
      %177 = sbr.rel (%p175) target = $region32
    $region31: #{collapsing_transformer_forward.10} parent=5 // pred_region
      // Predicated region
      $region33: #{collapsing_transformer_forward.10} parent=31 // pred_check
        %p178 = pneg %p31
      $region34: #{collapsing_transformer_forward.10} parent=31 // pred_check_branch
        %180 = sbr.rel (%p178) target = $region36
      $region35: #{collapsing_transformer_forward.10} parent=31 // pred_region
        %p181 = scmp.lt.s32.totalorder %s11, 1
        %s182 = scalar_select %p181, %s11, 1
        %s183 = smul.addr %s182, 8
        %s184 = scalar_lea.vmem %s0, %s183
      $region36: #{collapsing_transformer_forward.10} parent=31 // pred_fallthru
        _
    $region32: #{collapsing_transformer_forward.10} parent=5 // pred_fallthru
      _
    %p185 = scmp.le.s32.totalorder 1, %s11
    %p186 = scmp.lt.s32.totalorder %s11, 3
    %p187 = pnand %p185, %p186
    %p188 = pneg %p187
    // Predicated region
    $region37: #{collapsing_transformer_forward.10} parent=5 // pred_check
      _
    $region38: #{collapsing_transformer_forward.10} parent=5 // pred_check_branch
      %190 = sbr.rel (%p187) target = $region40
    $region39: #{collapsing_transformer_forward.10} parent=5 // pred_region
      %s191 = ssub.s32 %s11, 1
      %p192 = scmp.lt.s32.totalorder %s16, 1
      %s193 = scalar_select %p192, %s16, 1
      %s194 = smul.addr %s193, 8
      %s195 = scalar_lea.vmem %s0, %s194
      %p196 = pneg %p37
      %p197 = pneg %p34
      %p198 = pneg %p58
      %p199 = pneg %p55
      %p200 = pneg %p79
      %p201 = pneg %p76
      %p202 = pneg %p100
      %p203 = pneg %p97
      %p204 = pneg %p121
      %p205 = pneg %p118
      %p206 = pneg %p147
      %p207 = pneg %p144
      %p208 = scmp.lt.s32.totalorder %s16, 1
      %s209 = scalar_select %p208, %s16, 1
      %s210 = smul.addr %s209, 8
      %s211 = scalar_lea.vmem %s5, %s210
      %p212 = scmp.lt.s32.totalorder %s16, 1
      %s213 = scalar_select %p212, %s16, 1
      %s214 = smul.addr %s213, 8
      %s215 = scalar_lea.vmem %s0, %s214
      %p216 = scmp.lt.s32.totalorder %s16, 1
      %s217 = scalar_select %p216, %s16, 1
      %s218 = smul.addr %s217, 8
      %s219 = scalar_lea.vmem %s5, %s218
      %v221 = vld [vmem:[%s215] sm:$0xff]
      %vm222 = vcmask 261120
      %v223 = vsel %vm222, %v221, 0.0
      %224 = vadd.xlane.f32.xlu0 %v223
      %v225 = vpop.xlane.xlu0 %224
      %v226 = vrcp.pop 32.0
      %v227 = vmul.f32 %v225, %v226
      %v228 = vsub.f32 %v221, %v227
      %v229 = vmul.f32 %v228, %v228
      %v230 = vsel %vm222, %v229, 0.0
      %231 = vadd.xlane.f32.xlu0 %v230
      %v232 = vpop.xlane.xlu0 %231
      %v233 = vmul.f32 %v232, %v226
      %v234 = vadd.f32 %v233, 1e-05
      %v235 = vrsqrt.pop %v234
      %v236 = vmul.f32 %v228, %v235
      %v237 = vld [vmem:[%s1] sm:$0x1]
      %v239 = vlaneseq
      %v240 = vshrl.u32 %v239, 7
      %v241 = vsub.s32 0, %v240
      %v242 = vrot.slane %v237, %v241
      %v244 = vmul.f32 %v236, %v242
      %v245 = vld [vmem:[%s2] sm:$0x1]
      %v247 = vlaneseq
      %v248 = vshrl.u32 %v247, 7
      %v249 = vsub.s32 0, %v248
      %v250 = vrot.slane %v245, %v249
      %v252 = vadd.f32 %v244, %v250
      %v253 = vpack.c.bf16 %v252, %v252
      %v254 = vld [vmem:[%s3] sm:$0xf]
      %v255 = vld [vmem:[%s3 + $0x4] sm:$0xf]
      %v256 = vld [vmem:[%s3 + $0x8] sm:$0xf]
      %v257 = vld [vmem:[%s3 + $0xc] sm:$0xf]
      %v258 = vld [vmem:[%s4] sm:$0x1]
      %v260 = vlaneseq
      %v261 = vshrl.u32 %v260, 7
      %v262 = vsub.s32 0, %v261
      %v263 = vrot.slane %v258, %v262
      %v269 = vunpack.c.l.b16 %v254
      %v270 = vunpack.c.l.b16 %v255
      %v271 = vunpack.c.l.b16 %v256
      %v272 = vunpack.c.l.b16 %v257
      %v273 = vpack.c.b16 %v270, %v269
      %v274 = vpack.c.b16 %v272, %v271
      %v278 = vsel %vm222, %v253, 0
      %280 = vmatprep.subr.bf16.mxu0 0
      %281 = vmatpush1.bf16.msra.mxu0 %v273
      %282 = vmatprep.subr.bf16.mxu0 0
      %283 = vmatpush1.bf16.msra.mxu0 %v274
      %284 = vmatprep.subr.bf16.mxu0 0
      %285 = vmatpush1.bf16.msra.mxu0 0
      %286 = vmatprep.subr.bf16.mxu0 0
      %287 = vmatpush1.bf16.msra.mxu0 0
      %288 = vmatprep.subr.bf16.mxu0 0
      %289 = vmatpush1.bf16.msra.mxu0 0
      %290 = vmatprep.subr.bf16.mxu0 0
      %291 = vmatpush1.bf16.msra.mxu0 0
      %292 = vmatprep.subr.bf16.mxu0 0
      %293 = vmatpush1.bf16.msra.mxu0 0
      %294 = vmatprep.subr.bf16.mxu0 0
      %295 = vmatpush1.bf16.msra.mxu0 0
      %296 = vmatprep.subr.bf16.mxu0 0
      %297 = vmatpush1.bf16.msra.mxu0 0
      %298 = vmatprep.subr.bf16.mxu0 0
      %299 = vmatpush1.bf16.msra.mxu0 0
      %300 = vmatprep.subr.bf16.mxu0 0
      %301 = vmatpush1.bf16.msra.mxu0 0
      %302 = vmatprep.subr.bf16.mxu0 0
      %303 = vmatpush1.bf16.msra.mxu0 0
      %304 = vmatprep.subr.bf16.mxu0 0
      %305 = vmatpush1.bf16.msra.mxu0 0
      %306 = vmatprep.subr.bf16.mxu0 0
      %307 = vmatpush1.bf16.msra.mxu0 0
      %308 = vmatprep.subr.bf16.mxu0 0
      %309 = vmatpush1.bf16.msra.mxu0 0
      %310 = vmatprep.subr.bf16.mxu0 0
      %311 = vmatpush1.bf16.msra.mxu0 0
      %312 = vmatprep.mubr.bf16.mxu0 0
      %313 = vmatmul.mubr.bf16.gmra.mrb[0].mxu0 %v278
      %v314 = vpop.f32.mrb[0].mxu0
      %v315 = vadd.f32 %v263, %v314
      %v316 = vpop.f32.mrb[0].mxu0
      %v317 = vpop.f32.mrb[0].mxu0
      %v318 = vpop.f32.mrb[0].mxu0
      %319 = vdwg.mxu0
      %320 = vst.msk [vmem:[%s219] sm:$0xff] %vm222, %v315
      %p321 = scmp.lt.s32.totalorder %s16, 1
      %s322 = scalar_select %p321, %s16, 1
      %s323 = smul.addr %s322, 8
      %s324 = scalar_lea.vmem %s5, %s323
      // Predicated region
      $region41: #{collapsing_transformer_forward.10} parent=39 // pred_check
        %p325 = pneg %p144
      $region42: #{collapsing_transformer_forward.10} parent=39 // pred_check_branch
        %327 = sbr.rel (%p325) target = $region44
      $region43: #{collapsing_transformer_forward.10} parent=39 // pred_region
        _
      $region44: #{collapsing_transformer_forward.10} parent=39 // pred_fallthru
        _
    $region40: #{collapsing_transformer_forward.10} parent=5 // pred_fallthru
      _
    %p328 = scmp.le.s32.totalorder 2, %s11
    // Predicated region
    $region45: #{collapsing_transformer_forward.10} parent=5 // pred_check
      %p329 = pneg %p328
    $region46: #{collapsing_transformer_forward.10} parent=5 // pred_check_branch
      %331 = sbr.rel (%p329) target = $region48
    $region47: #{collapsing_transformer_forward.10} parent=5 // pred_region
      %s332 = ssub.s32 %s11, 2
      // Predicated region
      $region49: #{collapsing_transformer_forward.10} parent=47 // pred_check
        %p333 = pneg %p150
      $region50: #{collapsing_transformer_forward.10} parent=47 // pred_check_branch
        %335 = sbr.rel (%p333) target = $region52
      $region51: #{collapsing_transformer_forward.10} parent=47 // pred_region
        %p336 = scmp.lt.s32.totalorder %s17, 1
        %s337 = scalar_select %p336, %s17, 1
        %s338 = smul.addr %s337, 8
        %s339 = scalar_lea.vmem %s5, %s338
      $region52: #{collapsing_transformer_forward.10} parent=47 // pred_fallthru
        _
    $region48: #{collapsing_transformer_forward.10} parent=5 // pred_fallthru
      _
  $region6: #{collapsing_transformer_forward.10} parent=0 // loop_footer
    %s15 = sadd.s32 1, %s11
  $region7: #{collapsing_transformer_forward.10} parent=0 // loop_footer_branch
    %10 = sbr.rel target = $region3
  $region8: #{collapsing_transformer_forward.10} parent=0 // loop_exit
    _

// kernel: collapsing_transformer_forward.7
$region0: #{collapsing_transformer_forward.7}
  #allocation0 [shape = 'u32[]', space=smem, size = 0x4, offset = 0x4, fixed_abs, tag = 'smem constant byte address 0x4 - core index']
  #allocation1 [shape = 'u32[144,128]{1,0:T(1,128)}', space=vmem, size = 0x12000, scoped, tag = 'internal scratch']
  %s0 = inlined_call_operand.vmem [shape: f32[16,32], index: 0, kind: input, shape index: {}]
  %s1 = inlined_call_operand.vmem [shape: f32[1,32], index: 1, kind: input, shape index: {}]
  %s2 = inlined_call_operand.vmem [shape: bf16[32,64], index: 2, kind: input, shape index: {}]
  %s3 = inlined_call_operand.vmem [shape: f32[1,64], index: 3, kind: input, shape index: {}]
  %s4 = inlined_call_operand.vmem [shape: bf16[32,32], index: 4, kind: input, shape index: {}]
  %s5 = inlined_call_operand.vmem [shape: f32[1,32], index: 5, kind: input, shape index: {}]
  %s6 = inlined_call_operand.vmem [shape: f32[16,32], index: 6, kind: output, shape index: {}]
  %s7 = sld [smem:[#allocation0]]
  $region57: #{collapsing_transformer_forward.7} parent=0
    _
  %s9 = ssub.s32 1, %s7
  %s10 = scalar_select 0, %s9, %s7
  loop: start=0, step=1, limit=4
  $region2: #{collapsing_transformer_forward.7} parent=0 // loop_pre_header
    _
  $region3: #{collapsing_transformer_forward.7} parent=0 // loop_header
    %s12 = sphi 0, %s16
    %p13 = scmp.ge.s32.totalorder %s12, 4
    %s22 = sphi 0, %s24
    %s25 = sphi 0, %s22
    %s26 = sphi 0, %s25
    %s42 = sphi 0, %s26
    %s46 = sphi 0, %s46
    %s48 = sphi 0, %s46
    %s49 = sphi 0, %s48
    %s63 = sphi 0, %s49
    %s67 = sphi 0, %s67
    %s69 = sphi 0, %s67
    %s70 = sphi 0, %s69
    %s84 = sphi 0, %s70
    %s88 = sphi 0, %s88
    %s90 = sphi 0, %s88
    %s91 = sphi 0, %s90
    %s105 = sphi 0, %s91
    %s109 = sphi 0, %s109
    %s111 = sphi 0, %s109
    %s112 = sphi 0, %s111
    %s126 = sphi 0, %s112
    %s130 = sphi 0, %s130
    %s132 = sphi 0, %s130
    %s133 = sphi 0, %s132
    %s147 = sphi 0, %s133
    %s153 = sphi 0, %s155
    %s156 = sphi 0, %s153
    %s157 = sphi 0, %s156
    %s173 = sphi 0, %s157
  $region4: #{collapsing_transformer_forward.7} parent=0 // loop_header_branch
    %15 = sbr.rel (%p13) target = $region8
  $region5: #{collapsing_transformer_forward.7} parent=0 // loop_body
    %s17 = ssub.s32 %s12, 1
    %s18 = ssub.s32 %s12, 2
    %s19 = sadd.s32 %s12, 1
    %s20 = ssub.s32 %s12, %s19
    %p21 = scmp.eq.s32.totalorder %s20, 0
    %s23 = sadd.s32 %s22, 1
    %s24 = scalar_select %p21, %s22, %s23
    %p27 = pneg %p21
    %p28 = scmp.eq.s32.totalorder %s12, 1
    %p29 = por %p27, %p28
    %p30 = scmp.ne.s32.totalorder %s22, %s25
    %p31 = scmp.eq.s32.totalorder %s12, 0
    %p32 = por %p30, %p31
    %p33 = scmp.ne.s32.totalorder %s22, %s25
    %p34 = scmp.eq.s32.totalorder %s17, 1
    %p35 = por %p33, %p34
    %p36 = scmp.ne.s32.totalorder %s25, %s26
    %p37 = scmp.eq.s32.totalorder %s17, 0
    %p38 = por %p36, %p37
    %p39 = scmp.ne.s32.totalorder %s25, %s26
    %p40 = scmp.eq.s32.totalorder %s18, 1
    %p41 = por %p39, %p40
    %p43 = scmp.ne.s32.totalorder %s26, %s42
    %p44 = scmp.eq.s32.totalorder %s18, 0
    %p45 = por %p43, %p44
    %s47 = sadd.s32 %s46, 1
    %p50 = scmp.eq.s32.totalorder %s12, 1
    %p51 = scmp.ne.s32.totalorder %s46, %s48
    %p52 = scmp.eq.s32.totalorder %s12, 0
    %p53 = por %p51, %p52
    %p54 = scmp.ne.s32.totalorder %s46, %s48
    %p55 = scmp.eq.s32.totalorder %s17, 1
    %p56 = por %p54, %p55
    %p57 = scmp.ne.s32.totalorder %s48, %s49
    %p58 = scmp.eq.s32.totalorder %s17, 0
    %p59 = por %p57, %p58
    %p60 = scmp.ne.s32.totalorder %s48, %s49
    %p61 = scmp.eq.s32.totalorder %s18, 1
    %p62 = por %p60, %p61
    %p64 = scmp.ne.s32.totalorder %s49, %s63
    %p65 = scmp.eq.s32.totalorder %s18, 0
    %p66 = por %p64, %p65
    %s68 = sadd.s32 %s67, 1
    %p71 = scmp.eq.s32.totalorder %s12, 1
    %p72 = scmp.ne.s32.totalorder %s67, %s69
    %p73 = scmp.eq.s32.totalorder %s12, 0
    %p74 = por %p72, %p73
    %p75 = scmp.ne.s32.totalorder %s67, %s69
    %p76 = scmp.eq.s32.totalorder %s17, 1
    %p77 = por %p75, %p76
    %p78 = scmp.ne.s32.totalorder %s69, %s70
    %p79 = scmp.eq.s32.totalorder %s17, 0
    %p80 = por %p78, %p79
    %p81 = scmp.ne.s32.totalorder %s69, %s70
    %p82 = scmp.eq.s32.totalorder %s18, 1
    %p83 = por %p81, %p82
    %p85 = scmp.ne.s32.totalorder %s70, %s84
    %p86 = scmp.eq.s32.totalorder %s18, 0
    %p87 = por %p85, %p86
    %s89 = sadd.s32 %s88, 1
    %p92 = scmp.eq.s32.totalorder %s12, 1
    %p93 = scmp.ne.s32.totalorder %s88, %s90
    %p94 = scmp.eq.s32.totalorder %s12, 0
    %p95 = por %p93, %p94
    %p96 = scmp.ne.s32.totalorder %s88, %s90
    %p97 = scmp.eq.s32.totalorder %s17, 1
    %p98 = por %p96, %p97
    %p99 = scmp.ne.s32.totalorder %s90, %s91
    %p100 = scmp.eq.s32.totalorder %s17, 0
    %p101 = por %p99, %p100
    %p102 = scmp.ne.s32.totalorder %s90, %s91
    %p103 = scmp.eq.s32.totalorder %s18, 1
    %p104 = por %p102, %p103
    %p106 = scmp.ne.s32.totalorder %s91, %s105
    %p107 = scmp.eq.s32.totalorder %s18, 0
    %p108 = por %p106, %p107
    %s110 = sadd.s32 %s109, 1
    %p113 = scmp.eq.s32.totalorder %s12, 1
    %p114 = scmp.ne.s32.totalorder %s109, %s111
    %p115 = scmp.eq.s32.totalorder %s12, 0
    %p116 = por %p114, %p115
    %p117 = scmp.ne.s32.totalorder %s109, %s111
    %p118 = scmp.eq.s32.totalorder %s17, 1
    %p119 = por %p117, %p118
    %p120 = scmp.ne.s32.totalorder %s111, %s112
    %p121 = scmp.eq.s32.totalorder %s17, 0
    %p122 = por %p120, %p121
    %p123 = scmp.ne.s32.totalorder %s111, %s112
    %p124 = scmp.eq.s32.totalorder %s18, 1
    %p125 = por %p123, %p124
    %p127 = scmp.ne.s32.totalorder %s112, %s126
    %p128 = scmp.eq.s32.totalorder %s18, 0
    %p129 = por %p127, %p128
    %s131 = sadd.s32 %s130, 1
    %p134 = scmp.eq.s32.totalorder %s12, 1
    %p135 = scmp.ne.s32.totalorder %s130, %s132
    %p136 = scmp.eq.s32.totalorder %s12, 0
    %p137 = por %p135, %p136
    %p138 = scmp.ne.s32.totalorder %s130, %s132
    %p139 = scmp.eq.s32.totalorder %s17, 1
    %p140 = por %p138, %p139
    %p141 = scmp.ne.s32.totalorder %s132, %s133
    %p142 = scmp.eq.s32.totalorder %s17, 0
    %p143 = por %p141, %p142
    %p144 = scmp.ne.s32.totalorder %s132, %s133
    %p145 = scmp.eq.s32.totalorder %s18, 1
    %p146 = por %p144, %p145
    %p148 = scmp.ne.s32.totalorder %s133, %s147
    %p149 = scmp.eq.s32.totalorder %s18, 0
    %p150 = por %p148, %p149
    %s151 = ssub.s32 %s12, %s19
    %p152 = scmp.eq.s32.totalorder %s151, 0
    %s154 = sadd.s32 %s153, 1
    %s155 = scalar_select %p152, %s153, %s154
    %p158 = pneg %p152
    %p159 = scmp.eq.s32.totalorder %s12, 1
    %p160 = por %p158, %p159
    %p161 = scmp.ne.s32.totalorder %s153, %s156
    %p162 = scmp.eq.s32.totalorder %s12, 0
    %p163 = por %p161, %p162
    %p164 = scmp.ne.s32.totalorder %s153, %s156
    %p165 = scmp.eq.s32.totalorder %s17, 1
    %p166 = por %p164, %p165
    %p167 = scmp.ne.s32.totalorder %s156, %s157
    %p168 = scmp.eq.s32.totalorder %s17, 0
    %p169 = por %p167, %p168
    %p170 = scmp.ne.s32.totalorder %s156, %s157
    %p171 = scmp.eq.s32.totalorder %s18, 1
    %p172 = por %p170, %p171
    %p174 = scmp.ne.s32.totalorder %s157, %s173
    %p175 = scmp.eq.s32.totalorder %s18, 0
    %p176 = por %p174, %p175
    %p177 = scmp.le.s32.totalorder 1, %s12
    %p178 = scmp.lt.s32.totalorder %s12, 3
    %p179 = pnand %p177, %p178
    %p180 = pneg %p179
    // Predicated region
    $region9: #{collapsing_transformer_forward.7} parent=5 // pred_check
      _
    $region10: #{collapsing_transformer_forward.7} parent=5 // pred_check_branch
      %182 = sbr.rel (%p179) target = $region12
    $region11: #{collapsing_transformer_forward.7} parent=5 // pred_region
      %s183 = ssub.s32 %s12, 1
      // Predicated region
      $region13: #{collapsing_transformer_forward.7} parent=11 // pred_check
        %p184 = pneg %p59
      $region14: #{collapsing_transformer_forward.7} parent=11 // pred_check_branch
        %186 = sbr.rel (%p184) target = $region16
      $region15: #{collapsing_transformer_forward.7} parent=11 // pred_region
        _
      $region16: #{collapsing_transformer_forward.7} parent=11 // pred_fallthru
        _
      // Predicated region
      $region17: #{collapsing_transformer_forward.7} parent=11 // pred_check
        %p187 = pneg %p80
      $region18: #{collapsing_transformer_forward.7} parent=11 // pred_check_branch
        %189 = sbr.rel (%p187) target = $region20
      $region19: #{collapsing_transformer_forward.7} parent=11 // pred_region
        _
      $region20: #{collapsing_transformer_forward.7} parent=11 // pred_fallthru
        _
      // Predicated region
      $region21: #{collapsing_transformer_forward.7} parent=11 // pred_check
        %p190 = pneg %p101
      $region22: #{collapsing_transformer_forward.7} parent=11 // pred_check_branch
        %192 = sbr.rel (%p190) target = $region24
      $region23: #{collapsing_transformer_forward.7} parent=11 // pred_region
        _
      $region24: #{collapsing_transformer_forward.7} parent=11 // pred_fallthru
        _
      // Predicated region
      $region25: #{collapsing_transformer_forward.7} parent=11 // pred_check
        %p193 = pneg %p122
      $region26: #{collapsing_transformer_forward.7} parent=11 // pred_check_branch
        %195 = sbr.rel (%p193) target = $region28
      $region27: #{collapsing_transformer_forward.7} parent=11 // pred_region
        _
      $region28: #{collapsing_transformer_forward.7} parent=11 // pred_fallthru
        _
      // Predicated region
      $region29: #{collapsing_transformer_forward.7} parent=11 // pred_check
        %p196 = pneg %p143
      $region30: #{collapsing_transformer_forward.7} parent=11 // pred_check_branch
        %198 = sbr.rel (%p196) target = $region32
      $region31: #{collapsing_transformer_forward.7} parent=11 // pred_region
        _
      $region32: #{collapsing_transformer_forward.7} parent=11 // pred_fallthru
        _
    $region12: #{collapsing_transformer_forward.7} parent=5 // pred_fallthru
      _
    %p199 = scmp.lt.s32.totalorder %s12, 2
    // Predicated region
    $region33: #{collapsing_transformer_forward.7} parent=5 // pred_check
      %p200 = pneg %p199
    $region34: #{collapsing_transformer_forward.7} parent=5 // pred_check_branch
      %202 = sbr.rel (%p200) target = $region36
    $region35: #{collapsing_transformer_forward.7} parent=5 // pred_region
      // Predicated region
      $region37: #{collapsing_transformer_forward.7} parent=35 // pred_check
        %p203 = pneg %p32
      $region38: #{collapsing_transformer_forward.7} parent=35 // pred_check_branch
        %205 = sbr.rel (%p203) target = $region40
      $region39: #{collapsing_transformer_forward.7} parent=35 // pred_region
        %p206 = scmp.lt.s32.totalorder %s12, 1
        %s207 = scalar_select %p206, %s12, 1
        %s208 = smul.addr %s207, 8
        %s209 = scalar_lea.vmem %s0, %s208
      $region40: #{collapsing_transformer_forward.7} parent=35 // pred_fallthru
        _
    $region36: #{collapsing_transformer_forward.7} parent=5 // pred_fallthru
      _
    %p210 = scmp.le.s32.totalorder 1, %s12
    %p211 = scmp.lt.s32.totalorder %s12, 3
    %p212 = pnand %p210, %p211
    %p213 = pneg %p212
    // Predicated region
    $region41: #{collapsing_transformer_forward.7} parent=5 // pred_check
      _
    $region42: #{collapsing_transformer_forward.7} parent=5 // pred_check_branch
      %215 = sbr.rel (%p212) target = $region44
    $region43: #{collapsing_transformer_forward.7} parent=5 // pred_region
      %s216 = ssub.s32 %s12, 1
      %p217 = scmp.lt.s32.totalorder %s17, 1
      %s218 = scalar_select %p217, %s17, 1
      %s219 = smul.addr %s218, 8
      %s220 = scalar_lea.vmem %s0, %s219
      %p221 = pneg %p38
      %p222 = pneg %p35
      %p223 = pneg %p59
      %p224 = pneg %p56
      %p225 = pneg %p80
      %p226 = pneg %p77
      %p227 = pneg %p101
      %p228 = pneg %p98
      %p229 = pneg %p122
      %p230 = pneg %p119
      %p231 = pneg %p143
      %p232 = pneg %p140
      %p233 = pneg %p169
      %p234 = pneg %p166
      %p235 = scmp.lt.s32.totalorder %s17, 1
      %s236 = scalar_select %p235, %s17, 1
      %s237 = smul.addr %s236, 8
      %s238 = scalar_lea.vmem %s6, %s237
      %p239 = scmp.lt.s32.totalorder %s17, 1
      %s240 = scalar_select %p239, %s17, 1
      %s241 = smul.addr %s240, 8
      %s242 = scalar_lea.vmem %s0, %s241
      %p243 = scmp.lt.s32.totalorder %s17, 1
      %s244 = scalar_select %p243, %s17, 1
      %s245 = smul.addr %s244, 8
      %s246 = scalar_lea.vmem %s6, %s245
      %v248 = vld [vmem:[%s242] sm:$0xff]
      %v249 = vmul.f32 %v248, %v248
      %vm250 = vcmask 261120
      %v251 = vsel %vm250, %v249, 0.0
      %252 = vadd.xlane.f32.xlu0 %v251
      %v253 = vpop.xlane.xlu0 %252
      %v254 = vrsqrt.pop %v253
      %v255 = vmul.f32 %v253, %v254
      %vm256 = vcmp.eq.f32.partialorder %v253, inf
      %v257 = vsel %vm256, %v253, %v255
      %vm258 = vcmp.eq.f32.partialorder %v253, 0.0
      %v259 = vand.u32 %v253, 2147483648
      %v260 = vsel %vm258, %v259, %v257
      %v261 = vmul.f32 %v260, 0.17677669
      %v262 = vmax.f32 %v261, 1e-08
      %v263 = vrcp.pop %v262
      %v264 = vmul.f32 %v248, %v263
      %v265 = vld [vmem:[%s1] sm:$0x1]
      %v267 = vlaneseq
      %v268 = vshrl.u32 %v267, 7
      %v269 = vsub.s32 0, %v268
      %v270 = vrot.slane %v265, %v269
      %v272 = vmul.f32 %v264, %v270
      %v273 = vpack.c.bf16 %v272, %v272
      %v274 = vld [vmem:[%s2] sm:$0xf]
      %v275 = vld [vmem:[%s2 + $0x4] sm:$0xf]
      %v276 = vld [vmem:[%s2 + $0x8] sm:$0xf]
      %v277 = vld [vmem:[%s2 + $0xc] sm:$0xf]
      %v278 = vld [vmem:[%s3] sm:$0x1]
      %v280 = vlaneseq
      %v281 = vshrl.u32 %v280, 7
      %v282 = vsub.s32 0, %v281
      %v283 = vrot.slane %v278, %v282
      %v289 = vunpack.c.l.b16 %v274
      %v290 = vunpack.c.l.b16 %v275
      %v291 = vunpack.c.l.b16 %v276
      %v292 = vunpack.c.l.b16 %v277
      %v293 = vpack.c.b16 %v290, %v289
      %v294 = vpack.c.b16 %v292, %v291
      %v298 = vsel %vm250, %v273, 0
      %300 = vmatprep.subr.bf16.mxu0 0
      %301 = vmatpush1.bf16.msra.mxu0 %v293
      %302 = vmatprep.subr.bf16.mxu0 0
      %303 = vmatpush1.bf16.msra.mxu0 %v294
      %304 = vmatprep.subr.bf16.mxu0 0
      %305 = vmatpush1.bf16.msra.mxu0 0
      %306 = vmatprep.subr.bf16.mxu0 0
      %307 = vmatpush1.bf16.msra.mxu0 0
      %308 = vmatprep.subr.bf16.mxu0 0
      %309 = vmatpush1.bf16.msra.mxu0 0
      %310 = vmatprep.subr.bf16.mxu0 0
      %311 = vmatpush1.bf16.msra.mxu0 0
      %312 = vmatprep.subr.bf16.mxu0 0
      %313 = vmatpush1.bf16.msra.mxu0 0
      %314 = vmatprep.subr.bf16.mxu0 0
      %315 = vmatpush1.bf16.msra.mxu0 0
      %316 = vmatprep.subr.bf16.mxu0 0
      %317 = vmatpush1.bf16.msra.mxu0 0
      %318 = vmatprep.subr.bf16.mxu0 0
      %319 = vmatpush1.bf16.msra.mxu0 0
      %320 = vmatprep.subr.bf16.mxu0 0
      %321 = vmatpush1.bf16.msra.mxu0 0
      %322 = vmatprep.subr.bf16.mxu0 0
      %323 = vmatpush1.bf16.msra.mxu0 0
      %324 = vmatprep.subr.bf16.mxu0 0
      %325 = vmatpush1.bf16.msra.mxu0 0
      %326 = vmatprep.subr.bf16.mxu0 0
      %327 = vmatpush1.bf16.msra.mxu0 0
      %328 = vmatprep.subr.bf16.mxu0 0
      %329 = vmatpush1.bf16.msra.mxu0 0
      %330 = vmatprep.subr.bf16.mxu0 0
      %331 = vmatpush1.bf16.msra.mxu0 0
      %332 = vmatprep.mubr.bf16.mxu0 0
      %333 = vmatmul.mubr.bf16.gmra.mrb[0].mxu0 %v298
      %v334 = vpop.f32.mrb[0].mxu0
      %v335 = vadd.f32 %v283, %v334
      %v336 = vpop.f32.mrb[0].mxu0
      %v337 = vpop.f32.mrb[0].mxu0
      %v338 = vpop.f32.mrb[0].mxu0
      %339 = vdwg.mxu0
      %v340 = vmul.f32 %v335, %v335
      %v341 = vmul.f32 %v335, %v340
      %v342 = vmul.f32 %v341, 0.044715
      %v343 = vadd.f32 %v335, %v342
      %v344 = vmul.f32 %v343, 0.7978846
      %v345 = vtanh.pop %v344
      %v346 = vadd.f32 %v345, 1.0
      %v347 = vmul.f32 %v346, 0.5
      %v348 = vmul.f32 %v335, %v347
      %350 = vrot.lane.b32.xlu0 %v348, 96
      %v351 = vpop.permute.xlu0 %350
      %v353 = vmul.f32 %v335, %v351
      %v354 = vpack.c.bf16 %v353, %v353
      %v355 = vld [vmem:[%s4] sm:$0xf]
      %v356 = vld [vmem:[%s4 + $0x4] sm:$0xf]
      %v357 = vld [vmem:[%s4 + $0x8] sm:$0xf]
      %v358 = vld [vmem:[%s4 + $0xc] sm:$0xf]
      %v359 = vld [vmem:[%s5] sm:$0x1]
      %v361 = vlaneseq
      %v362 = vshrl.u32 %v361, 7
      %v363 = vsub.s32 0, %v362
      %v364 = vrot.slane %v359, %v363
      %v370 = vunpack.c.l.b16 %v355
      %v371 = vunpack.c.l.b16 %v356
      %v372 = vunpack.c.l.b16 %v357
      %v373 = vunpack.c.l.b16 %v358
      %v374 = vpack.c.b16 %v371, %v370
      %v375 = vpack.c.b16 %v373, %v372
      %v379 = vsel %vm250, %v354, 0
      %381 = vmatprep.subr.bf16.mxu0 0
      %382 = vmatpush1.bf16.msra.mxu0 %v374
      %383 = vmatprep.subr.bf16.mxu0 0
      %384 = vmatpush1.bf16.msra.mxu0 %v375
      %385 = vmatprep.subr.bf16.mxu0 0
      %386 = vmatpush1.bf16.msra.mxu0 0
      %387 = vmatprep.subr.bf16.mxu0 0
      %388 = vmatpush1.bf16.msra.mxu0 0
      %389 = vmatprep.subr.bf16.mxu0 0
      %390 = vmatpush1.bf16.msra.mxu0 0
      %391 = vmatprep.subr.bf16.mxu0 0
      %392 = vmatpush1.bf16.msra.mxu0 0
      %393 = vmatprep.subr.bf16.mxu0 0
      %394 = vmatpush1.bf16.msra.mxu0 0
      %395 = vmatprep.subr.bf16.mxu0 0
      %396 = vmatpush1.bf16.msra.mxu0 0
      %397 = vmatprep.subr.bf16.mxu0 0
      %398 = vmatpush1.bf16.msra.mxu0 0
      %399 = vmatprep.subr.bf16.mxu0 0
      %400 = vmatpush1.bf16.msra.mxu0 0
      %401 = vmatprep.subr.bf16.mxu0 0
      %402 = vmatpush1.bf16.msra.mxu0 0
      %403 = vmatprep.subr.bf16.mxu0 0
      %404 = vmatpush1.bf16.msra.mxu0 0
      %405 = vmatprep.subr.bf16.mxu0 0
      %406 = vmatpush1.bf16.msra.mxu0 0
      %407 = vmatprep.subr.bf16.mxu0 0
      %408 = vmatpush1.bf16.msra.mxu0 0
      %409 = vmatprep.subr.bf16.mxu0 0
      %410 = vmatpush1.bf16.msra.mxu0 0
      %411 = vmatprep.subr.bf16.mxu0 0
      %412 = vmatpush1.bf16.msra.mxu0 0
      %413 = vmatprep.mubr.bf16.mxu0 0
      %414 = vmatmul.mubr.bf16.gmra.mrb[0].mxu0 %v379
      %v415 = vpop.f32.mrb[0].mxu0
      %v416 = vadd.f32 %v364, %v415
      %v417 = vpop.f32.mrb[0].mxu0
      %v418 = vpop.f32.mrb[0].mxu0
      %v419 = vpop.f32.mrb[0].mxu0
      %420 = vdwg.mxu0
      %v421 = vadd.f32 %v416, %v248
      %422 = vst.msk [vmem:[%s246] sm:$0xff] %vm250, %v421
      %p423 = scmp.lt.s32.totalorder %s17, 1
      %s424 = scalar_select %p423, %s17, 1
      %s425 = smul.addr %s424, 8
      %s426 = scalar_lea.vmem %s6, %s425
      // Predicated region
      $region45: #{collapsing_transformer_forward.7} parent=43 // pred_check
        %p427 = pneg %p166
      $region46: #{collapsing_transformer_forward.7} parent=43 // pred_check_branch
        %429 = sbr.rel (%p427) target = $region48
      $region47: #{collapsing_transformer_forward.7} parent=43 // pred_region
        _
      $region48: #{collapsing_transformer_forward.7} parent=43 // pred_fallthru
        _
    $region44: #{collapsing_transformer_forward.7} parent=5 // pred_fallthru
      _
    %p430 = scmp.le.s32.totalorder 2, %s12
    // Predicated region
    $region49: #{collapsing_transformer_forward.7} parent=5 // pred_check
      %p431 = pneg %p430
    $region50: #{collapsing_transformer_forward.7} parent=5 // pred_check_branch
      %433 = sbr.rel (%p431) target = $region52
    $region51: #{collapsing_transformer_forward.7} parent=5 // pred_region
      %s434 = ssub.s32 %s12, 2
      // Predicated region
      $region53: #{collapsing_transformer_forward.7} parent=51 // pred_check
        %p435 = pneg %p172
      $region54: #{collapsing_transformer_forward.7} parent=51 // pred_check_branch
        %437 = sbr.rel (%p435) target = $region56
      $region55: #{collapsing_transformer_forward.7} parent=51 // pred_region
        %p438 = scmp.lt.s32.totalorder %s18, 1
        %s439 = scalar_select %p438, %s18, 1
        %s440 = smul.addr %s439, 8
        %s441 = scalar_lea.vmem %s6, %s440
      $region56: #{collapsing_transformer_forward.7} parent=51 // pred_fallthru
        _
    $region52: #{collapsing_transformer_forward.7} parent=5 // pred_fallthru
      _
  $region6: #{collapsing_transformer_forward.7} parent=0 // loop_footer
    %s16 = sadd.s32 1, %s12
  $region7: #{collapsing_transformer_forward.7} parent=0 // loop_footer_branch
    %11 = sbr.rel target = $region3
  $region8: #{collapsing_transformer_forward.7} parent=0 // loop_exit
    _

// kernel: collapsing_transformer_forward.6
$region0: #{collapsing_transformer_forward.6}
  #allocation0 [shape = 'u32[]', space=smem, size = 0x4, offset = 0x4, fixed_abs, tag = 'smem constant byte address 0x4 - core index']
  #allocation1 [shape = 'u32[144,128]{1,0:T(1,128)}', space=vmem, size = 0x12000, scoped, tag = 'internal scratch']
  %s0 = inlined_call_operand.vmem [shape: f32[2,8,32], index: 0, kind: input, shape index: {}]
  %s1 = inlined_call_operand.vmem [shape: f32[1,32], index: 1, kind: input, shape index: {}]
  %s2 = inlined_call_operand.vmem [shape: bf16[32,96], index: 2, kind: input, shape index: {}]
  %s3 = inlined_call_operand.vmem [shape: f32[8,8], index: 3, kind: input, shape index: {}]
  %s4 = inlined_call_operand.vmem [shape: f32[8,8], index: 4, kind: input, shape index: {}]
  %s5 = inlined_call_operand.vmem [shape: bf16[8,8], index: 5, kind: input, shape index: {}]
  %s6 = inlined_call_operand.vmem [shape: bf16[32,32], index: 6, kind: input, shape index: {}]
  %s7 = inlined_call_operand.vmem [shape: f32[1,32], index: 7, kind: input, shape index: {}]
  %s8 = inlined_call_operand.vmem [shape: f32[2,8,32], index: 8, kind: output, shape index: {}]
  %s9 = sld [smem:[#allocation0]]
  $region65: #{collapsing_transformer_forward.6} parent=0
    _
  %s11 = ssub.s32 1, %s9
  %s12 = scalar_select 0, %s11, %s9
  loop: start=0, step=1, limit=4
  $region2: #{collapsing_transformer_forward.6} parent=0 // loop_pre_header
    _
  $region3: #{collapsing_transformer_forward.6} parent=0 // loop_header
    %s14 = sphi 0, %s18
    %p15 = scmp.ge.s32.totalorder %s14, 4
    %s24 = sphi 0, %s26
    %s27 = sphi 0, %s24
    %s28 = sphi 0, %s27
    %s44 = sphi 0, %s28
    %s48 = sphi 0, %s48
    %s50 = sphi 0, %s48
    %s51 = sphi 0, %s50
    %s65 = sphi 0, %s51
    %s69 = sphi 0, %s69
    %s71 = sphi 0, %s69
    %s72 = sphi 0, %s71
    %s86 = sphi 0, %s72
    %s90 = sphi 0, %s90
    %s92 = sphi 0, %s90
    %s93 = sphi 0, %s92
    %s107 = sphi 0, %s93
    %s111 = sphi 0, %s111
    %s113 = sphi 0, %s111
    %s114 = sphi 0, %s113
    %s128 = sphi 0, %s114
    %s132 = sphi 0, %s132
    %s134 = sphi 0, %s132
    %s135 = sphi 0, %s134
    %s149 = sphi 0, %s135
    %s153 = sphi 0, %s153
    %s155 = sphi 0, %s153
    %s156 = sphi 0, %s155
    %s170 = sphi 0, %s156
    %s174 = sphi 0, %s174
    %s176 = sphi 0, %s174
    %s177 = sphi 0, %s176
    %s191 = sphi 0, %s177
    %s197 = sphi 0, %s199
    %s200 = sphi 0, %s197
    %s201 = sphi 0, %s200
    %s217 = sphi 0, %s201
  $region4: #{collapsing_transformer_forward.6} parent=0 // loop_header_branch
    %17 = sbr.rel (%p15) target = $region8
  $region5: #{collapsing_transformer_forward.6} parent=0 // loop_body
    %s19 = ssub.s32 %s14, 1
    %s20 = ssub.s32 %s14, 2
    %s21 = sadd.s32 %s14, 1
    %s22 = ssub.s32 %s14, %s21
    %p23 = scmp.eq.s32.totalorder %s22, 0
    %s25 = sadd.s32 %s24, 1
    %s26 = scalar_select %p23, %s24, %s25
    %p29 = pneg %p23
    %p30 = scmp.eq.s32.totalorder %s14, 1
    %p31 = por %p29, %p30
    %p32 = scmp.ne.s32.totalorder %s24, %s27
    %p33 = scmp.eq.s32.totalorder %s14, 0
    %p34 = por %p32, %p33
    %p35 = scmp.ne.s32.totalorder %s24, %s27
    %p36 = scmp.eq.s32.totalorder %s19, 1
    %p37 = por %p35, %p36
    %p38 = scmp.ne.s32.totalorder %s27, %s28
    %p39 = scmp.eq.s32.totalorder %s19, 0
    %p40 = por %p38, %p39
    %p41 = scmp.ne.s32.totalorder %s27, %s28
    %p42 = scmp.eq.s32.totalorder %s20, 1
    %p43 = por %p41, %p42
    %p45 = scmp.ne.s32.totalorder %s28, %s44
    %p46 = scmp.eq.s32.totalorder %s20, 0
    %p47 = por %p45, %p46
    %s49 = sadd.s32 %s48, 1
    %p52 = scmp.eq.s32.totalorder %s14, 1
    %p53 = scmp.ne.s32.totalorder %s48, %s50
    %p54 = scmp.eq.s32.totalorder %s14, 0
    %p55 = por %p53, %p54
    %p56 = scmp.ne.s32.totalorder %s48, %s50
    %p57 = scmp.eq.s32.totalorder %s19, 1
    %p58 = por %p56, %p57
    %p59 = scmp.ne.s32.totalorder %s50, %s51
    %p60 = scmp.eq.s32.totalorder %s19, 0
    %p61 = por %p59, %p60
    %p62 = scmp.ne.s32.totalorder %s50, %s51
    %p63 = scmp.eq.s32.totalorder %s20, 1
    %p64 = por %p62, %p63
    %p66 = scmp.ne.s32.totalorder %s51, %s65
    %p67 = scmp.eq.s32.totalorder %s20, 0
    %p68 = por %p66, %p67
    %s70 = sadd.s32 %s69, 1
    %p73 = scmp.eq.s32.totalorder %s14, 1
    %p74 = scmp.ne.s32.totalorder %s69, %s71
    %p75 = scmp.eq.s32.totalorder %s14, 0
    %p76 = por %p74, %p75
    %p77 = scmp.ne.s32.totalorder %s69, %s71
    %p78 = scmp.eq.s32.totalorder %s19, 1
    %p79 = por %p77, %p78
    %p80 = scmp.ne.s32.totalorder %s71, %s72
    %p81 = scmp.eq.s32.totalorder %s19, 0
    %p82 = por %p80, %p81
    %p83 = scmp.ne.s32.totalorder %s71, %s72
    %p84 = scmp.eq.s32.totalorder %s20, 1
    %p85 = por %p83, %p84
    %p87 = scmp.ne.s32.totalorder %s72, %s86
    %p88 = scmp.eq.s32.totalorder %s20, 0
    %p89 = por %p87, %p88
    %s91 = sadd.s32 %s90, 1
    %p94 = scmp.eq.s32.totalorder %s14, 1
    %p95 = scmp.ne.s32.totalorder %s90, %s92
    %p96 = scmp.eq.s32.totalorder %s14, 0
    %p97 = por %p95, %p96
    %p98 = scmp.ne.s32.totalorder %s90, %s92
    %p99 = scmp.eq.s32.totalorder %s19, 1
    %p100 = por %p98, %p99
    %p101 = scmp.ne.s32.totalorder %s92, %s93
    %p102 = scmp.eq.s32.totalorder %s19, 0
    %p103 = por %p101, %p102
    %p104 = scmp.ne.s32.totalorder %s92, %s93
    %p105 = scmp.eq.s32.totalorder %s20, 1
    %p106 = por %p104, %p105
    %p108 = scmp.ne.s32.totalorder %s93, %s107
    %p109 = scmp.eq.s32.totalorder %s20, 0
    %p110 = por %p108, %p109
    %s112 = sadd.s32 %s111, 1
    %p115 = scmp.eq.s32.totalorder %s14, 1
    %p116 = scmp.ne.s32.totalorder %s111, %s113
    %p117 = scmp.eq.s32.totalorder %s14, 0
    %p118 = por %p116, %p117
    %p119 = scmp.ne.s32.totalorder %s111, %s113
    %p120 = scmp.eq.s32.totalorder %s19, 1
    %p121 = por %p119, %p120
    %p122 = scmp.ne.s32.totalorder %s113, %s114
    %p123 = scmp.eq.s32.totalorder %s19, 0
    %p124 = por %p122, %p123
    %p125 = scmp.ne.s32.totalorder %s113, %s114
    %p126 = scmp.eq.s32.totalorder %s20, 1
    %p127 = por %p125, %p126
    %p129 = scmp.ne.s32.totalorder %s114, %s128
    %p130 = scmp.eq.s32.totalorder %s20, 0
    %p131 = por %p129, %p130
    %s133 = sadd.s32 %s132, 1
    %p136 = scmp.eq.s32.totalorder %s14, 1
    %p137 = scmp.ne.s32.totalorder %s132, %s134
    %p138 = scmp.eq.s32.totalorder %s14, 0
    %p139 = por %p137, %p138
    %p140 = scmp.ne.s32.totalorder %s132, %s134
    %p141 = scmp.eq.s32.totalorder %s19, 1
    %p142 = por %p140, %p141
    %p143 = scmp.ne.s32.totalorder %s134, %s135
    %p144 = scmp.eq.s32.totalorder %s19, 0
    %p145 = por %p143, %p144
    %p146 = scmp.ne.s32.totalorder %s134, %s135
    %p147 = scmp.eq.s32.totalorder %s20, 1
    %p148 = por %p146, %p147
    %p150 = scmp.ne.s32.totalorder %s135, %s149
    %p151 = scmp.eq.s32.totalorder %s20, 0
    %p152 = por %p150, %p151
    %s154 = sadd.s32 %s153, 1
    %p157 = scmp.eq.s32.totalorder %s14, 1
    %p158 = scmp.ne.s32.totalorder %s153, %s155
    %p159 = scmp.eq.s32.totalorder %s14, 0
    %p160 = por %p158, %p159
    %p161 = scmp.ne.s32.totalorder %s153, %s155
    %p162 = scmp.eq.s32.totalorder %s19, 1
    %p163 = por %p161, %p162
    %p164 = scmp.ne.s32.totalorder %s155, %s156
    %p165 = scmp.eq.s32.totalorder %s19, 0
    %p166 = por %p164, %p165
    %p167 = scmp.ne.s32.totalorder %s155, %s156
    %p168 = scmp.eq.s32.totalorder %s20, 1
    %p169 = por %p167, %p168
    %p171 = scmp.ne.s32.totalorder %s156, %s170
    %p172 = scmp.eq.s32.totalorder %s20, 0
    %p173 = por %p171, %p172
    %s175 = sadd.s32 %s174, 1
    %p178 = scmp.eq.s32.totalorder %s14, 1
    %p179 = scmp.ne.s32.totalorder %s174, %s176
    %p180 = scmp.eq.s32.totalorder %s14, 0
    %p181 = por %p179, %p180
    %p182 = scmp.ne.s32.totalorder %s174, %s176
    %p183 = scmp.eq.s32.totalorder %s19, 1
    %p184 = por %p182, %p183
    %p185 = scmp.ne.s32.totalorder %s176, %s177
    %p186 = scmp.eq.s32.totalorder %s19, 0
    %p187 = por %p185, %p186
    %p188 = scmp.ne.s32.totalorder %s176, %s177
    %p189 = scmp.eq.s32.totalorder %s20, 1
    %p190 = por %p188, %p189
    %p192 = scmp.ne.s32.totalorder %s177, %s191
    %p193 = scmp.eq.s32.totalorder %s20, 0
    %p194 = por %p192, %p193
    %s195 = ssub.s32 %s14, %s21
    %p196 = scmp.eq.s32.totalorder %s195, 0
    %s198 = sadd.s32 %s197, 1
    %s199 = scalar_select %p196, %s197, %s198
    %p202 = pneg %p196
    %p203 = scmp.eq.s32.totalorder %s14, 1
    %p204 = por %p202, %p203
    %p205 = scmp.ne.s32.totalorder %s197, %s200
    %p206 = scmp.eq.s32.totalorder %s14, 0
    %p207 = por %p205, %p206
    %p208 = scmp.ne.s32.totalorder %s197, %s200
    %p209 = scmp.eq.s32.totalorder %s19, 1
    %p210 = por %p208, %p209
    %p211 = scmp.ne.s32.totalorder %s200, %s201
    %p212 = scmp.eq.s32.totalorder %s19, 0
    %p213 = por %p211, %p212
    %p214 = scmp.ne.s32.totalorder %s200, %s201
    %p215 = scmp.eq.s32.totalorder %s20, 1
    %p216 = por %p214, %p215
    %p218 = scmp.ne.s32.totalorder %s201, %s217
    %p219 = scmp.eq.s32.totalorder %s20, 0
    %p220 = por %p218, %p219
    %p221 = scmp.le.s32.totalorder 1, %s14
    %p222 = scmp.lt.s32.totalorder %s14, 3
    %p223 = pnand %p221, %p222
    %p224 = pneg %p223
    // Predicated region
    $region9: #{collapsing_transformer_forward.6} parent=5 // pred_check
      _
    $region10: #{collapsing_transformer_forward.6} parent=5 // pred_check_branch
      %226 = sbr.rel (%p223) target = $region12
    $region11: #{collapsing_transformer_forward.6} parent=5 // pred_region
      %s227 = ssub.s32 %s14, 1
      // Predicated region
      $region13: #{collapsing_transformer_forward.6} parent=11 // pred_check
        %p228 = pneg %p61
      $region14: #{collapsing_transformer_forward.6} parent=11 // pred_check_branch
        %230 = sbr.rel (%p228) target = $region16
      $region15: #{collapsing_transformer_forward.6} parent=11 // pred_region
        _
      $region16: #{collapsing_transformer_forward.6} parent=11 // pred_fallthru
        _
      // Predicated region
      $region17: #{collapsing_transformer_forward.6} parent=11 // pred_check
        %p231 = pneg %p82
      $region18: #{collapsing_transformer_forward.6} parent=11 // pred_check_branch
        %233 = sbr.rel (%p231) target = $region20
      $region19: #{collapsing_transformer_forward.6} parent=11 // pred_region
        _
      $region20: #{collapsing_transformer_forward.6} parent=11 // pred_fallthru
        _
      // Predicated region
      $region21: #{collapsing_transformer_forward.6} parent=11 // pred_check
        %p234 = pneg %p103
      $region22: #{collapsing_transformer_forward.6} parent=11 // pred_check_branch
        %236 = sbr.rel (%p234) target = $region24
      $region23: #{collapsing_transformer_forward.6} parent=11 // pred_region
        _
      $region24: #{collapsing_transformer_forward.6} parent=11 // pred_fallthru
        _
      // Predicated region
      $region25: #{collapsing_transformer_forward.6} parent=11 // pred_check
        %p237 = pneg %p124
      $region26: #{collapsing_transformer_forward.6} parent=11 // pred_check_branch
        %239 = sbr.rel (%p237) target = $region28
      $region27: #{collapsing_transformer_forward.6} parent=11 // pred_region
        _
      $region28: #{collapsing_transformer_forward.6} parent=11 // pred_fallthru
        _
      // Predicated region
      $region29: #{collapsing_transformer_forward.6} parent=11 // pred_check
        %p240 = pneg %p145
      $region30: #{collapsing_transformer_forward.6} parent=11 // pred_check_branch
        %242 = sbr.rel (%p240) target = $region32
      $region31: #{collapsing_transformer_forward.6} parent=11 // pred_region
        _
      $region32: #{collapsing_transformer_forward.6} parent=11 // pred_fallthru
        _
      // Predicated region
      $region33: #{collapsing_transformer_forward.6} parent=11 // pred_check
        %p243 = pneg %p166
      $region34: #{collapsing_transformer_forward.6} parent=11 // pred_check_branch
        %245 = sbr.rel (%p243) target = $region36
      $region35: #{collapsing_transformer_forward.6} parent=11 // pred_region
        _
      $region36: #{collapsing_transformer_forward.6} parent=11 // pred_fallthru
        _
      // Predicated region
      $region37: #{collapsing_transformer_forward.6} parent=11 // pred_check
        %p246 = pneg %p187
      $region38: #{collapsing_transformer_forward.6} parent=11 // pred_check_branch
        %248 = sbr.rel (%p246) target = $region40
      $region39: #{collapsing_transformer_forward.6} parent=11 // pred_region
        _
      $region40: #{collapsing_transformer_forward.6} parent=11 // pred_fallthru
        _
    $region12: #{collapsing_transformer_forward.6} parent=5 // pred_fallthru
      _
    %p249 = scmp.lt.s32.totalorder %s14, 2
    // Predicated region
    $region41: #{collapsing_transformer_forward.6} parent=5 // pred_check
      %p250 = pneg %p249
    $region42: #{collapsing_transformer_forward.6} parent=5 // pred_check_branch
      %252 = sbr.rel (%p250) target = $region44
    $region43: #{collapsing_transformer_forward.6} parent=5 // pred_region
      // Predicated region
      $region45: #{collapsing_transformer_forward.6} parent=43 // pred_check
        %p253 = pneg %p34
      $region46: #{collapsing_transformer_forward.6} parent=43 // pred_check_branch
        %255 = sbr.rel (%p253) target = $region48
      $region47: #{collapsing_transformer_forward.6} parent=43 // pred_region
        %p256 = scmp.lt.s32.totalorder %s14, 1
        %s257 = scalar_select %p256, %s14, 1
        %s258 = smul.addr %s257, 8
        %s259 = scalar_lea.vmem %s0, %s258
      $region48: #{collapsing_transformer_forward.6} parent=43 // pred_fallthru
        _
    $region44: #{collapsing_transformer_forward.6} parent=5 // pred_fallthru
      _
    %p260 = scmp.le.s32.totalorder 1, %s14
    %p261 = scmp.lt.s32.totalorder %s14, 3
    %p262 = pnand %p260, %p261
    %p263 = pneg %p262
    // Predicated region
    $region49: #{collapsing_transformer_forward.6} parent=5 // pred_check
      _
    $region50: #{collapsing_transformer_forward.6} parent=5 // pred_check_branch
      %265 = sbr.rel (%p262) target = $region52
    $region51: #{collapsing_transformer_forward.6} parent=5 // pred_region
      %s266 = ssub.s32 %s14, 1
      %p267 = scmp.lt.s32.totalorder %s19, 1
      %s268 = scalar_select %p267, %s19, 1
      %s269 = smul.addr %s268, 8
      %s270 = scalar_lea.vmem %s0, %s269
      %p271 = pneg %p40
      %p272 = pneg %p37
      %p273 = pneg %p61
      %p274 = pneg %p58
      %p275 = pneg %p82
      %p276 = pneg %p79
      %p277 = pneg %p103
      %p278 = pneg %p100
      %p279 = pneg %p124
      %p280 = pneg %p121
      %p281 = pneg %p145
      %p282 = pneg %p142
      %p283 = pneg %p166
      %p284 = pneg %p163
      %p285 = pneg %p187
      %p286 = pneg %p184
      %p287 = pneg %p213
      %p288 = pneg %p210
      %p289 = scmp.lt.s32.totalorder %s19, 1
      %s290 = scalar_select %p289, %s19, 1
      %s291 = smul.addr %s290, 8
      %s292 = scalar_lea.vmem %s8, %s291
      %p293 = scmp.lt.s32.totalorder %s19, 1
      %s294 = scalar_select %p293, %s19, 1
      %s295 = smul.addr %s294, 8
      %s296 = scalar_lea.vmem %s0, %s295
      %p297 = scmp.lt.s32.totalorder %s19, 1
      %s298 = scalar_select %p297, %s19, 1
      %s299 = smul.addr %s298, 8
      %s300 = scalar_lea.vmem %s8, %s299
      %v302 = vld [vmem:[%s296] sm:$0xff]
      %v303 = vmul.f32 %v302, %v302
      %vm304 = vcmask 261120
      %v305 = vsel %vm304, %v303, 0.0
      %306 = vadd.xlane.f32.xlu0 %v305
      %v307 = vpop.xlane.xlu0 %306
      %v308 = vrsqrt.pop %v307
      %v309 = vmul.f32 %v307, %v308
      %vm310 = vcmp.eq.f32.partialorder %v307, inf
      %v311 = vsel %vm310, %v307, %v309
      %vm312 = vcmp.eq.f32.partialorder %v307, 0.0
      %v313 = vand.u32 %v307, 2147483648
      %v314 = vsel %vm312, %v313, %v311
      %v315 = vmul.f32 %v314, 0.17677669
      %v316 = vmax.f32 %v315, 1e-08
      %v317 = vrcp.pop %v316
      %v318 = vmul.f32 %v302, %v317
      %v319 = vld [vmem:[%s1] sm:$0x1]
      %v321 = vlaneseq
      %v322 = vshrl.u32 %v321, 7
      %v323 = vsub.s32 0, %v322
      %v324 = vrot.slane %v319, %v323
      %v326 = vmul.f32 %v318, %v324
      %v327 = vpack.c.bf16 %v326, %v326
      %v328 = vld [vmem:[%s2] sm:$0xf]
      %v329 = vld [vmem:[%s2 + $0x4] sm:$0xf]
      %v330 = vld [vmem:[%s2 + $0x8] sm:$0xf]
      %v331 = vld [vmem:[%s2 + $0xc] sm:$0xf]
      %v336 = vunpack.c.l.b16 %v328
      %v337 = vunpack.c.l.b16 %v329
      %v338 = vunpack.c.l.b16 %v330
      %v339 = vunpack.c.l.b16 %v331
      %v340 = vpack.c.b16 %v337, %v336
      %v341 = vpack.c.b16 %v339, %v338
      %v345 = vsel %vm304, %v327, 0
      %347 = vmatprep.subr.bf16.mxu0 0
      %348 = vmatpush1.bf16.msra.mxu0 %v340
      %349 = vmatprep.subr.bf16.mxu0 0
      %350 = vmatpush1.bf16.msra.mxu0 %v341
      %351 = vmatprep.subr.bf16.mxu0 0
      %352 = vmatpush1.bf16.msra.mxu0 0
      %353 = vmatprep.subr.bf16.mxu0 0
      %354 = vmatpush1.bf16.msra.mxu0 0
      %355 = vmatprep.subr.bf16.mxu0 0
      %356 = vmatpush1.bf16.msra.mxu0 0
      %357 = vmatprep.subr.bf16.mxu0 0
      %358 = vmatpush1.bf16.msra.mxu0 0
      %359 = vmatprep.subr.bf16.mxu0 0
      %360 = vmatpush1.bf16.msra.mxu0 0
      %361 = vmatprep.subr.bf16.mxu0 0
      %362 = vmatpush1.bf16.msra.mxu0 0
      %363 = vmatprep.subr.bf16.mxu0 0
      %364 = vmatpush1.bf16.msra.mxu0 0
      %365 = vmatprep.subr.bf16.mxu0 0
      %366 = vmatpush1.bf16.msra.mxu0 0
      %367 = vmatprep.subr.bf16.mxu0 0
      %368 = vmatpush1.bf16.msra.mxu0 0
      %369 = vmatprep.subr.bf16.mxu0 0
      %370 = vmatpush1.bf16.msra.mxu0 0
      %371 = vmatprep.subr.bf16.mxu0 0
      %372 = vmatpush1.bf16.msra.mxu0 0
      %373 = vmatprep.subr.bf16.mxu0 0
      %374 = vmatpush1.bf16.msra.mxu0 0
      %375 = vmatprep.subr.bf16.mxu0 0
      %376 = vmatpush1.bf16.msra.mxu0 0
      %377 = vmatprep.subr.bf16.mxu0 0
      %378 = vmatpush1.bf16.msra.mxu0 0
      %379 = vmatprep.mubr.bf16.mxu0 0
      %380 = vmatmul.mubr.bf16.gmra.mrb[0].mxu0 %v345
      %v381 = vpop.f32.mrb[0].mxu0
      %v382 = vadd.f32 0.0, %v381
      %v383 = vpop.f32.mrb[0].mxu0
      %v384 = vpop.f32.mrb[0].mxu0
      %v385 = vpop.f32.mrb[0].mxu0
      %386 = vdwg.mxu0
      %v387 = vld [vmem:[%s3] sm:$0xff]
      %v388 = vld [vmem:[%s4] sm:$0xff]
      %v389 = vld [vmem:[%s5] sm:$0xf]
      %v390 = vld [vmem:[%s6] sm:$0xf]
      %v391 = vld [vmem:[%s6 + $0x4] sm:$0xf]
      %v392 = vld [vmem:[%s6 + $0x8] sm:$0xf]
      %v393 = vld [vmem:[%s6 + $0xc] sm:$0xf]
      %v394 = vld [vmem:[%s7] sm:$0x1]
      %v396 = vlaneseq
      %v397 = vshrl.u32 %v396, 7
      %v398 = vsub.s32 0, %v397
      %v399 = vrot.slane %v394, %v398
      %v401 = vadd.f32 %v302, %v399
      %v402 = vmul.f32 %v382, %v387
      %v403 = vpack.c.bf16 %v382, %v382
      %vm404 = vcmask 64512
      %v406 = vsel %vm404, %v403, 0
      %vm408 = vcmask 1043456
      %v410 = vsel %vm408, %v389, 0
      %412 = vmatprep.subr.bf16.mxu0 0
      %413 = vmatpush1.bf16.msra.mxu0 %v410
      %414 = vmatprep.subr.bf16.mxu0 0
      %415 = vmatpush1.bf16.msra.mxu0 0
      %416 = vmatprep.subr.bf16.mxu0 0
      %417 = vmatpush1.bf16.msra.mxu0 0
      %418 = vmatprep.subr.bf16.mxu0 0
      %419 = vmatpush1.bf16.msra.mxu0 0
      %420 = vmatprep.subr.bf16.mxu0 0
      %421 = vmatpush1.bf16.msra.mxu0 0
      %422 = vmatprep.subr.bf16.mxu0 0
      %423 = vmatpush1.bf16.msra.mxu0 0
      %424 = vmatprep.subr.bf16.mxu0 0
      %425 = vmatpush1.bf16.msra.mxu0 0
      %426 = vmatprep.subr.bf16.mxu0 0
      %427 = vmatpush1.bf16.msra.mxu0 0
      %428 = vmatprep.subr.bf16.mxu0 0
      %429 = vmatpush1.bf16.msra.mxu0 0
      %430 = vmatprep.subr.bf16.mxu0 0
      %431 = vmatpush1.bf16.msra.mxu0 0
      %432 = vmatprep.subr.bf16.mxu0 0
      %433 = vmatpush1.bf16.msra.mxu0 0
      %434 = vmatprep.subr.bf16.mxu0 0
      %435 = vmatpush1.bf16.msra.mxu0 0
      %436 = vmatprep.subr.bf16.mxu0 0
      %437 = vmatpush1.bf16.msra.mxu0 0
      %438 = vmatprep.subr.bf16.mxu0 0
      %439 = vmatpush1.bf16.msra.mxu0 0
      %440 = vmatprep.subr.bf16.mxu0 0
      %441 = vmatpush1.bf16.msra.mxu0 0
      %442 = vmatprep.subr.bf16.mxu0 0
      %443 = vmatpush1.bf16.msra.mxu0 0
      %444 = vmatprep.mubr.bf16.mxu0 0
      %445 = vmatmul.mubr.bf16.gmra.mrb[0].mxu0 %v406
      %v446 = vpop.f32.mrb[0].mxu0
      %v447 = vadd.f32 0.0, %v446
      %v448 = vpop.f32.mrb[0].mxu0
      %v449 = vpop.f32.mrb[0].mxu0
      %v450 = vpop.f32.mrb[0].mxu0
      %451 = vdwg.mxu0
      %v452 = vmul.f32 %v447, %v388
      %v453 = vadd.f32 %v402, %v452
      %455 = vrot.lane.b32.xlu0 %v387, 32
      %v456 = vpop.permute.xlu0 %455
      %v458 = vmul.f32 %v382, %v456
      %460 = vrot.lane.b32.xlu0 %v403, 96
      %v461 = vpop.permute.xlu0 %460
      %v463 = vsel %vm404, %v461, 0
      %465 = vmatprep.subr.bf16.mxu0 0
      %466 = vmatpush1.bf16.msra.mxu0 %v410
      %467 = vmatprep.subr.bf16.mxu0 0
      %468 = vmatpush1.bf16.msra.mxu0 0
      %469 = vmatprep.subr.bf16.mxu0 0
      %470 = vmatpush1.bf16.msra.mxu0 0
      %471 = vmatprep.subr.bf16.mxu0 0
      %472 = vmatpush1.bf16.msra.mxu0 0
      %473 = vmatprep.subr.bf16.mxu0 0
      %474 = vmatpush1.bf16.msra.mxu0 0
      %475 = vmatprep.subr.bf16.mxu0 0
      %476 = vmatpush1.bf16.msra.mxu0 0
      %477 = vmatprep.subr.bf16.mxu0 0
      %478 = vmatpush1.bf16.msra.mxu0 0
      %479 = vmatprep.subr.bf16.mxu0 0
      %480 = vmatpush1.bf16.msra.mxu0 0
      %481 = vmatprep.subr.bf16.mxu0 0
      %482 = vmatpush1.bf16.msra.mxu0 0
      %483 = vmatprep.subr.bf16.mxu0 0
      %484 = vmatpush1.bf16.msra.mxu0 0
      %485 = vmatprep.subr.bf16.mxu0 0
      %486 = vmatpush1.bf16.msra.mxu0 0
      %487 = vmatprep.subr.bf16.mxu0 0
      %488 = vmatpush1.bf16.msra.mxu0 0
      %489 = vmatprep.subr.bf16.mxu0 0
      %490 = vmatpush1.bf16.msra.mxu0 0
      %491 = vmatprep.subr.bf16.mxu0 0
      %492 = vmatpush1.bf16.msra.mxu0 0
      %493 = vmatprep.subr.bf16.mxu0 0
      %494 = vmatpush1.bf16.msra.mxu0 0
      %495 = vmatprep.subr.bf16.mxu0 0
      %496 = vmatpush1.bf16.msra.mxu0 0
      %497 = vmatprep.mubr.bf16.mxu0 0
      %498 = vmatmul.mubr.bf16.gmra.mrb[0].mxu0 %v463
      %v499 = vpop.f32.mrb[0].mxu0
      %v500 = vadd.f32 0.0, %v499
      %v501 = vpop.f32.mrb[0].mxu0
      %v502 = vpop.f32.mrb[0].mxu0
      %v503 = vpop.f32.mrb[0].mxu0
      %504 = vdwg.mxu0
      %v505 = vmul.f32 %v500, %v388
      %507 = vrot.lane.b32.xlu0 %v505, 32
      %v508 = vpop.permute.xlu0 %507
      %v510 = vadd.f32 %v458, %v508
      %v511 = vpack.c.bf16 %v453, %v453
      %v512 = vpack.c.bf16 %v510, %v510
      %514 = vrot.lane.b32.xlu0 %v512, 96
      %v515 = vpop.permute.xlu0 %514
      %v517 = vsel %vm404, %v511, 0
      %v520 = vsel %vm404, %v515, 0
      %522 = vmatprep.subr.bf16.mxu0 0
      %523 = vmatpush1.bf16.xpose.msra.mxu0 %v520
      %524 = vmatprep.subr.bf16.mxu0 0
      %525 = vmatpush1.bf16.xpose.msra.mxu0 0
      %526 = vmatprep.subr.bf16.mxu0 0
      %527 = vmatpush1.bf16.xpose.msra.mxu0 0
      %528 = vmatprep.subr.bf16.mxu0 0
      %529 = vmatpush1.bf16.xpose.msra.mxu0 0
      %530 = vmatprep.subr.bf16.mxu0 0
      %531 = vmatpush1.bf16.xpose.msra.mxu0 0
      %532 = vmatprep.subr.bf16.mxu0 0
      %533 = vmatpush1.bf16.xpose.msra.mxu0 0
      %534 = vmatprep.subr.bf16.mxu0 0
      %535 = vmatpush1.bf16.xpose.msra.mxu0 0
      %536 = vmatprep.subr.bf16.mxu0 0
      %537 = vmatpush1.bf16.xpose.msra.mxu0 0
      %538 = vmatprep.subr.bf16.mxu0 0
      %539 = vmatpush1.bf16.xpose.msra.mxu0 0
      %540 = vmatprep.subr.bf16.mxu0 0
      %541 = vmatpush1.bf16.xpose.msra.mxu0 0
      %542 = vmatprep.subr.bf16.mxu0 0
      %543 = vmatpush1.bf16.xpose.msra.mxu0 0
      %544 = vmatprep.subr.bf16.mxu0 0
      %545 = vmatpush1.bf16.xpose.msra.mxu0 0
      %546 = vmatprep.subr.bf16.mxu0 0
      %547 = vmatpush1.bf16.xpose.msra.mxu0 0
      %548 = vmatprep.subr.bf16.mxu0 0
      %549 = vmatpush1.bf16.xpose.msra.mxu0 0
      %550 = vmatprep.subr.bf16.mxu0 0
      %551 = vmatpush1.bf16.xpose.msra.mxu0 0
      %552 = vmatprep.subr.bf16.mxu0 0
      %553 = vmatpush1.bf16.xpose.msra.mxu0 0
      %554 = vmatprep.mubr.bf16.mxu0 0
      %555 = vmatmul.mubr.bf16.gmra.mrb[0].mxu0 %v517
      %v556 = vpop.f32.mrb[0].mxu0
      %v557 = vadd.f32 0.0, %v556
      %v558 = vpop.f32.mrb[0].mxu0
      %v559 = vpop.f32.mrb[0].mxu0
      %v560 = vpop.f32.mrb[0].mxu0
      %561 = vdwg.mxu0
      %v562 = vmul.f32 %v557, 0.35355338
      %v563 = vsel %vm404, %v562, -inf
      %564 = vmax.xlane.f32.xlu0 %v563
      %v565 = vpop.xlane.xlu0 %564
      %v566 = vsub.f32 %v562, %v565
      %v567 = vmul.f32 %v566, 1.442695
      %v568 = vpow.pop %v567
      %v569 = vsel %vm404, %v568, 0.0
      %570 = vadd.xlane.f32.xlu0 %v569
      %v571 = vpop.xlane.xlu0 %570
      %v572 = vrcp.pop %v571
      %v573 = vmul.f32 %v568, %v572
      %v574 = vpack.c.bf16 %v573, %v573
      %575 = vrot.lane.b32.xlu0 %v403, 64
      %v576 = vpop.permute.xlu0 %575
      %v578 = vsel %vm404, %v574, 0
      %v581 = vsel %vm408, %v576, 0
      %583 = vmatprep.subr.bf16.mxu0 0
      %584 = vmatpush1.bf16.msra.mxu0 %v581
      %585 = vmatprep.subr.bf16.mxu0 0
      %586 = vmatpush1.bf16.msra.mxu0 0
      %587 = vmatprep.subr.bf16.mxu0 0
      %588 = vmatpush1.bf16.msra.mxu0 0
      %589 = vmatprep.subr.bf16.mxu0 0
      %590 = vmatpush1.bf16.msra.mxu0 0
      %591 = vmatprep.subr.bf16.mxu0 0
      %592 = vmatpush1.bf16.msra.mxu0 0
      %593 = vmatprep.subr.bf16.mxu0 0
      %594 = vmatpush1.bf16.msra.mxu0 0
      %595 = vmatprep.subr.bf16.mxu0 0
      %596 = vmatpush1.bf16.msra.mxu0 0
      %597 = vmatprep.subr.bf16.mxu0 0
      %598 = vmatpush1.bf16.msra.mxu0 0
      %599 = vmatprep.subr.bf16.mxu0 0
      %600 = vmatpush1.bf16.msra.mxu0 0
      %601 = vmatprep.subr.bf16.mxu0 0
      %602 = vmatpush1.bf16.msra.mxu0 0
      %603 = vmatprep.subr.bf16.mxu0 0
      %604 = vmatpush1.bf16.msra.mxu0 0
      %605 = vmatprep.subr.bf16.mxu0 0
      %606 = vmatpush1.bf16.msra.mxu0 0
      %607 = vmatprep.subr.bf16.mxu0 0
      %608 = vmatpush1.bf16.msra.mxu0 0
      %609 = vmatprep.subr.bf16.mxu0 0
      %610 = vmatpush1.bf16.msra.mxu0 0
      %611 = vmatprep.subr.bf16.mxu0 0
      %612 = vmatpush1.bf16.msra.mxu0 0
      %613 = vmatprep.subr.bf16.mxu0 0
      %614 = vmatpush1.bf16.msra.mxu0 0
      %615 = vmatprep.mubr.bf16.mxu0 0
      %616 = vmatmul.mubr.bf16.gmra.mrb[0].mxu0 %v578
      %v617 = vpop.f32.mrb[0].mxu0
      %v618 = vadd.f32 0.0, %v617
      %v619 = vpop.f32.mrb[0].mxu0
      %v620 = vpop.f32.mrb[0].mxu0
      %v621 = vpop.f32.mrb[0].mxu0
      %622 = vdwg.mxu0
      %v623 = vpack.c.bf16 %v618, %v618
      %v625 = vsel %vm404, %v623, 0
      %v628 = vsel %vm408, %v390, 0
      %630 = vmatprep.subr.bf16.mxu0 0
      %631 = vmatpush1.bf16.msra.mxu0 %v628
      %632 = vmatprep.subr.bf16.mxu0 0
      %633 = vmatpush1.bf16.msra.mxu0 0
      %634 = vmatprep.subr.bf16.mxu0 0
      %635 = vmatpush1.bf16.msra.mxu0 0
      %636 = vmatprep.subr.bf16.mxu0 0
      %637 = vmatpush1.bf16.msra.mxu0 0
      %638 = vmatprep.subr.bf16.mxu0 0
      %639 = vmatpush1.bf16.msra.mxu0 0
      %640 = vmatprep.subr.bf16.mxu0 0
      %641 = vmatpush1.bf16.msra.mxu0 0
      %642 = vmatprep.subr.bf16.mxu0 0
      %643 = vmatpush1.bf16.msra.mxu0 0
      %644 = vmatprep.subr.bf16.mxu0 0
      %645 = vmatpush1.bf16.msra.mxu0 0
      %646 = vmatprep.subr.bf16.mxu0 0
      %647 = vmatpush1.bf16.msra.mxu0 0
      %648 = vmatprep.subr.bf16.mxu0 0
      %649 = vmatpush1.bf16.msra.mxu0 0
      %650 = vmatprep.subr.bf16.mxu0 0
      %651 = vmatpush1.bf16.msra.mxu0 0
      %652 = vmatprep.subr.bf16.mxu0 0
      %653 = vmatpush1.bf16.msra.mxu0 0
      %654 = vmatprep.subr.bf16.mxu0 0
      %655 = vmatpush1.bf16.msra.mxu0 0
      %656 = vmatprep.subr.bf16.mxu0 0
      %657 = vmatpush1.bf16.msra.mxu0 0
      %658 = vmatprep.subr.bf16.mxu0 0
      %659 = vmatpush1.bf16.msra.mxu0 0
      %660 = vmatprep.subr.bf16.mxu0 0
      %661 = vmatpush1.bf16.msra.mxu0 0
      %662 = vmatprep.mubr.bf16.mxu0 0
      %663 = vmatmul.mubr.bf16.gmra.mrb[0].mxu0 %v625
      %v664 = vpop.f32.mrb[0].mxu0
      %v665 = vadd.f32 0.0, %v664
      %v666 = vpop.f32.mrb[0].mxu0
      %v667 = vpop.f32.mrb[0].mxu0
      %v668 = vpop.f32.mrb[0].mxu0
      %669 = vdwg.mxu0
      %v670 = vadd.f32 %v401, %v665
      %671 = vrot.lane.b32.xlu0 %v387, 8
      %v672 = vpop.permute.xlu0 %671
      %v674 = vmul.f32 %v382, %v672
      %675 = vrot.lane.b32.xlu0 %v403, 120
      %v676 = vpop.permute.xlu0 %675
      %v678 = vsel %vm404, %v676, 0
      %680 = vmatprep.subr.bf16.mxu0 0
      %681 = vmatpush1.bf16.msra.mxu0 %v410
      %682 = vmatprep.subr.bf16.mxu0 0
      %683 = vmatpush1.bf16.msra.mxu0 0
      %684 = vmatprep.subr.bf16.mxu0 0
      %685 = vmatpush1.bf16.msra.mxu0 0
      %686 = vmatprep.subr.bf16.mxu0 0
      %687 = vmatpush1.bf16.msra.mxu0 0
      %688 = vmatprep.subr.bf16.mxu0 0
      %689 = vmatpush1.bf16.msra.mxu0 0
      %690 = vmatprep.subr.bf16.mxu0 0
      %691 = vmatpush1.bf16.msra.mxu0 0
      %692 = vmatprep.subr.bf16.mxu0 0
      %693 = vmatpush1.bf16.msra.mxu0 0
      %694 = vmatprep.subr.bf16.mxu0 0
      %695 = vmatpush1.bf16.msra.mxu0 0
      %696 = vmatprep.subr.bf16.mxu0 0
      %697 = vmatpush1.bf16.msra.mxu0 0
      %698 = vmatprep.subr.bf16.mxu0 0
      %699 = vmatpush1.bf16.msra.mxu0 0
      %700 = vmatprep.subr.bf16.mxu0 0
      %701 = vmatpush1.bf16.msra.mxu0 0
      %702 = vmatprep.subr.bf16.mxu0 0
      %703 = vmatpush1.bf16.msra.mxu0 0
      %704 = vmatprep.subr.bf16.mxu0 0
      %705 = vmatpush1.bf16.msra.mxu0 0
      %706 = vmatprep.subr.bf16.mxu0 0
      %707 = vmatpush1.bf16.msra.mxu0 0
      %708 = vmatprep.subr.bf16.mxu0 0
      %709 = vmatpush1.bf16.msra.mxu0 0
      %710 = vmatprep.subr.bf16.mxu0 0
      %711 = vmatpush1.bf16.msra.mxu0 0
      %712 = vmatprep.mubr.bf16.mxu0 0
      %713 = vmatmul.mubr.bf16.gmra.mrb[0].mxu0 %v678
      %v714 = vpop.f32.mrb[0].mxu0
      %v715 = vadd.f32 0.0, %v714
      %v716 = vpop.f32.mrb[0].mxu0
      %v717 = vpop.f32.mrb[0].mxu0
      %v718 = vpop.f32.mrb[0].mxu0
      %719 = vdwg.mxu0
      %v720 = vmul.f32 %v715, %v388
      %722 = vrot.lane.b32.xlu0 %v720, 8
      %v723 = vpop.permute.xlu0 %722
      %v725 = vadd.f32 %v674, %v723
      %726 = vrot.lane.b32.xlu0 %v387, 40
      %v727 = vpop.permute.xlu0 %726
      %v729 = vmul.f32 %v382, %v727
      %730 = vrot.lane.b32.xlu0 %v403, 88
      %v731 = vpop.permute.xlu0 %730
      %v733 = vsel %vm404, %v731, 0
      %735 = vmatprep.subr.bf16.mxu0 0
      %736 = vmatpush1.bf16.msra.mxu0 %v410
      %737 = vmatprep.subr.bf16.mxu0 0
      %738 = vmatpush1.bf16.msra.mxu0 0
      %739 = vmatprep.subr.bf16.mxu0 0
      %740 = vmatpush1.bf16.msra.mxu0 0
      %741 = vmatprep.subr.bf16.mxu0 0
      %742 = vmatpush1.bf16.msra.mxu0 0
      %743 = vmatprep.subr.bf16.mxu0 0
      %744 = vmatpush1.bf16.msra.mxu0 0
      %745 = vmatprep.subr.bf16.mxu0 0
      %746 = vmatpush1.bf16.msra.mxu0 0
      %747 = vmatprep.subr.bf16.mxu0 0
      %748 = vmatpush1.bf16.msra.mxu0 0
      %749 = vmatprep.subr.bf16.mxu0 0
      %750 = vmatpush1.bf16.msra.mxu0 0
      %751 = vmatprep.subr.bf16.mxu0 0
      %752 = vmatpush1.bf16.msra.mxu0 0
      %753 = vmatprep.subr.bf16.mxu0 0
      %754 = vmatpush1.bf16.msra.mxu0 0
      %755 = vmatprep.subr.bf16.mxu0 0
      %756 = vmatpush1.bf16.msra.mxu0 0
      %757 = vmatprep.subr.bf16.mxu0 0
      %758 = vmatpush1.bf16.msra.mxu0 0
      %759 = vmatprep.subr.bf16.mxu0 0
      %760 = vmatpush1.bf16.msra.mxu0 0
      %761 = vmatprep.subr.bf16.mxu0 0
      %762 = vmatpush1.bf16.msra.mxu0 0
      %763 = vmatprep.subr.bf16.mxu0 0
      %764 = vmatpush1.bf16.msra.mxu0 0
      %765 = vmatprep.subr.bf16.mxu0 0
      %766 = vmatpush1.bf16.msra.mxu0 0
      %767 = vmatprep.mubr.bf16.mxu0 0
      %768 = vmatmul.mubr.bf16.gmra.mrb[0].mxu0 %v733
      %v769 = vpop.f32.mrb[0].mxu0
      %v770 = vadd.f32 0.0, %v769
      %v771 = vpop.f32.mrb[0].mxu0
      %v772 = vpop.f32.mrb[0].mxu0
      %v773 = vpop.f32.mrb[0].mxu0
      %774 = vdwg.mxu0
      %v775 = vmul.f32 %v770, %v388
      %777 = vrot.lane.b32.xlu0 %v775, 40
      %v778 = vpop.permute.xlu0 %777
      %v780 = vadd.f32 %v729, %v778
      %v781 = vpack.c.bf16 %v725, %v725
      %v782 = vpack.c.bf16 %v780, %v780
      %784 = vrot.lane.b32.xlu0 %v781, 120
      %v785 = vpop.permute.xlu0 %784
      %787 = vrot.lane.b32.xlu0 %v782, 88
      %v788 = vpop.permute.xlu0 %787
      %v790 = vsel %vm404, %v785, 0
      %v793 = vsel %vm404, %v788, 0
      %795 = vmatprep.subr.bf16.mxu0 0
      %796 = vmatpush1.bf16.xpose.msra.mxu0 %v793
      %797 = vmatprep.subr.bf16.mxu0 0
      %798 = vmatpush1.bf16.xpose.msra.mxu0 0
      %799 = vmatprep.subr.bf16.mxu0 0
      %800 = vmatpush1.bf16.xpose.msra.mxu0 0
      %801 = vmatprep.subr.bf16.mxu0 0
      %802 = vmatpush1.bf16.xpose.msra.mxu0 0
      %803 = vmatprep.subr.bf16.mxu0 0
      %804 = vmatpush1.bf16.xpose.msra.mxu0 0
      %805 = vmatprep.subr.bf16.mxu0 0
      %806 = vmatpush1.bf16.xpose.msra.mxu0 0
      %807 = vmatprep.subr.bf16.mxu0 0
      %808 = vmatpush1.bf16.xpose.msra.mxu0 0
      %809 = vmatprep.subr.bf16.mxu0 0
      %810 = vmatpush1.bf16.xpose.msra.mxu0 0
      %811 = vmatprep.subr.bf16.mxu0 0
      %812 = vmatpush1.bf16.xpose.msra.mxu0 0
      %813 = vmatprep.subr.bf16.mxu0 0
      %814 = vmatpush1.bf16.xpose.msra.mxu0 0
      %815 = vmatprep.subr.bf16.mxu0 0
      %816 = vmatpush1.bf16.xpose.msra.mxu0 0
      %817 = vmatprep.subr.bf16.mxu0 0
      %818 = vmatpush1.bf16.xpose.msra.mxu0 0
      %819 = vmatprep.subr.bf16.mxu0 0
      %820 = vmatpush1.bf16.xpose.msra.mxu0 0
      %821 = vmatprep.subr.bf16.mxu0 0
      %822 = vmatpush1.bf16.xpose.msra.mxu0 0
      %823 = vmatprep.subr.bf16.mxu0 0
      %824 = vmatpush1.bf16.xpose.msra.mxu0 0
      %825 = vmatprep.subr.bf16.mxu0 0
      %826 = vmatpush1.bf16.xpose.msra.mxu0 0
      %827 = vmatprep.mubr.bf16.mxu0 0
      %828 = vmatmul.mubr.bf16.gmra.mrb[0].mxu0 %v790
      %v829 = vpop.f32.mrb[0].mxu0
      %v830 = vadd.f32 0.0, %v829
      %v831 = vpop.f32.mrb[0].mxu0
      %v832 = vpop.f32.mrb[0].mxu0
      %v833 = vpop.f32.mrb[0].mxu0
      %834 = vdwg.mxu0
      %v835 = vmul.f32 %v830, 0.35355338
      %v836 = vsel %vm404, %v835, -inf
      %837 = vmax.xlane.f32.xlu0 %v836
      %v838 = vpop.xlane.xlu0 %837
      %v839 = vsub.f32 %v835, %v838
      %v840 = vmul.f32 %v839, 1.442695
      %v841 = vpow.pop %v840
      %v842 = vsel %vm404, %v841, 0.0
      %843 = vadd.xlane.f32.xlu0 %v842
      %v844 = vpop.xlane.xlu0 %843
      %v845 = vrcp.pop %v844
      %v846 = vmul.f32 %v841, %v845
      %v847 = vpack.c.bf16 %v846, %v846
      %848 = vrot.lane.b32.xlu0 %v403, 56
      %v849 = vpop.permute.xlu0 %848
      %v851 = vsel %vm404, %v847, 0
      %v854 = vsel %vm408, %v849, 0
      %856 = vmatprep.subr.bf16.mxu0 0
      %857 = vmatpush1.bf16.msra.mxu0 %v854
      %858 = vmatprep.subr.bf16.mxu0 0
      %859 = vmatpush1.bf16.msra.mxu0 0
      %860 = vmatprep.subr.bf16.mxu0 0
      %861 = vmatpush1.bf16.msra.mxu0 0
      %862 = vmatprep.subr.bf16.mxu0 0
      %863 = vmatpush1.bf16.msra.mxu0 0
      %864 = vmatprep.subr.bf16.mxu0 0
      %865 = vmatpush1.bf16.msra.mxu0 0
      %866 = vmatprep.subr.bf16.mxu0 0
      %867 = vmatpush1.bf16.msra.mxu0 0
      %868 = vmatprep.subr.bf16.mxu0 0
      %869 = vmatpush1.bf16.msra.mxu0 0
      %870 = vmatprep.subr.bf16.mxu0 0
      %871 = vmatpush1.bf16.msra.mxu0 0
      %872 = vmatprep.subr.bf16.mxu0 0
      %873 = vmatpush1.bf16.msra.mxu0 0
      %874 = vmatprep.subr.bf16.mxu0 0
      %875 = vmatpush1.bf16.msra.mxu0 0
      %876 = vmatprep.subr.bf16.mxu0 0
      %877 = vmatpush1.bf16.msra.mxu0 0
      %878 = vmatprep.subr.bf16.mxu0 0
      %879 = vmatpush1.bf16.msra.mxu0 0
      %880 = vmatprep.subr.bf16.mxu0 0
      %881 = vmatpush1.bf16.msra.mxu0 0
      %882 = vmatprep.subr.bf16.mxu0 0
      %883 = vmatpush1.bf16.msra.mxu0 0
      %884 = vmatprep.subr.bf16.mxu0 0
      %885 = vmatpush1.bf16.msra.mxu0 0
      %886 = vmatprep.subr.bf16.mxu0 0
      %887 = vmatpush1.bf16.msra.mxu0 0
      %888 = vmatprep.mubr.bf16.mxu0 0
      %889 = vmatmul.mubr.bf16.gmra.mrb[0].mxu0 %v851
      %v890 = vpop.f32.mrb[0].mxu0
      %v891 = vadd.f32 0.0, %v890
      %v892 = vpop.f32.mrb[0].mxu0
      %v893 = vpop.f32.mrb[0].mxu0
      %v894 = vpop.f32.mrb[0].mxu0
      %895 = vdwg.mxu0
      %v896 = vpack.c.bf16 %v891, %v891
      %v898 = vsel %vm404, %v896, 0
      %v901 = vsel %vm408, %v391, 0
      %903 = vmatprep.subr.bf16.mxu0 0
      %904 = vmatpush1.bf16.msra.mxu0 %v901
      %905 = vmatprep.subr.bf16.mxu0 0
      %906 = vmatpush1.bf16.msra.mxu0 0
      %907 = vmatprep.subr.bf16.mxu0 0
      %908 = vmatpush1.bf16.msra.mxu0 0
      %909 = vmatprep.subr.bf16.mxu0 0
      %910 = vmatpush1.bf16.msra.mxu0 0
      %911 = vmatprep.subr.bf16.mxu0 0
      %912 = vmatpush1.bf16.msra.mxu0 0
      %913 = vmatprep.subr.bf16.mxu0 0
      %914 = vmatpush1.bf16.msra.mxu0 0
      %915 = vmatprep.subr.bf16.mxu0 0
      %916 = vmatpush1.bf16.msra.mxu0 0
      %917 = vmatprep.subr.bf16.mxu0 0
      %918 = vmatpush1.bf16.msra.mxu0 0
      %919 = vmatprep.subr.bf16.mxu0 0
      %920 = vmatpush1.bf16.msra.mxu0 0
      %921 = vmatprep.subr.bf16.mxu0 0
      %922 = vmatpush1.bf16.msra.mxu0 0
      %923 = vmatprep.subr.bf16.mxu0 0
      %924 = vmatpush1.bf16.msra.mxu0 0
      %925 = vmatprep.subr.bf16.mxu0 0
      %926 = vmatpush1.bf16.msra.mxu0 0
      %927 = vmatprep.subr.bf16.mxu0 0
      %928 = vmatpush1.bf16.msra.mxu0 0
      %929 = vmatprep.subr.bf16.mxu0 0
      %930 = vmatpush1.bf16.msra.mxu0 0
      %931 = vmatprep.subr.bf16.mxu0 0
      %932 = vmatpush1.bf16.msra.mxu0 0
      %933 = vmatprep.subr.bf16.mxu0 0
      %934 = vmatpush1.bf16.msra.mxu0 0
      %935 = vmatprep.mubr.bf16.mxu0 0
      %936 = vmatmul.mubr.bf16.gmra.mrb[0].mxu0 %v898
      %v937 = vpop.f32.mrb[0].mxu0
      %v938 = vadd.f32 0.0, %v937
      %v939 = vpop.f32.mrb[0].mxu0
      %v940 = vpop.f32.mrb[0].mxu0
      %v941 = vpop.f32.mrb[0].mxu0
      %942 = vdwg.mxu0
      %v943 = vadd.f32 %v670, %v938
      %944 = vrot.lane.b32.xlu0 %v387, 16
      %v945 = vpop.permute.xlu0 %944
      %v947 = vmul.f32 %v382, %v945
      %948 = vrot.lane.b32.xlu0 %v403, 112
      %v949 = vpop.permute.xlu0 %948
      %v951 = vsel %vm404, %v949, 0
      %953 = vmatprep.subr.bf16.mxu0 0
      %954 = vmatpush1.bf16.msra.mxu0 %v410
      %955 = vmatprep.subr.bf16.mxu0 0
      %956 = vmatpush1.bf16.msra.mxu0 0
      %957 = vmatprep.subr.bf16.mxu0 0
      %958 = vmatpush1.bf16.msra.mxu0 0
      %959 = vmatprep.subr.bf16.mxu0 0
      %960 = vmatpush1.bf16.msra.mxu0 0
      %961 = vmatprep.subr.bf16.mxu0 0
      %962 = vmatpush1.bf16.msra.mxu0 0
      %963 = vmatprep.subr.bf16.mxu0 0
      %964 = vmatpush1.bf16.msra.mxu0 0
      %965 = vmatprep.subr.bf16.mxu0 0
      %966 = vmatpush1.bf16.msra.mxu0 0
      %967 = vmatprep.subr.bf16.mxu0 0
      %968 = vmatpush1.bf16.msra.mxu0 0
      %969 = vmatprep.subr.bf16.mxu0 0
      %970 = vmatpush1.bf16.msra.mxu0 0
      %971 = vmatprep.subr.bf16.mxu0 0
      %972 = vmatpush1.bf16.msra.mxu0 0
      %973 = vmatprep.subr.bf16.mxu0 0
      %974 = vmatpush1.bf16.msra.mxu0 0
      %975 = vmatprep.subr.bf16.mxu0 0
      %976 = vmatpush1.bf16.msra.mxu0 0
      %977 = vmatprep.subr.bf16.mxu0 0
      %978 = vmatpush1.bf16.msra.mxu0 0
      %979 = vmatprep.subr.bf16.mxu0 0
      %980 = vmatpush1.bf16.msra.mxu0 0
      %981 = vmatprep.subr.bf16.mxu0 0
      %982 = vmatpush1.bf16.msra.mxu0 0
      %983 = vmatprep.subr.bf16.mxu0 0
      %984 = vmatpush1.bf16.msra.mxu0 0
      %985 = vmatprep.mubr.bf16.mxu0 0
      %986 = vmatmul.mubr.bf16.gmra.mrb[0].mxu0 %v951
      %v987 = vpop.f32.mrb[0].mxu0
      %v988 = vadd.f32 0.0, %v987
      %v989 = vpop.f32.mrb[0].mxu0
      %v990 = vpop.f32.mrb[0].mxu0
      %v991 = vpop.f32.mrb[0].mxu0
      %992 = vdwg.mxu0
      %v993 = vmul.f32 %v988, %v388
      %995 = vrot.lane.b32.xlu0 %v993, 16
      %v996 = vpop.permute.xlu0 %995
      %v998 = vadd.f32 %v947, %v996
      %999 = vrot.lane.b32.xlu0 %v387, 48
      %v1000 = vpop.permute.xlu0 %999
      %v1002 = vmul.f32 %v382, %v1000
      %1003 = vrot.lane.b32.xlu0 %v403, 80
      %v1004 = vpop.permute.xlu0 %1003
      %v1006 = vsel %vm404, %v1004, 0
      %1008 = vmatprep.subr.bf16.mxu0 0
      %1009 = vmatpush1.bf16.msra.mxu0 %v410
      %1010 = vmatprep.subr.bf16.mxu0 0
      %1011 = vmatpush1.bf16.msra.mxu0 0
      %1012 = vmatprep.subr.bf16.mxu0 0
      %1013 = vmatpush1.bf16.msra.mxu0 0
      %1014 = vmatprep.subr.bf16.mxu0 0
      %1015 = vmatpush1.bf16.msra.mxu0 0
      %1016 = vmatprep.subr.bf16.mxu0 0
      %1017 = vmatpush1.bf16.msra.mxu0 0
      %1018 = vmatprep.subr.bf16.mxu0 0
      %1019 = vmatpush1.bf16.msra.mxu0 0
      %1020 = vmatprep.subr.bf16.mxu0 0
      %1021 = vmatpush1.bf16.msra.mxu0 0
      %1022 = vmatprep.subr.bf16.mxu0 0
      %1023 = vmatpush1.bf16.msra.mxu0 0
      %1024 = vmatprep.subr.bf16.mxu0 0
      %1025 = vmatpush1.bf16.msra.mxu0 0
      %1026 = vmatprep.subr.bf16.mxu0 0
      %1027 = vmatpush1.bf16.msra.mxu0 0
      %1028 = vmatprep.subr.bf16.mxu0 0
      %1029 = vmatpush1.bf16.msra.mxu0 0
      %1030 = vmatprep.subr.bf16.mxu0 0
      %1031 = vmatpush1.bf16.msra.mxu0 0
      %1032 = vmatprep.subr.bf16.mxu0 0
      %1033 = vmatpush1.bf16.msra.mxu0 0
      %1034 = vmatprep.subr.bf16.mxu0 0
      %1035 = vmatpush1.bf16.msra.mxu0 0
      %1036 = vmatprep.subr.bf16.mxu0 0
      %1037 = vmatpush1.bf16.msra.mxu0 0
      %1038 = vmatprep.subr.bf16.mxu0 0
      %1039 = vmatpush1.bf16.msra.mxu0 0
      %1040 = vmatprep.mubr.bf16.mxu0 0
      %1041 = vmatmul.mubr.bf16.gmra.mrb[0].mxu0 %v1006
      %v1042 = vpop.f32.mrb[0].mxu0
      %v1043 = vadd.f32 0.0, %v1042
      %v1044 = vpop.f32.mrb[0].mxu0
      %v1045 = vpop.f32.mrb[0].mxu0
      %v1046 = vpop.f32.mrb[0].mxu0
      %1047 = vdwg.mxu0
      %v1048 = vmul.f32 %v1043, %v388
      %1050 = vrot.lane.b32.xlu0 %v1048, 48
      %v1051 = vpop.permute.xlu0 %1050
      %v1053 = vadd.f32 %v1002, %v1051
      %v1054 = vpack.c.bf16 %v998, %v998
      %v1055 = vpack.c.bf16 %v1053, %v1053
      %1057 = vrot.lane.b32.xlu0 %v1054, 112
      %v1058 = vpop.permute.xlu0 %1057
      %1060 = vrot.lane.b32.xlu0 %v1055, 80
      %v1061 = vpop.permute.xlu0 %1060
      %v1063 = vsel %vm404, %v1058, 0
      %v1066 = vsel %vm404, %v1061, 0
      %1068 = vmatprep.subr.bf16.mxu0 0
      %1069 = vmatpush1.bf16.xpose.msra.mxu0 %v1066
      %1070 = vmatprep.subr.bf16.mxu0 0
      %1071 = vmatpush1.bf16.xpose.msra.mxu0 0
      %1072 = vmatprep.subr.bf16.mxu0 0
      %1073 = vmatpush1.bf16.xpose.msra.mxu0 0
      %1074 = vmatprep.subr.bf16.mxu0 0
      %1075 = vmatpush1.bf16.xpose.msra.mxu0 0
      %1076 = vmatprep.subr.bf16.mxu0 0
      %1077 = vmatpush1.bf16.xpose.msra.mxu0 0
      %1078 = vmatprep.subr.bf16.mxu0 0
      %1079 = vmatpush1.bf16.xpose.msra.mxu0 0
      %1080 = vmatprep.subr.bf16.mxu0 0
      %1081 = vmatpush1.bf16.xpose.msra.mxu0 0
      %1082 = vmatprep.subr.bf16.mxu0 0
      %1083 = vmatpush1.bf16.xpose.msra.mxu0 0
      %1084 = vmatprep.subr.bf16.mxu0 0
      %1085 = vmatpush1.bf16.xpose.msra.mxu0 0
      %1086 = vmatprep.subr.bf16.mxu0 0
      %1087 = vmatpush1.bf16.xpose.msra.mxu0 0
      %1088 = vmatprep.subr.bf16.mxu0 0
      %1089 = vmatpush1.bf16.xpose.msra.mxu0 0
      %1090 = vmatprep.subr.bf16.mxu0 0
      %1091 = vmatpush1.bf16.xpose.msra.mxu0 0
      %1092 = vmatprep.subr.bf16.mxu0 0
      %1093 = vmatpush1.bf16.xpose.msra.mxu0 0
      %1094 = vmatprep.subr.bf16.mxu0 0
      %1095 = vmatpush1.bf16.xpose.msra.mxu0 0
      %1096 = vmatprep.subr.bf16.mxu0 0
      %1097 = vmatpush1.bf16.xpose.msra.mxu0 0
      %1098 = vmatprep.subr.bf16.mxu0 0
      %1099 = vmatpush1.bf16.xpose.msra.mxu0 0
      %1100 = vmatprep.mubr.bf16.mxu0 0
      %1101 = vmatmul.mubr.bf16.gmra.mrb[0].mxu0 %v1063
      %v1102 = vpop.f32.mrb[0].mxu0
      %v1103 = vadd.f32 0.0, %v1102
      %v1104 = vpop.f32.mrb[0].mxu0
      %v1105 = vpop.f32.mrb[0].mxu0
      %v1106 = vpop.f32.mrb[0].mxu0
      %1107 = vdwg.mxu0
      %v1108 = vmul.f32 %v1103, 0.35355338
      %v1109 = vsel %vm404, %v1108, -inf
      %1110 = vmax.xlane.f32.xlu0 %v1109
      %v1111 = vpop.xlane.xlu0 %1110
      %v1112 = vsub.f32 %v1108, %v1111
      %v1113 = vmul.f32 %v1112, 1.442695
      %v1114 = vpow.pop %v1113
      %v1115 = vsel %vm404, %v1114, 0.0
      %1116 = vadd.xlane.f32.xlu0 %v1115
      %v1117 = vpop.xlane.xlu0 %1116
      %v1118 = vrcp.pop %v1117
      %v1119 = vmul.f32 %v1114, %v1118
      %v1120 = vpack.c.bf16 %v1119, %v1119
      %1121 = vrot.lane.b32.xlu0 %v403, 48
      %v1122 = vpop.permute.xlu0 %1121
      %v1124 = vsel %vm404, %v1120, 0
      %v1127 = vsel %vm408, %v1122, 0
      %1129 = vmatprep.subr.bf16.mxu0 0
      %1130 = vmatpush1.bf16.msra.mxu0 %v1127
      %1131 = vmatprep.subr.bf16.mxu0 0
      %1132 = vmatpush1.bf16.msra.mxu0 0
      %1133 = vmatprep.subr.bf16.mxu0 0
      %1134 = vmatpush1.bf16.msra.mxu0 0
      %1135 = vmatprep.subr.bf16.mxu0 0
      %1136 = vmatpush1.bf16.msra.mxu0 0
      %1137 = vmatprep.subr.bf16.mxu0 0
      %1138 = vmatpush1.bf16.msra.mxu0 0
      %1139 = vmatprep.subr.bf16.mxu0 0
      %1140 = vmatpush1.bf16.msra.mxu0 0
      %1141 = vmatprep.subr.bf16.mxu0 0
      %1142 = vmatpush1.bf16.msra.mxu0 0
      %1143 = vmatprep.subr.bf16.mxu0 0
      %1144 = vmatpush1.bf16.msra.mxu0 0
      %1145 = vmatprep.subr.bf16.mxu0 0
      %1146 = vmatpush1.bf16.msra.mxu0 0
      %1147 = vmatprep.subr.bf16.mxu0 0
      %1148 = vmatpush1.bf16.msra.mxu0 0
      %1149 = vmatprep.subr.bf16.mxu0 0
      %1150 = vmatpush1.bf16.msra.mxu0 0
      %1151 = vmatprep.subr.bf16.mxu0 0
      %1152 = vmatpush1.bf16.msra.mxu0 0
      %1153 = vmatprep.subr.bf16.mxu0 0
      %1154 = vmatpush1.bf16.msra.mxu0 0
      %1155 = vmatprep.subr.bf16.mxu0 0
      %1156 = vmatpush1.bf16.msra.mxu0 0
      %1157 = vmatprep.subr.bf16.mxu0 0
      %1158 = vmatpush1.bf16.msra.mxu0 0
      %1159 = vmatprep.subr.bf16.mxu0 0
      %1160 = vmatpush1.bf16.msra.mxu0 0
      %1161 = vmatprep.mubr.bf16.mxu0 0
      %1162 = vmatmul.mubr.bf16.gmra.mrb[0].mxu0 %v1124
      %v1163 = vpop.f32.mrb[0].mxu0
      %v1164 = vadd.f32 0.0, %v1163
      %v1165 = vpop.f32.mrb[0].mxu0
      %v1166 = vpop.f32.mrb[0].mxu0
      %v1167 = vpop.f32.mrb[0].mxu0
      %1168 = vdwg.mxu0
      %v1169 = vpack.c.bf16 %v1164, %v1164
      %v1171 = vsel %vm404, %v1169, 0
      %v1174 = vsel %vm408, %v392, 0
      %1176 = vmatprep.subr.bf16.mxu0 0
      %1177 = vmatpush1.bf16.msra.mxu0 %v1174
      %1178 = vmatprep.subr.bf16.mxu0 0
      %1179 = vmatpush1.bf16.msra.mxu0 0
      %1180 = vmatprep.subr.bf16.mxu0 0
      %1181 = vmatpush1.bf16.msra.mxu0 0
      %1182 = vmatprep.subr.bf16.mxu0 0
      %1183 = vmatpush1.bf16.msra.mxu0 0
      %1184 = vmatprep.subr.bf16.mxu0 0
      %1185 = vmatpush1.bf16.msra.mxu0 0
      %1186 = vmatprep.subr.bf16.mxu0 0
      %1187 = vmatpush1.bf16.msra.mxu0 0
      %1188 = vmatprep.subr.bf16.mxu0 0
      %1189 = vmatpush1.bf16.msra.mxu0 0
      %1190 = vmatprep.subr.bf16.mxu0 0
      %1191 = vmatpush1.bf16.msra.mxu0 0
      %1192 = vmatprep.subr.bf16.mxu0 0
      %1193 = vmatpush1.bf16.msra.mxu0 0
      %1194 = vmatprep.subr.bf16.mxu0 0
      %1195 = vmatpush1.bf16.msra.mxu0 0
      %1196 = vmatprep.subr.bf16.mxu0 0
      %1197 = vmatpush1.bf16.msra.mxu0 0
      %1198 = vmatprep.subr.bf16.mxu0 0
      %1199 = vmatpush1.bf16.msra.mxu0 0
      %1200 = vmatprep.subr.bf16.mxu0 0
      %1201 = vmatpush1.bf16.msra.mxu0 0
      %1202 = vmatprep.subr.bf16.mxu0 0
      %1203 = vmatpush1.bf16.msra.mxu0 0
      %1204 = vmatprep.subr.bf16.mxu0 0
      %1205 = vmatpush1.bf16.msra.mxu0 0
      %1206 = vmatprep.subr.bf16.mxu0 0
      %1207 = vmatpush1.bf16.msra.mxu0 0
      %1208 = vmatprep.mubr.bf16.mxu0 0
      %1209 = vmatmul.mubr.bf16.gmra.mrb[0].mxu0 %v1171
      %v1210 = vpop.f32.mrb[0].mxu0
      %v1211 = vadd.f32 0.0, %v1210
      %v1212 = vpop.f32.mrb[0].mxu0
      %v1213 = vpop.f32.mrb[0].mxu0
      %v1214 = vpop.f32.mrb[0].mxu0
      %1215 = vdwg.mxu0
      %v1216 = vadd.f32 %v943, %v1211
      %1217 = vrot.lane.b32.xlu0 %v387, 24
      %v1218 = vpop.permute.xlu0 %1217
      %v1220 = vmul.f32 %v382, %v1218
      %1221 = vrot.lane.b32.xlu0 %v403, 104
      %v1222 = vpop.permute.xlu0 %1221
      %v1224 = vsel %vm404, %v1222, 0
      %1226 = vmatprep.subr.bf16.mxu0 0
      %1227 = vmatpush1.bf16.msra.mxu0 %v410
      %1228 = vmatprep.subr.bf16.mxu0 0
      %1229 = vmatpush1.bf16.msra.mxu0 0
      %1230 = vmatprep.subr.bf16.mxu0 0
      %1231 = vmatpush1.bf16.msra.mxu0 0
      %1232 = vmatprep.subr.bf16.mxu0 0
      %1233 = vmatpush1.bf16.msra.mxu0 0
      %1234 = vmatprep.subr.bf16.mxu0 0
      %1235 = vmatpush1.bf16.msra.mxu0 0
      %1236 = vmatprep.subr.bf16.mxu0 0
      %1237 = vmatpush1.bf16.msra.mxu0 0
      %1238 = vmatprep.subr.bf16.mxu0 0
      %1239 = vmatpush1.bf16.msra.mxu0 0
      %1240 = vmatprep.subr.bf16.mxu0 0
      %1241 = vmatpush1.bf16.msra.mxu0 0
      %1242 = vmatprep.subr.bf16.mxu0 0
      %1243 = vmatpush1.bf16.msra.mxu0 0
      %1244 = vmatprep.subr.bf16.mxu0 0
      %1245 = vmatpush1.bf16.msra.mxu0 0
      %1246 = vmatprep.subr.bf16.mxu0 0
      %1247 = vmatpush1.bf16.msra.mxu0 0
      %1248 = vmatprep.subr.bf16.mxu0 0
      %1249 = vmatpush1.bf16.msra.mxu0 0
      %1250 = vmatprep.subr.bf16.mxu0 0
      %1251 = vmatpush1.bf16.msra.mxu0 0
      %1252 = vmatprep.subr.bf16.mxu0 0
      %1253 = vmatpush1.bf16.msra.mxu0 0
      %1254 = vmatprep.subr.bf16.mxu0 0
      %1255 = vmatpush1.bf16.msra.mxu0 0
      %1256 = vmatprep.subr.bf16.mxu0 0
      %1257 = vmatpush1.bf16.msra.mxu0 0
      %1258 = vmatprep.mubr.bf16.mxu0 0
      %1259 = vmatmul.mubr.bf16.gmra.mrb[0].mxu0 %v1224
      %v1260 = vpop.f32.mrb[0].mxu0
      %v1261 = vadd.f32 0.0, %v1260
      %v1262 = vpop.f32.mrb[0].mxu0
      %v1263 = vpop.f32.mrb[0].mxu0
      %v1264 = vpop.f32.mrb[0].mxu0
      %1265 = vdwg.mxu0
      %v1266 = vmul.f32 %v1261, %v388
      %1268 = vrot.lane.b32.xlu0 %v1266, 24
      %v1269 = vpop.permute.xlu0 %1268
      %v1271 = vadd.f32 %v1220, %v1269
      %1272 = vrot.lane.b32.xlu0 %v387, 56
      %v1273 = vpop.permute.xlu0 %1272
      %v1275 = vmul.f32 %v382, %v1273
      %1276 = vrot.lane.b32.xlu0 %v403, 72
      %v1277 = vpop.permute.xlu0 %1276
      %v1279 = vsel %vm404, %v1277, 0
      %1281 = vmatprep.subr.bf16.mxu0 0
      %1282 = vmatpush1.bf16.msra.mxu0 %v410
      %1283 = vmatprep.subr.bf16.mxu0 0
      %1284 = vmatpush1.bf16.msra.mxu0 0
      %1285 = vmatprep.subr.bf16.mxu0 0
      %1286 = vmatpush1.bf16.msra.mxu0 0
      %1287 = vmatprep.subr.bf16.mxu0 0
      %1288 = vmatpush1.bf16.msra.mxu0 0
      %1289 = vmatprep.subr.bf16.mxu0 0
      %1290 = vmatpush1.bf16.msra.mxu0 0
      %1291 = vmatprep.subr.bf16.mxu0 0
      %1292 = vmatpush1.bf16.msra.mxu0 0
      %1293 = vmatprep.subr.bf16.mxu0 0
      %1294 = vmatpush1.bf16.msra.mxu0 0
      %1295 = vmatprep.subr.bf16.mxu0 0
      %1296 = vmatpush1.bf16.msra.mxu0 0
      %1297 = vmatprep.subr.bf16.mxu0 0
      %1298 = vmatpush1.bf16.msra.mxu0 0
      %1299 = vmatprep.subr.bf16.mxu0 0
      %1300 = vmatpush1.bf16.msra.mxu0 0
      %1301 = vmatprep.subr.bf16.mxu0 0
      %1302 = vmatpush1.bf16.msra.mxu0 0
      %1303 = vmatprep.subr.bf16.mxu0 0
      %1304 = vmatpush1.bf16.msra.mxu0 0
      %1305 = vmatprep.subr.bf16.mxu0 0
      %1306 = vmatpush1.bf16.msra.mxu0 0
      %1307 = vmatprep.subr.bf16.mxu0 0
      %1308 = vmatpush1.bf16.msra.mxu0 0
      %1309 = vmatprep.subr.bf16.mxu0 0
      %1310 = vmatpush1.bf16.msra.mxu0 0
      %1311 = vmatprep.subr.bf16.mxu0 0
      %1312 = vmatpush1.bf16.msra.mxu0 0
      %1313 = vmatprep.mubr.bf16.mxu0 0
      %1314 = vmatmul.mubr.bf16.gmra.mrb[0].mxu0 %v1279
      %v1315 = vpop.f32.mrb[0].mxu0
      %v1316 = vadd.f32 0.0, %v1315
      %v1317 = vpop.f32.mrb[0].mxu0
      %v1318 = vpop.f32.mrb[0].mxu0
      %v1319 = vpop.f32.mrb[0].mxu0
      %1320 = vdwg.mxu0
      %v1321 = vmul.f32 %v1316, %v388
      %1323 = vrot.lane.b32.xlu0 %v1321, 56
      %v1324 = vpop.permute.xlu0 %1323
      %v1326 = vadd.f32 %v1275, %v1324
      %v1327 = vpack.c.bf16 %v1271, %v1271
      %v1328 = vpack.c.bf16 %v1326, %v1326
      %1330 = vrot.lane.b32.xlu0 %v1327, 104
      %v1331 = vpop.permute.xlu0 %1330
      %1333 = vrot.lane.b32.xlu0 %v1328, 72
      %v1334 = vpop.permute.xlu0 %1333
      %v1336 = vsel %vm404, %v1331, 0
      %v1339 = vsel %vm404, %v1334, 0
      %1341 = vmatprep.subr.bf16.mxu0 0
      %1342 = vmatpush1.bf16.xpose.msra.mxu0 %v1339
      %1343 = vmatprep.subr.bf16.mxu0 0
      %1344 = vmatpush1.bf16.xpose.msra.mxu0 0
      %1345 = vmatprep.subr.bf16.mxu0 0
      %1346 = vmatpush1.bf16.xpose.msra.mxu0 0
      %1347 = vmatprep.subr.bf16.mxu0 0
      %1348 = vmatpush1.bf16.xpose.msra.mxu0 0
      %1349 = vmatprep.subr.bf16.mxu0 0
      %1350 = vmatpush1.bf16.xpose.msra.mxu0 0
      %1351 = vmatprep.subr.bf16.mxu0 0
      %1352 = vmatpush1.bf16.xpose.msra.mxu0 0
      %1353 = vmatprep.subr.bf16.mxu0 0
      %1354 = vmatpush1.bf16.xpose.msra.mxu0 0
      %1355 = vmatprep.subr.bf16.mxu0 0
      %1356 = vmatpush1.bf16.xpose.msra.mxu0 0
      %1357 = vmatprep.subr.bf16.mxu0 0
      %1358 = vmatpush1.bf16.xpose.msra.mxu0 0
      %1359 = vmatprep.subr.bf16.mxu0 0
      %1360 = vmatpush1.bf16.xpose.msra.mxu0 0
      %1361 = vmatprep.subr.bf16.mxu0 0
      %1362 = vmatpush1.bf16.xpose.msra.mxu0 0
      %1363 = vmatprep.subr.bf16.mxu0 0
      %1364 = vmatpush1.bf16.xpose.msra.mxu0 0
      %1365 = vmatprep.subr.bf16.mxu0 0
      %1366 = vmatpush1.bf16.xpose.msra.mxu0 0
      %1367 = vmatprep.subr.bf16.mxu0 0
      %1368 = vmatpush1.bf16.xpose.msra.mxu0 0
      %1369 = vmatprep.subr.bf16.mxu0 0
      %1370 = vmatpush1.bf16.xpose.msra.mxu0 0
      %1371 = vmatprep.subr.bf16.mxu0 0
      %1372 = vmatpush1.bf16.xpose.msra.mxu0 0
      %1373 = vmatprep.mubr.bf16.mxu0 0
      %1374 = vmatmul.mubr.bf16.gmra.mrb[0].mxu0 %v1336
      %v1375 = vpop.f32.mrb[0].mxu0
      %v1376 = vadd.f32 0.0, %v1375
      %v1377 = vpop.f32.mrb[0].mxu0
      %v1378 = vpop.f32.mrb[0].mxu0
      %v1379 = vpop.f32.mrb[0].mxu0
      %1380 = vdwg.mxu0
      %v1381 = vmul.f32 %v1376, 0.35355338
      %v1382 = vsel %vm404, %v1381, -inf
      %1383 = vmax.xlane.f32.xlu0 %v1382
      %v1384 = vpop.xlane.xlu0 %1383
      %v1385 = vsub.f32 %v1381, %v1384
      %v1386 = vmul.f32 %v1385, 1.442695
      %v1387 = vpow.pop %v1386
      %v1388 = vsel %vm404, %v1387, 0.0
      %1389 = vadd.xlane.f32.xlu0 %v1388
      %v1390 = vpop.xlane.xlu0 %1389
      %v1391 = vrcp.pop %v1390
      %v1392 = vmul.f32 %v1387, %v1391
      %v1393 = vpack.c.bf16 %v1392, %v1392
      %1394 = vrot.lane.b32.xlu0 %v403, 40
      %v1395 = vpop.permute.xlu0 %1394
      %v1397 = vsel %vm404, %v1393, 0
      %v1400 = vsel %vm408, %v1395, 0
      %1402 = vmatprep.subr.bf16.mxu0 0
      %1403 = vmatpush1.bf16.msra.mxu0 %v1400
      %1404 = vmatprep.subr.bf16.mxu0 0
      %1405 = vmatpush1.bf16.msra.mxu0 0
      %1406 = vmatprep.subr.bf16.mxu0 0
      %1407 = vmatpush1.bf16.msra.mxu0 0
      %1408 = vmatprep.subr.bf16.mxu0 0
      %1409 = vmatpush1.bf16.msra.mxu0 0
      %1410 = vmatprep.subr.bf16.mxu0 0
      %1411 = vmatpush1.bf16.msra.mxu0 0
      %1412 = vmatprep.subr.bf16.mxu0 0
      %1413 = vmatpush1.bf16.msra.mxu0 0
      %1414 = vmatprep.subr.bf16.mxu0 0
      %1415 = vmatpush1.bf16.msra.mxu0 0
      %1416 = vmatprep.subr.bf16.mxu0 0
      %1417 = vmatpush1.bf16.msra.mxu0 0
      %1418 = vmatprep.subr.bf16.mxu0 0
      %1419 = vmatpush1.bf16.msra.mxu0 0
      %1420 = vmatprep.subr.bf16.mxu0 0
      %1421 = vmatpush1.bf16.msra.mxu0 0
      %1422 = vmatprep.subr.bf16.mxu0 0
      %1423 = vmatpush1.bf16.msra.mxu0 0
      %1424 = vmatprep.subr.bf16.mxu0 0
      %1425 = vmatpush1.bf16.msra.mxu0 0
      %1426 = vmatprep.subr.bf16.mxu0 0
      %1427 = vmatpush1.bf16.msra.mxu0 0
      %1428 = vmatprep.subr.bf16.mxu0 0
      %1429 = vmatpush1.bf16.msra.mxu0 0
      %1430 = vmatprep.subr.bf16.mxu0 0
      %1431 = vmatpush1.bf16.msra.mxu0 0
      %1432 = vmatprep.subr.bf16.mxu0 0
      %1433 = vmatpush1.bf16.msra.mxu0 0
      %1434 = vmatprep.mubr.bf16.mxu0 0
      %1435 = vmatmul.mubr.bf16.gmra.mrb[0].mxu0 %v1397
      %v1436 = vpop.f32.mrb[0].mxu0
      %v1437 = vadd.f32 0.0, %v1436
      %v1438 = vpop.f32.mrb[0].mxu0
      %v1439 = vpop.f32.mrb[0].mxu0
      %v1440 = vpop.f32.mrb[0].mxu0
      %1441 = vdwg.mxu0
      %v1442 = vpack.c.bf16 %v1437, %v1437
      %v1444 = vsel %vm404, %v1442, 0
      %v1447 = vsel %vm408, %v393, 0
      %1449 = vmatprep.subr.bf16.mxu0 0
      %1450 = vmatpush1.bf16.msra.mxu0 %v1447
      %1451 = vmatprep.subr.bf16.mxu0 0
      %1452 = vmatpush1.bf16.msra.mxu0 0
      %1453 = vmatprep.subr.bf16.mxu0 0
      %1454 = vmatpush1.bf16.msra.mxu0 0
      %1455 = vmatprep.subr.bf16.mxu0 0
      %1456 = vmatpush1.bf16.msra.mxu0 0
      %1457 = vmatprep.subr.bf16.mxu0 0
      %1458 = vmatpush1.bf16.msra.mxu0 0
      %1459 = vmatprep.subr.bf16.mxu0 0
      %1460 = vmatpush1.bf16.msra.mxu0 0
      %1461 = vmatprep.subr.bf16.mxu0 0
      %1462 = vmatpush1.bf16.msra.mxu0 0
      %1463 = vmatprep.subr.bf16.mxu0 0
      %1464 = vmatpush1.bf16.msra.mxu0 0
      %1465 = vmatprep.subr.bf16.mxu0 0
      %1466 = vmatpush1.bf16.msra.mxu0 0
      %1467 = vmatprep.subr.bf16.mxu0 0
      %1468 = vmatpush1.bf16.msra.mxu0 0
      %1469 = vmatprep.subr.bf16.mxu0 0
      %1470 = vmatpush1.bf16.msra.mxu0 0
      %1471 = vmatprep.subr.bf16.mxu0 0
      %1472 = vmatpush1.bf16.msra.mxu0 0
      %1473 = vmatprep.subr.bf16.mxu0 0
      %1474 = vmatpush1.bf16.msra.mxu0 0
      %1475 = vmatprep.subr.bf16.mxu0 0
      %1476 = vmatpush1.bf16.msra.mxu0 0
      %1477 = vmatprep.subr.bf16.mxu0 0
      %1478 = vmatpush1.bf16.msra.mxu0 0
      %1479 = vmatprep.subr.bf16.mxu0 0
      %1480 = vmatpush1.bf16.msra.mxu0 0
      %1481 = vmatprep.mubr.bf16.mxu0 0
      %1482 = vmatmul.mubr.bf16.gmra.mrb[0].mxu0 %v1444
      %v1483 = vpop.f32.mrb[0].mxu0
      %v1484 = vadd.f32 0.0, %v1483
      %v1485 = vpop.f32.mrb[0].mxu0
      %v1486 = vpop.f32.mrb[0].mxu0
      %v1487 = vpop.f32.mrb[0].mxu0
      %1488 = vdwg.mxu0
      %v1489 = vadd.f32 %v1216, %v1484
      %1490 = vst.msk [vmem:[%s300] sm:$0xff] %vm304, %v1489
      %p1491 = scmp.lt.s32.totalorder %s19, 1
      %s1492 = scalar_select %p1491, %s19, 1
      %s1493 = smul.addr %s1492, 8
      %s1494 = scalar_lea.vmem %s8, %s1493
      // Predicated region
      $region53: #{collapsing_transformer_forward.6} parent=51 // pred_check
        %p1495 = pneg %p210
      $region54: #{collapsing_transformer_forward.6} parent=51 // pred_check_branch
        %1497 = sbr.rel (%p1495) target = $region56
      $region55: #{collapsing_transformer_forward.6} parent=51 // pred_region
        _
      $region56: #{collapsing_transformer_forward.6} parent=51 // pred_fallthru
        _
    $region52: #{collapsing_transformer_forward.6} parent=5 // pred_fallthru
      _
    %p1498 = scmp.le.s32.totalorder 2, %s14
    // Predicated region
    $region57: #{collapsing_transformer_forward.6} parent=5 // pred_check
      %p1499 = pneg %p1498
    $region58: #{collapsing_transformer_forward.6} parent=5 // pred_check_branch
      %1501 = sbr.rel (%p1499) target = $region60
    $region59: #{collapsing_transformer_forward.6} parent=5 // pred_region
      %s1502 = ssub.s32 %s14, 2
      // Predicated region
      $region61: #{collapsing_transformer_forward.6} parent=59 // pred_check
        %p1503 = pneg %p216
      $region62: #{collapsing_transformer_forward.6} parent=59 // pred_check_branch
        %1505 = sbr.rel (%p1503) target = $region64
      $region63: #{collapsing_transformer_forward.6} parent=59 // pred_region
        %p1506 = scmp.lt.s32.totalorder %s20, 1
        %s1507 = scalar_select %p1506, %s20, 1
        %s1508 = smul.addr %s1507, 8
        %s1509 = scalar_lea.vmem %s8, %s1508
      $region64: #{collapsing_transformer_forward.6} parent=59 // pred_fallthru
        _
    $region60: #{collapsing_transformer_forward.6} parent=5 // pred_fallthru
      _
  $region6: #{collapsing_transformer_forward.6} parent=0 // loop_footer
    %s18 = sadd.s32 1, %s14
  $region7: #{collapsing_transformer_forward.6} parent=0 // loop_footer_branch
    %13 = sbr.rel target = $region3
  $region8: #{collapsing_transformer_forward.6} parent=0 // loop_exit
    _

// kernel: collapsing_transformer_forward.11
$region0: #{collapsing_transformer_forward.11}
  #allocation0 [shape = 'u32[]', space=smem, size = 0x4, offset = 0x4, fixed_abs, tag = 'smem constant byte address 0x4 - core index']
  #allocation1 [shape = 'u32[144,128]{1,0:T(1,128)}', space=vmem, size = 0x12000, scoped, tag = 'internal scratch']
  %s0 = inlined_call_operand.vmem [shape: f32[2,8,32], index: 0, kind: input, shape index: {}]
  %s1 = inlined_call_operand.vmem [shape: f32[2,1,32], index: 1, kind: input, shape index: {}]
  %s2 = inlined_call_operand.vmem [shape: f32[2,1,32], index: 2, kind: input, shape index: {}]
  %s3 = inlined_call_operand.vmem [shape: bf16[32,96], index: 3, kind: input, shape index: {}]
  %s4 = inlined_call_operand.vmem [shape: f32[1,96], index: 4, kind: input, shape index: {}]
  %s5 = inlined_call_operand.vmem [shape: bf16[32,32], index: 5, kind: input, shape index: {}]
  %s6 = inlined_call_operand.vmem [shape: f32[1,32], index: 6, kind: input, shape index: {}]
  %s7 = inlined_call_operand.vmem [shape: bf16[32,32], index: 7, kind: input, shape index: {}]
  %s8 = inlined_call_operand.vmem [shape: f32[1,32], index: 8, kind: input, shape index: {}]
  %s9 = inlined_call_operand.hbm [shape: f32[2,1,32], index: 9, kind: output, shape index: {}]
  %s10 = sld [smem:[#allocation0]]
  $region69: #{collapsing_transformer_forward.11} parent=0
    _
  %s12 = ssub.s32 1, %s10
  %s13 = scalar_select 0, %s12, %s10
  $region1: #{collapsing_transformer_forward.11} parent=0
    #allocation2 [shape = 'u8[1024]{0}', space=vmem, size = 0x400, scoped, tag = 'output window, operand 0']
    #allocation3 [shape = 's32[2]{0}', space=sflag, size = 0x8, scoped, tag = 'scoped memory for collapsing_transformer_forward.11']
    %14 = vsyncpa [#allocation3], 0
    %s15 = scalar_lea.sflag [#allocation3], 1
    %16 = vsyncpa %s15, 0
    loop: start=0, step=1, limit=4
    $region2: #{collapsing_transformer_forward.11} parent=1 // loop_pre_header
      _
    $region3: #{collapsing_transformer_forward.11} parent=1 // loop_header
      %s18 = sphi 0, %s22
      %p19 = scmp.ge.s32.totalorder %s18, 4
      %s28 = sphi 0, %s30
      %s31 = sphi 0, %s28
      %s32 = sphi 0, %s31
      %s48 = sphi 0, %s32
      %s54 = sphi 0, %s56
      %s57 = sphi 0, %s54
      %s58 = sphi 0, %s57
      %s74 = sphi 0, %s58
      %s80 = sphi 0, %s82
      %s83 = sphi 0, %s80
      %s84 = sphi 0, %s83
      %s100 = sphi 0, %s84
      %s104 = sphi 0, %s104
      %s106 = sphi 0, %s104
      %s107 = sphi 0, %s106
      %s121 = sphi 0, %s107
      %s125 = sphi 0, %s125
      %s127 = sphi 0, %s125
      %s128 = sphi 0, %s127
      %s142 = sphi 0, %s128
      %s146 = sphi 0, %s146
      %s148 = sphi 0, %s146
      %s149 = sphi 0, %s148
      %s163 = sphi 0, %s149
      %s167 = sphi 0, %s167
      %s169 = sphi 0, %s167
      %s170 = sphi 0, %s169
      %s184 = sphi 0, %s170
      %s188 = sphi 0, %s188
      %s190 = sphi 0, %s188
      %s191 = sphi 0, %s190
      %s205 = sphi 0, %s191
      %s209 = sphi 0, %s209
      %s211 = sphi 0, %s209
      %s212 = sphi 0, %s211
      %s226 = sphi 0, %s212
      %s232 = sphi 0, %s234
      %s235 = sphi 0, %s232
      %s236 = sphi 0, %s235
      %s252 = sphi 0, %s236
    $region4: #{collapsing_transformer_forward.11} parent=1 // loop_header_branch
      %21 = sbr.rel (%p19) target = $region8
    $region5: #{collapsing_transformer_forward.11} parent=1 // loop_body
      %s23 = ssub.s32 %s18, 1
      %s24 = ssub.s32 %s18, 2
      %s25 = sadd.s32 %s18, 1
      %s26 = ssub.s32 %s18, %s25
      %p27 = scmp.eq.s32.totalorder %s26, 0
      %s29 = sadd.s32 %s28, 1
      %s30 = scalar_select %p27, %s28, %s29
      %p33 = pneg %p27
      %p34 = scmp.eq.s32.totalorder %s18, 1
      %p35 = por %p33, %p34
      %p36 = scmp.ne.s32.totalorder %s28, %s31
      %p37 = scmp.eq.s32.totalorder %s18, 0
      %p38 = por %p36, %p37
      %p39 = scmp.ne.s32.totalorder %s28, %s31
      %p40 = scmp.eq.s32.totalorder %s23, 1
      %p41 = por %p39, %p40
      %p42 = scmp.ne.s32.totalorder %s31, %s32
      %p43 = scmp.eq.s32.totalorder %s23, 0
      %p44 = por %p42, %p43
      %p45 = scmp.ne.s32.totalorder %s31, %s32
      %p46 = scmp.eq.s32.totalorder %s24, 1
      %p47 = por %p45, %p46
      %p49 = scmp.ne.s32.totalorder %s32, %s48
      %p50 = scmp.eq.s32.totalorder %s24, 0
      %p51 = por %p49, %p50
      %s52 = ssub.s32 %s18, %s25
      %p53 = scmp.eq.s32.totalorder %s52, 0
      %s55 = sadd.s32 %s54, 1
      %s56 = scalar_select %p53, %s54, %s55
      %p59 = pneg %p53
      %p60 = scmp.eq.s32.totalorder %s18, 1
      %p61 = por %p59, %p60
      %p62 = scmp.ne.s32.totalorder %s54, %s57
      %p63 = scmp.eq.s32.totalorder %s18, 0
      %p64 = por %p62, %p63
      %p65 = scmp.ne.s32.totalorder %s54, %s57
      %p66 = scmp.eq.s32.totalorder %s23, 1
      %p67 = por %p65, %p66
      %p68 = scmp.ne.s32.totalorder %s57, %s58
      %p69 = scmp.eq.s32.totalorder %s23, 0
      %p70 = por %p68, %p69
      %p71 = scmp.ne.s32.totalorder %s57, %s58
      %p72 = scmp.eq.s32.totalorder %s24, 1
      %p73 = por %p71, %p72
      %p75 = scmp.ne.s32.totalorder %s58, %s74
      %p76 = scmp.eq.s32.totalorder %s24, 0
      %p77 = por %p75, %p76
      %s78 = ssub.s32 %s18, %s25
      %p79 = scmp.eq.s32.totalorder %s78, 0
      %s81 = sadd.s32 %s80, 1
      %s82 = scalar_select %p79, %s80, %s81
      %p85 = pneg %p79
      %p86 = scmp.eq.s32.totalorder %s18, 1
      %p87 = por %p85, %p86
      %p88 = scmp.ne.s32.totalorder %s80, %s83
      %p89 = scmp.eq.s32.totalorder %s18, 0
      %p90 = por %p88, %p89
      %p91 = scmp.ne.s32.totalorder %s80, %s83
      %p92 = scmp.eq.s32.totalorder %s23, 1
      %p93 = por %p91, %p92
      %p94 = scmp.ne.s32.totalorder %s83, %s84
      %p95 = scmp.eq.s32.totalorder %s23, 0
      %p96 = por %p94, %p95
      %p97 = scmp.ne.s32.totalorder %s83, %s84
      %p98 = scmp.eq.s32.totalorder %s24, 1
      %p99 = por %p97, %p98
      %p101 = scmp.ne.s32.totalorder %s84, %s100
      %p102 = scmp.eq.s32.totalorder %s24, 0
      %p103 = por %p101, %p102
      %s105 = sadd.s32 %s104, 1
      %p108 = scmp.eq.s32.totalorder %s18, 1
      %p109 = scmp.ne.s32.totalorder %s104, %s106
      %p110 = scmp.eq.s32.totalorder %s18, 0
      %p111 = por %p109, %p110
      %p112 = scmp.ne.s32.totalorder %s104, %s106
      %p113 = scmp.eq.s32.totalorder %s23, 1
      %p114 = por %p112, %p113
      %p115 = scmp.ne.s32.totalorder %s106, %s107
      %p116 = scmp.eq.s32.totalorder %s23, 0
      %p117 = por %p115, %p116
      %p118 = scmp.ne.s32.totalorder %s106, %s107
      %p119 = scmp.eq.s32.totalorder %s24, 1
      %p120 = por %p118, %p119
      %p122 = scmp.ne.s32.totalorder %s107, %s121
      %p123 = scmp.eq.s32.totalorder %s24, 0
      %p124 = por %p122, %p123
      %s126 = sadd.s32 %s125, 1
      %p129 = scmp.eq.s32.totalorder %s18, 1
      %p130 = scmp.ne.s32.totalorder %s125, %s127
      %p131 = scmp.eq.s32.totalorder %s18, 0
      %p132 = por %p130, %p131
      %p133 = scmp.ne.s32.totalorder %s125, %s127
      %p134 = scmp.eq.s32.totalorder %s23, 1
      %p135 = por %p133, %p134
      %p136 = scmp.ne.s32.totalorder %s127, %s128
      %p137 = scmp.eq.s32.totalorder %s23, 0
      %p138 = por %p136, %p137
      %p139 = scmp.ne.s32.totalorder %s127, %s128
      %p140 = scmp.eq.s32.totalorder %s24, 1
      %p141 = por %p139, %p140
      %p143 = scmp.ne.s32.totalorder %s128, %s142
      %p144 = scmp.eq.s32.totalorder %s24, 0
      %p145 = por %p143, %p144
      %s147 = sadd.s32 %s146, 1
      %p150 = scmp.eq.s32.totalorder %s18, 1
      %p151 = scmp.ne.s32.totalorder %s146, %s148
      %p152 = scmp.eq.s32.totalorder %s18, 0
      %p153 = por %p151, %p152
      %p154 = scmp.ne.s32.totalorder %s146, %s148
      %p155 = scmp.eq.s32.totalorder %s23, 1
      %p156 = por %p154, %p155
      %p157 = scmp.ne.s32.totalorder %s148, %s149
      %p158 = scmp.eq.s32.totalorder %s23, 0
      %p159 = por %p157, %p158
      %p160 = scmp.ne.s32.totalorder %s148, %s149
      %p161 = scmp.eq.s32.totalorder %s24, 1
      %p162 = por %p160, %p161
      %p164 = scmp.ne.s32.totalorder %s149, %s163
      %p165 = scmp.eq.s32.totalorder %s24, 0
      %p166 = por %p164, %p165
      %s168 = sadd.s32 %s167, 1
      %p171 = scmp.eq.s32.totalorder %s18, 1
      %p172 = scmp.ne.s32.totalorder %s167, %s169
      %p173 = scmp.eq.s32.totalorder %s18, 0
      %p174 = por %p172, %p173
      %p175 = scmp.ne.s32.totalorder %s167, %s169
      %p176 = scmp.eq.s32.totalorder %s23, 1
      %p177 = por %p175, %p176
      %p178 = scmp.ne.s32.totalorder %s169, %s170
      %p179 = scmp.eq.s32.totalorder %s23, 0
      %p180 = por %p178, %p179
      %p181 = scmp.ne.s32.totalorder %s169, %s170
      %p182 = scmp.eq.s32.totalorder %s24, 1
      %p183 = por %p181, %p182
      %p185 = scmp.ne.s32.totalorder %s170, %s184
      %p186 = scmp.eq.s32.totalorder %s24, 0
      %p187 = por %p185, %p186
      %s189 = sadd.s32 %s188, 1
      %p192 = scmp.eq.s32.totalorder %s18, 1
      %p193 = scmp.ne.s32.totalorder %s188, %s190
      %p194 = scmp.eq.s32.totalorder %s18, 0
      %p195 = por %p193, %p194
      %p196 = scmp.ne.s32.totalorder %s188, %s190
      %p197 = scmp.eq.s32.totalorder %s23, 1
      %p198 = por %p196, %p197
      %p199 = scmp.ne.s32.totalorder %s190, %s191
      %p200 = scmp.eq.s32.totalorder %s23, 0
      %p201 = por %p199, %p200
      %p202 = scmp.ne.s32.totalorder %s190, %s191
      %p203 = scmp.eq.s32.totalorder %s24, 1
      %p204 = por %p202, %p203
      %p206 = scmp.ne.s32.totalorder %s191, %s205
      %p207 = scmp.eq.s32.totalorder %s24, 0
      %p208 = por %p206, %p207
      %s210 = sadd.s32 %s209, 1
      %p213 = scmp.eq.s32.totalorder %s18, 1
      %p214 = scmp.ne.s32.totalorder %s209, %s211
      %p215 = scmp.eq.s32.totalorder %s18, 0
      %p216 = por %p214, %p215
      %p217 = scmp.ne.s32.totalorder %s209, %s211
      %p218 = scmp.eq.s32.totalorder %s23, 1
      %p219 = por %p217, %p218
      %p220 = scmp.ne.s32.totalorder %s211, %s212
      %p221 = scmp.eq.s32.totalorder %s23, 0
      %p222 = por %p220, %p221
      %p223 = scmp.ne.s32.totalorder %s211, %s212
      %p224 = scmp.eq.s32.totalorder %s24, 1
      %p225 = por %p223, %p224
      %p227 = scmp.ne.s32.totalorder %s212, %s226
      %p228 = scmp.eq.s32.totalorder %s24, 0
      %p229 = por %p227, %p228
      %s230 = ssub.s32 %s18, %s25
      %p231 = scmp.eq.s32.totalorder %s230, 0
      %s233 = sadd.s32 %s232, 1
      %s234 = scalar_select %p231, %s232, %s233
      %p237 = pneg %p231
      %p238 = scmp.eq.s32.totalorder %s18, 1
      %p239 = por %p237, %p238
      %p240 = scmp.ne.s32.totalorder %s232, %s235
      %p241 = scmp.eq.s32.totalorder %s18, 0
      %p242 = por %p240, %p241
      %p243 = scmp.ne.s32.totalorder %s232, %s235
      %p244 = scmp.eq.s32.totalorder %s23, 1
      %p245 = por %p243, %p244
      %p246 = scmp.ne.s32.totalorder %s235, %s236
      %p247 = scmp.eq.s32.totalorder %s23, 0
      %p248 = por %p246, %p247
      %p249 = scmp.ne.s32.totalorder %s235, %s236
      %p250 = scmp.eq.s32.totalorder %s24, 1
      %p251 = por %p249, %p250
      %p253 = scmp.ne.s32.totalorder %s236, %s252
      %p254 = scmp.eq.s32.totalorder %s24, 0
      %p255 = por %p253, %p254
      %p256 = scmp.le.s32.totalorder 1, %s18
      %p257 = scmp.lt.s32.totalorder %s18, 3
      %p258 = pnand %p256, %p257
      %p259 = pneg %p258
      // Predicated region
      $region9: #{collapsing_transformer_forward.11} parent=5 // pred_check
        _
      $region10: #{collapsing_transformer_forward.11} parent=5 // pred_check_branch
        %261 = sbr.rel (%p258) target = $region12
      $region11: #{collapsing_transformer_forward.11} parent=5 // pred_region
        %s262 = ssub.s32 %s18, 1
        // Predicated region
        $region13: #{collapsing_transformer_forward.11} parent=11 // pred_check
          %p263 = pneg %p117
        $region14: #{collapsing_transformer_forward.11} parent=11 // pred_check_branch
          %265 = sbr.rel (%p263) target = $region16
        $region15: #{collapsing_transformer_forward.11} parent=11 // pred_region
          _
        $region16: #{collapsing_transformer_forward.11} parent=11 // pred_fallthru
          _
        // Predicated region
        $region17: #{collapsing_transformer_forward.11} parent=11 // pred_check
          %p266 = pneg %p138
        $region18: #{collapsing_transformer_forward.11} parent=11 // pred_check_branch
          %268 = sbr.rel (%p266) target = $region20
        $region19: #{collapsing_transformer_forward.11} parent=11 // pred_region
          _
        $region20: #{collapsing_transformer_forward.11} parent=11 // pred_fallthru
          _
        // Predicated region
        $region21: #{collapsing_transformer_forward.11} parent=11 // pred_check
          %p269 = pneg %p159
        $region22: #{collapsing_transformer_forward.11} parent=11 // pred_check_branch
          %271 = sbr.rel (%p269) target = $region24
        $region23: #{collapsing_transformer_forward.11} parent=11 // pred_region
          _
        $region24: #{collapsing_transformer_forward.11} parent=11 // pred_fallthru
          _
        // Predicated region
        $region25: #{collapsing_transformer_forward.11} parent=11 // pred_check
          %p272 = pneg %p180
        $region26: #{collapsing_transformer_forward.11} parent=11 // pred_check_branch
          %274 = sbr.rel (%p272) target = $region28
        $region27: #{collapsing_transformer_forward.11} parent=11 // pred_region
          _
        $region28: #{collapsing_transformer_forward.11} parent=11 // pred_fallthru
          _
        // Predicated region
        $region29: #{collapsing_transformer_forward.11} parent=11 // pred_check
          %p275 = pneg %p201
        $region30: #{collapsing_transformer_forward.11} parent=11 // pred_check_branch
          %277 = sbr.rel (%p275) target = $region32
        $region31: #{collapsing_transformer_forward.11} parent=11 // pred_region
          _
        $region32: #{collapsing_transformer_forward.11} parent=11 // pred_fallthru
          _
        // Predicated region
        $region33: #{collapsing_transformer_forward.11} parent=11 // pred_check
          %p278 = pneg %p222
        $region34: #{collapsing_transformer_forward.11} parent=11 // pred_check_branch
          %280 = sbr.rel (%p278) target = $region36
        $region35: #{collapsing_transformer_forward.11} parent=11 // pred_region
          _
        $region36: #{collapsing_transformer_forward.11} parent=11 // pred_fallthru
          _
      $region12: #{collapsing_transformer_forward.11} parent=5 // pred_fallthru
        _
      %p281 = scmp.lt.s32.totalorder %s18, 2
      // Predicated region
      $region37: #{collapsing_transformer_forward.11} parent=5 // pred_check
        %p282 = pneg %p281
      $region38: #{collapsing_transformer_forward.11} parent=5 // pred_check_branch
        %284 = sbr.rel (%p282) target = $region40
      $region39: #{collapsing_transformer_forward.11} parent=5 // pred_region
        // Predicated region
        $region41: #{collapsing_transformer_forward.11} parent=39 // pred_check
          %p285 = pneg %p38
        $region42: #{collapsing_transformer_forward.11} parent=39 // pred_check_branch
          %287 = sbr.rel (%p285) target = $region44
        $region43: #{collapsing_transformer_forward.11} parent=39 // pred_region
          %p288 = scmp.lt.s32.totalorder %s18, 1
          %s289 = scalar_select %p288, %s18, 1
          %s290 = smul.addr %s289, 8
          %s291 = scalar_lea.vmem %s0, %s290
        $region44: #{collapsing_transformer_forward.11} parent=39 // pred_fallthru
          _
        // Predicated region
        $region45: #{collapsing_transformer_forward.11} parent=39 // pred_check
          %p292 = pneg %p64
        $region46: #{collapsing_transformer_forward.11} parent=39 // pred_check_branch
          %294 = sbr.rel (%p292) target = $region48
        $region47: #{collapsing_transformer_forward.11} parent=39 // pred_region
          %p295 = scmp.lt.s32.totalorder %s18, 1
          %s296 = scalar_select %p295, %s18, 1
          %s297 = scalar_lea.vmem %s1, %s296
        $region48: #{collapsing_transformer_forward.11} parent=39 // pred_fallthru
          _
        // Predicated region
        $region49: #{collapsing_transformer_forward.11} parent=39 // pred_check
          %p298 = pneg %p90
        $region50: #{collapsing_transformer_forward.11} parent=39 // pred_check_branch
          %300 = sbr.rel (%p298) target = $region52
        $region51: #{collapsing_transformer_forward.11} parent=39 // pred_region
          %p301 = scmp.lt.s32.totalorder %s18, 1
          %s302 = scalar_select %p301, %s18, 1
          %s303 = scalar_lea.vmem %s2, %s302
        $region52: #{collapsing_transformer_forward.11} parent=39 // pred_fallthru
          _
      $region40: #{collapsing_transformer_forward.11} parent=5 // pred_fallthru
        _
      %p304 = scmp.le.s32.totalorder 1, %s18
      %p305 = scmp.lt.s32.totalorder %s18, 3
      %p306 = pnand %p304, %p305
      %p307 = pneg %p306
      // Predicated region
      $region53: #{collapsing_transformer_forward.11} parent=5 // pred_check
        _
      $region54: #{collapsing_transformer_forward.11} parent=5 // pred_check_branch
        %309 = sbr.rel (%p306) target = $region56
      $region55: #{collapsing_transformer_forward.11} parent=5 // pred_region
        %s310 = ssub.s32 %s18, 1
        %p311 = scmp.lt.s32.totalorder %s23, 1
        %s312 = scalar_select %p311, %s23, 1
        %s313 = smul.addr %s312, 8
        %s314 = scalar_lea.vmem %s0, %s313
        %p315 = pneg %p44
        %p316 = pneg %p41
        %p317 = scmp.lt.s32.totalorder %s23, 1
        %s318 = scalar_select %p317, %s23, 1
        %s319 = scalar_lea.vmem %s1, %s318
        %p320 = pneg %p70
        %p321 = pneg %p67
        %p322 = scmp.lt.s32.totalorder %s23, 1
        %s323 = scalar_select %p322, %s23, 1
        %s324 = scalar_lea.vmem %s2, %s323
        %p325 = pneg %p96
        %p326 = pneg %p93
        %p327 = pneg %p117
        %p328 = pneg %p114
        %p329 = pneg %p138
        %p330 = pneg %p135
        %p331 = pneg %p159
        %p332 = pneg %p156
        %p333 = pneg %p180
        %p334 = pneg %p177
        %p335 = pneg %p201
        %p336 = pneg %p198
        %p337 = pneg %p222
        %p338 = pneg %p219
        %p339 = pneg %p248
        %p340 = pneg %p245
        %s341 = sand.u32 %s235, 1
        %s342 = scalar_lea.sflag [#allocation3], %s341
        %s343 = sand.u32 %s235, 1
        %s344 = scalar_lea.vmem [#allocation2], %s343
        %p345 = scmp.lt.s32.totalorder %s23, 1
        %s346 = scalar_select %p345, %s23, 1
        %s347 = smul.addr %s346, 8
        %s348 = scalar_lea.vmem %s0, %s347
        %p349 = scmp.lt.s32.totalorder %s23, 1
        %s350 = scalar_select %p349, %s23, 1
        %s351 = scalar_lea.vmem %s1, %s350
        %p352 = scmp.lt.s32.totalorder %s23, 1
        %s353 = scalar_select %p352, %s23, 1
        %s354 = scalar_lea.vmem %s2, %s353
        %v356 = vld [vmem:[%s348] sm:$0xff]
        %v357 = vld [vmem:[%s351] sm:$0x1]
        %v359 = vlaneseq
        %v360 = vshrl.u32 %v359, 7
        %v361 = vsub.s32 0, %v360
        %v362 = vrot.slane %v357, %v361
        %v364 = vmul.f32 %v356, %v362
        %v365 = vld [vmem:[%s354] sm:$0x1]
        %v367 = vlaneseq
        %v368 = vshrl.u32 %v367, 7
        %v369 = vsub.s32 0, %v368
        %v370 = vrot.slane %v365, %v369
        %v372 = vadd.f32 %v364, %v370
        %v373 = vpack.c.bf16 %v372, %v372
        %v374 = vld [vmem:[%s3] sm:$0xf]
        %v375 = vld [vmem:[%s3 + $0x4] sm:$0xf]
        %v376 = vld [vmem:[%s3 + $0x8] sm:$0xf]
        %v377 = vld [vmem:[%s3 + $0xc] sm:$0xf]
        %v378 = vld [vmem:[%s4] sm:$0x1]
        %v380 = vlaneseq
        %v381 = vshrl.u32 %v380, 7
        %v382 = vsub.s32 0, %v381
        %v383 = vrot.slane %v378, %v382
        %v389 = vunpack.c.l.b16 %v374
        %v390 = vunpack.c.l.b16 %v375
        %v391 = vunpack.c.l.b16 %v376
        %v392 = vunpack.c.l.b16 %v377
        %v393 = vpack.c.b16 %v390, %v389
        %v394 = vpack.c.b16 %v392, %v391
        %vm397 = vcmask 261120
        %v399 = vsel %vm397, %v373, 0
        %401 = vmatprep.subr.bf16.mxu0 0
        %402 = vmatpush1.bf16.msra.mxu0 %v393
        %403 = vmatprep.subr.bf16.mxu0 0
        %404 = vmatpush1.bf16.msra.mxu0 %v394
        %405 = vmatprep.subr.bf16.mxu0 0
        %406 = vmatpush1.bf16.msra.mxu0 0
        %407 = vmatprep.subr.bf16.mxu0 0
        %408 = vmatpush1.bf16.msra.mxu0 0
        %409 = vmatprep.subr.bf16.mxu0 0
        %410 = vmatpush1.bf16.msra.mxu0 0
        %411 = vmatprep.subr.bf16.mxu0 0
        %412 = vmatpush1.bf16.msra.mxu0 0
        %413 = vmatprep.subr.bf16.mxu0 0
        %414 = vmatpush1.bf16.msra.mxu0 0
        %415 = vmatprep.subr.bf16.mxu0 0
        %416 = vmatpush1.bf16.msra.mxu0 0
        %417 = vmatprep.subr.bf16.mxu0 0
        %418 = vmatpush1.bf16.msra.mxu0 0
        %419 = vmatprep.subr.bf16.mxu0 0
        %420 = vmatpush1.bf16.msra.mxu0 0
        %421 = vmatprep.subr.bf16.mxu0 0
        %422 = vmatpush1.bf16.msra.mxu0 0
        %423 = vmatprep.subr.bf16.mxu0 0
        %424 = vmatpush1.bf16.msra.mxu0 0
        %425 = vmatprep.subr.bf16.mxu0 0
        %426 = vmatpush1.bf16.msra.mxu0 0
        %427 = vmatprep.subr.bf16.mxu0 0
        %428 = vmatpush1.bf16.msra.mxu0 0
        %429 = vmatprep.subr.bf16.mxu0 0
        %430 = vmatpush1.bf16.msra.mxu0 0
        %431 = vmatprep.subr.bf16.mxu0 0
        %432 = vmatpush1.bf16.msra.mxu0 0
        %433 = vmatprep.mubr.bf16.mxu0 0
        %434 = vmatmul.mubr.bf16.gmra.mrb[0].mxu0 %v399
        %v435 = vpop.f32.mrb[0].mxu0
        %v436 = vadd.f32 %v383, %v435
        %v437 = vpop.f32.mrb[0].mxu0
        %v438 = vpop.f32.mrb[0].mxu0
        %v439 = vpop.f32.mrb[0].mxu0
        %440 = vdwg.mxu0
        %v441 = vld [vmem:[%s5] sm:$0xf]
        %v442 = vld [vmem:[%s5 + $0x4] sm:$0xf]
        %v443 = vld [vmem:[%s5 + $0x8] sm:$0xf]
        %v444 = vld [vmem:[%s5 + $0xc] sm:$0xf]
        %v445 = vld [vmem:[%s6] sm:$0x1]
        %v447 = vlaneseq
        %v448 = vshrl.u32 %v447, 7
        %v449 = vsub.s32 0, %v448
        %v450 = vrot.slane %v445, %v449
        %v452 = vadd.f32 %v356, %v450
        %v453 = vpack.c.bf16 %v436, %v436
        %455 = vrot.lane.b32.xlu0 %v453, 120
        %v456 = vpop.permute.xlu0 %455
        %vm457 = vcmask 64512
        %v459 = vsel %vm457, %v453, 0
        %v462 = vsel %vm457, %v456, 0
        %464 = vmatprep.subr.bf16.mxu0 0
        %465 = vmatpush1.bf16.xpose.msra.mxu0 %v462
        %466 = vmatprep.subr.bf16.mxu0 0
        %467 = vmatpush1.bf16.xpose.msra.mxu0 0
        %468 = vmatprep.subr.bf16.mxu0 0
        %469 = vmatpush1.bf16.xpose.msra.mxu0 0
        %470 = vmatprep.subr.bf16.mxu0 0
        %471 = vmatpush1.bf16.xpose.msra.mxu0 0
        %472 = vmatprep.subr.bf16.mxu0 0
        %473 = vmatpush1.bf16.xpose.msra.mxu0 0
        %474 = vmatprep.subr.bf16.mxu0 0
        %475 = vmatpush1.bf16.xpose.msra.mxu0 0
        %476 = vmatprep.subr.bf16.mxu0 0
        %477 = vmatpush1.bf16.xpose.msra.mxu0 0
        %478 = vmatprep.subr.bf16.mxu0 0
        %479 = vmatpush1.bf16.xpose.msra.mxu0 0
        %480 = vmatprep.subr.bf16.mxu0 0
        %481 = vmatpush1.bf16.xpose.msra.mxu0 0
        %482 = vmatprep.subr.bf16.mxu0 0
        %483 = vmatpush1.bf16.xpose.msra.mxu0 0
        %484 = vmatprep.subr.bf16.mxu0 0
        %485 = vmatpush1.bf16.xpose.msra.mxu0 0
        %486 = vmatprep.subr.bf16.mxu0 0
        %487 = vmatpush1.bf16.xpose.msra.mxu0 0
        %488 = vmatprep.subr.bf16.mxu0 0
        %489 = vmatpush1.bf16.xpose.msra.mxu0 0
        %490 = vmatprep.subr.bf16.mxu0 0
        %491 = vmatpush1.bf16.xpose.msra.mxu0 0
        %492 = vmatprep.subr.bf16.mxu0 0
        %493 = vmatpush1.bf16.xpose.msra.mxu0 0
        %494 = vmatprep.subr.bf16.mxu0 0
        %495 = vmatpush1.bf16.xpose.msra.mxu0 0
        %496 = vmatprep.mubr.bf16.mxu0 0
        %497 = vmatmul.mubr.bf16.gmra.mrb[0].mxu0 %v459
        %v498 = vpop.f32.mrb[0].mxu0
        %v499 = vadd.f32 0.0, %v498
        %v500 = vpop.f32.mrb[0].mxu0
        %v501 = vpop.f32.mrb[0].mxu0
        %v502 = vpop.f32.mrb[0].mxu0
        %503 = vdwg.mxu0
        %v504 = vmul.f32 %v499, 0.35355338
        %v505 = vsel %vm457, %v504, -inf
        %506 = vmax.xlane.f32.xlu0 %v505
        %v507 = vpop.xlane.xlu0 %506
        %v508 = vsub.f32 %v504, %v507
        %v509 = vmul.f32 %v508, 1.442695
        %v510 = vpow.pop %v509
        %v511 = vsel %vm457, %v510, 0.0
        %512 = vadd.xlane.f32.xlu0 %v511
        %v513 = vpop.xlane.xlu0 %512
        %v514 = vrcp.pop %v513
        %v515 = vmul.f32 %v510, %v514
        %v516 = vpack.c.bf16 %v515, %v515
        %517 = vrot.lane.b32.xlu0 %v453, 112
        %v518 = vpop.permute.xlu0 %517
        %v520 = vsel %vm457, %v516, 0
        %vm522 = vcmask 1043456
        %v524 = vsel %vm522, %v518, 0
        %526 = vmatprep.subr.bf16.mxu0 0
        %527 = vmatpush1.bf16.msra.mxu0 %v524
        %528 = vmatprep.subr.bf16.mxu0 0
        %529 = vmatpush1.bf16.msra.mxu0 0
        %530 = vmatprep.subr.bf16.mxu0 0
        %531 = vmatpush1.bf16.msra.mxu0 0
        %532 = vmatprep.subr.bf16.mxu0 0
        %533 = vmatpush1.bf16.msra.mxu0 0
        %534 = vmatprep.subr.bf16.mxu0 0
        %535 = vmatpush1.bf16.msra.mxu0 0
        %536 = vmatprep.subr.bf16.mxu0 0
        %537 = vmatpush1.bf16.msra.mxu0 0
        %538 = vmatprep.subr.bf16.mxu0 0
        %539 = vmatpush1.bf16.msra.mxu0 0
        %540 = vmatprep.subr.bf16.mxu0 0
        %541 = vmatpush1.bf16.msra.mxu0 0
        %542 = vmatprep.subr.bf16.mxu0 0
        %543 = vmatpush1.bf16.msra.mxu0 0
        %544 = vmatprep.subr.bf16.mxu0 0
        %545 = vmatpush1.bf16.msra.mxu0 0
        %546 = vmatprep.subr.bf16.mxu0 0
        %547 = vmatpush1.bf16.msra.mxu0 0
        %548 = vmatprep.subr.bf16.mxu0 0
        %549 = vmatpush1.bf16.msra.mxu0 0
        %550 = vmatprep.subr.bf16.mxu0 0
        %551 = vmatpush1.bf16.msra.mxu0 0
        %552 = vmatprep.subr.bf16.mxu0 0
        %553 = vmatpush1.bf16.msra.mxu0 0
        %554 = vmatprep.subr.bf16.mxu0 0
        %555 = vmatpush1.bf16.msra.mxu0 0
        %556 = vmatprep.subr.bf16.mxu0 0
        %557 = vmatpush1.bf16.msra.mxu0 0
        %558 = vmatprep.mubr.bf16.mxu0 0
        %559 = vmatmul.mubr.bf16.gmra.mrb[0].mxu0 %v520
        %v560 = vpop.f32.mrb[0].mxu0
        %v561 = vadd.f32 0.0, %v560
        %v562 = vpop.f32.mrb[0].mxu0
        %v563 = vpop.f32.mrb[0].mxu0
        %v564 = vpop.f32.mrb[0].mxu0
        %565 = vdwg.mxu0
        %v566 = vpack.c.bf16 %v561, %v561
        %v568 = vsel %vm457, %v566, 0
        %v571 = vsel %vm522, %v441, 0
        %573 = vmatprep.subr.bf16.mxu0 0
        %574 = vmatpush1.bf16.msra.mxu0 %v571
        %575 = vmatprep.subr.bf16.mxu0 0
        %576 = vmatpush1.bf16.msra.mxu0 0
        %577 = vmatprep.subr.bf16.mxu0 0
        %578 = vmatpush1.bf16.msra.mxu0 0
        %579 = vmatprep.subr.bf16.mxu0 0
        %580 = vmatpush1.bf16.msra.mxu0 0
        %581 = vmatprep.subr.bf16.mxu0 0
        %582 = vmatpush1.bf16.msra.mxu0 0
        %583 = vmatprep.subr.bf16.mxu0 0
        %584 = vmatpush1.bf16.msra.mxu0 0
        %585 = vmatprep.subr.bf16.mxu0 0
        %586 = vmatpush1.bf16.msra.mxu0 0
        %587 = vmatprep.subr.bf16.mxu0 0
        %588 = vmatpush1.bf16.msra.mxu0 0
        %589 = vmatprep.subr.bf16.mxu0 0
        %590 = vmatpush1.bf16.msra.mxu0 0
        %591 = vmatprep.subr.bf16.mxu0 0
        %592 = vmatpush1.bf16.msra.mxu0 0
        %593 = vmatprep.subr.bf16.mxu0 0
        %594 = vmatpush1.bf16.msra.mxu0 0
        %595 = vmatprep.subr.bf16.mxu0 0
        %596 = vmatpush1.bf16.msra.mxu0 0
        %597 = vmatprep.subr.bf16.mxu0 0
        %598 = vmatpush1.bf16.msra.mxu0 0
        %599 = vmatprep.subr.bf16.mxu0 0
        %600 = vmatpush1.bf16.msra.mxu0 0
        %601 = vmatprep.subr.bf16.mxu0 0
        %602 = vmatpush1.bf16.msra.mxu0 0
        %603 = vmatprep.subr.bf16.mxu0 0
        %604 = vmatpush1.bf16.msra.mxu0 0
        %605 = vmatprep.mubr.bf16.mxu0 0
        %606 = vmatmul.mubr.bf16.gmra.mrb[0].mxu0 %v568
        %v607 = vpop.f32.mrb[0].mxu0
        %v608 = vadd.f32 0.0, %v607
        %v609 = vpop.f32.mrb[0].mxu0
        %v610 = vpop.f32.mrb[0].mxu0
        %v611 = vpop.f32.mrb[0].mxu0
        %612 = vdwg.mxu0
        %v613 = vadd.f32 %v452, %v608
        %614 = vrot.lane.b32.xlu0 %v453, 104
        %v615 = vpop.permute.xlu0 %614
        %616 = vrot.lane.b32.xlu0 %v453, 96
        %v617 = vpop.permute.xlu0 %616
        %v619 = vsel %vm457, %v615, 0
        %v622 = vsel %vm457, %v617, 0
        %624 = vmatprep.subr.bf16.mxu0 0
        %625 = vmatpush1.bf16.xpose.msra.mxu0 %v622
        %626 = vmatprep.subr.bf16.mxu0 0
        %627 = vmatpush1.bf16.xpose.msra.mxu0 0
        %628 = vmatprep.subr.bf16.mxu0 0
        %629 = vmatpush1.bf16.xpose.msra.mxu0 0
        %630 = vmatprep.subr.bf16.mxu0 0
        %631 = vmatpush1.bf16.xpose.msra.mxu0 0
        %632 = vmatprep.subr.bf16.mxu0 0
        %633 = vmatpush1.bf16.xpose.msra.mxu0 0
        %634 = vmatprep.subr.bf16.mxu0 0
        %635 = vmatpush1.bf16.xpose.msra.mxu0 0
        %636 = vmatprep.subr.bf16.mxu0 0
        %637 = vmatpush1.bf16.xpose.msra.mxu0 0
        %638 = vmatprep.subr.bf16.mxu0 0
        %639 = vmatpush1.bf16.xpose.msra.mxu0 0
        %640 = vmatprep.subr.bf16.mxu0 0
        %641 = vmatpush1.bf16.xpose.msra.mxu0 0
        %642 = vmatprep.subr.bf16.mxu0 0
        %643 = vmatpush1.bf16.xpose.msra.mxu0 0
        %644 = vmatprep.subr.bf16.mxu0 0
        %645 = vmatpush1.bf16.xpose.msra.mxu0 0
        %646 = vmatprep.subr.bf16.mxu0 0
        %647 = vmatpush1.bf16.xpose.msra.mxu0 0
        %648 = vmatprep.subr.bf16.mxu0 0
        %649 = vmatpush1.bf16.xpose.msra.mxu0 0
        %650 = vmatprep.subr.bf16.mxu0 0
        %651 = vmatpush1.bf16.xpose.msra.mxu0 0
        %652 = vmatprep.subr.bf16.mxu0 0
        %653 = vmatpush1.bf16.xpose.msra.mxu0 0
        %654 = vmatprep.subr.bf16.mxu0 0
        %655 = vmatpush1.bf16.xpose.msra.mxu0 0
        %656 = vmatprep.mubr.bf16.mxu0 0
        %657 = vmatmul.mubr.bf16.gmra.mrb[0].mxu0 %v619
        %v658 = vpop.f32.mrb[0].mxu0
        %v659 = vadd.f32 0.0, %v658
        %v660 = vpop.f32.mrb[0].mxu0
        %v661 = vpop.f32.mrb[0].mxu0
        %v662 = vpop.f32.mrb[0].mxu0
        %663 = vdwg.mxu0
        %v664 = vmul.f32 %v659, 0.35355338
        %v665 = vsel %vm457, %v664, -inf
        %666 = vmax.xlane.f32.xlu0 %v665
        %v667 = vpop.xlane.xlu0 %666
        %v668 = vsub.f32 %v664, %v667
        %v669 = vmul.f32 %v668, 1.442695
        %v670 = vpow.pop %v669
        %v671 = vsel %vm457, %v670, 0.0
        %672 = vadd.xlane.f32.xlu0 %v671
        %v673 = vpop.xlane.xlu0 %672
        %v674 = vrcp.pop %v673
        %v675 = vmul.f32 %v670, %v674
        %v676 = vpack.c.bf16 %v675, %v675
        %677 = vrot.lane.b32.xlu0 %v453, 88
        %v678 = vpop.permute.xlu0 %677
        %v680 = vsel %vm457, %v676, 0
        %v683 = vsel %vm522, %v678, 0
        %685 = vmatprep.subr.bf16.mxu0 0
        %686 = vmatpush1.bf16.msra.mxu0 %v683
        %687 = vmatprep.subr.bf16.mxu0 0
        %688 = vmatpush1.bf16.msra.mxu0 0
        %689 = vmatprep.subr.bf16.mxu0 0
        %690 = vmatpush1.bf16.msra.mxu0 0
        %691 = vmatprep.subr.bf16.mxu0 0
        %692 = vmatpush1.bf16.msra.mxu0 0
        %693 = vmatprep.subr.bf16.mxu0 0
        %694 = vmatpush1.bf16.msra.mxu0 0
        %695 = vmatprep.subr.bf16.mxu0 0
        %696 = vmatpush1.bf16.msra.mxu0 0
        %697 = vmatprep.subr.bf16.mxu0 0
        %698 = vmatpush1.bf16.msra.mxu0 0
        %699 = vmatprep.subr.bf16.mxu0 0
        %700 = vmatpush1.bf16.msra.mxu0 0
        %701 = vmatprep.subr.bf16.mxu0 0
        %702 = vmatpush1.bf16.msra.mxu0 0
        %703 = vmatprep.subr.bf16.mxu0 0
        %704 = vmatpush1.bf16.msra.mxu0 0
        %705 = vmatprep.subr.bf16.mxu0 0
        %706 = vmatpush1.bf16.msra.mxu0 0
        %707 = vmatprep.subr.bf16.mxu0 0
        %708 = vmatpush1.bf16.msra.mxu0 0
        %709 = vmatprep.subr.bf16.mxu0 0
        %710 = vmatpush1.bf16.msra.mxu0 0
        %711 = vmatprep.subr.bf16.mxu0 0
        %712 = vmatpush1.bf16.msra.mxu0 0
        %713 = vmatprep.subr.bf16.mxu0 0
        %714 = vmatpush1.bf16.msra.mxu0 0
        %715 = vmatprep.subr.bf16.mxu0 0
        %716 = vmatpush1.bf16.msra.mxu0 0
        %717 = vmatprep.mubr.bf16.mxu0 0
        %718 = vmatmul.mubr.bf16.gmra.mrb[0].mxu0 %v680
        %v719 = vpop.f32.mrb[0].mxu0
        %v720 = vadd.f32 0.0, %v719
        %v721 = vpop.f32.mrb[0].mxu0
        %v722 = vpop.f32.mrb[0].mxu0
        %v723 = vpop.f32.mrb[0].mxu0
        %724 = vdwg.mxu0
        %v725 = vpack.c.bf16 %v720, %v720
        %v727 = vsel %vm457, %v725, 0
        %v730 = vsel %vm522, %v442, 0
        %732 = vmatprep.subr.bf16.mxu0 0
        %733 = vmatpush1.bf16.msra.mxu0 %v730
        %734 = vmatprep.subr.bf16.mxu0 0
        %735 = vmatpush1.bf16.msra.mxu0 0
        %736 = vmatprep.subr.bf16.mxu0 0
        %737 = vmatpush1.bf16.msra.mxu0 0
        %738 = vmatprep.subr.bf16.mxu0 0
        %739 = vmatpush1.bf16.msra.mxu0 0
        %740 = vmatprep.subr.bf16.mxu0 0
        %741 = vmatpush1.bf16.msra.mxu0 0
        %742 = vmatprep.subr.bf16.mxu0 0
        %743 = vmatpush1.bf16.msra.mxu0 0
        %744 = vmatprep.subr.bf16.mxu0 0
        %745 = vmatpush1.bf16.msra.mxu0 0
        %746 = vmatprep.subr.bf16.mxu0 0
        %747 = vmatpush1.bf16.msra.mxu0 0
        %748 = vmatprep.subr.bf16.mxu0 0
        %749 = vmatpush1.bf16.msra.mxu0 0
        %750 = vmatprep.subr.bf16.mxu0 0
        %751 = vmatpush1.bf16.msra.mxu0 0
        %752 = vmatprep.subr.bf16.mxu0 0
        %753 = vmatpush1.bf16.msra.mxu0 0
        %754 = vmatprep.subr.bf16.mxu0 0
        %755 = vmatpush1.bf16.msra.mxu0 0
        %756 = vmatprep.subr.bf16.mxu0 0
        %757 = vmatpush1.bf16.msra.mxu0 0
        %758 = vmatprep.subr.bf16.mxu0 0
        %759 = vmatpush1.bf16.msra.mxu0 0
        %760 = vmatprep.subr.bf16.mxu0 0
        %761 = vmatpush1.bf16.msra.mxu0 0
        %762 = vmatprep.subr.bf16.mxu0 0
        %763 = vmatpush1.bf16.msra.mxu0 0
        %764 = vmatprep.mubr.bf16.mxu0 0
        %765 = vmatmul.mubr.bf16.gmra.mrb[0].mxu0 %v727
        %v766 = vpop.f32.mrb[0].mxu0
        %v767 = vadd.f32 0.0, %v766
        %v768 = vpop.f32.mrb[0].mxu0
        %v769 = vpop.f32.mrb[0].mxu0
        %v770 = vpop.f32.mrb[0].mxu0
        %771 = vdwg.mxu0
        %v772 = vadd.f32 %v613, %v767
        %773 = vrot.lane.b32.xlu0 %v453, 80
        %v774 = vpop.permute.xlu0 %773
        %775 = vrot.lane.b32.xlu0 %v453, 72
        %v776 = vpop.permute.xlu0 %775
        %v778 = vsel %vm457, %v774, 0
        %v781 = vsel %vm457, %v776, 0
        %783 = vmatprep.subr.bf16.mxu0 0
        %784 = vmatpush1.bf16.xpose.msra.mxu0 %v781
        %785 = vmatprep.subr.bf16.mxu0 0
        %786 = vmatpush1.bf16.xpose.msra.mxu0 0
        %787 = vmatprep.subr.bf16.mxu0 0
        %788 = vmatpush1.bf16.xpose.msra.mxu0 0
        %789 = vmatprep.subr.bf16.mxu0 0
        %790 = vmatpush1.bf16.xpose.msra.mxu0 0
        %791 = vmatprep.subr.bf16.mxu0 0
        %792 = vmatpush1.bf16.xpose.msra.mxu0 0
        %793 = vmatprep.subr.bf16.mxu0 0
        %794 = vmatpush1.bf16.xpose.msra.mxu0 0
        %795 = vmatprep.subr.bf16.mxu0 0
        %796 = vmatpush1.bf16.xpose.msra.mxu0 0
        %797 = vmatprep.subr.bf16.mxu0 0
        %798 = vmatpush1.bf16.xpose.msra.mxu0 0
        %799 = vmatprep.subr.bf16.mxu0 0
        %800 = vmatpush1.bf16.xpose.msra.mxu0 0
        %801 = vmatprep.subr.bf16.mxu0 0
        %802 = vmatpush1.bf16.xpose.msra.mxu0 0
        %803 = vmatprep.subr.bf16.mxu0 0
        %804 = vmatpush1.bf16.xpose.msra.mxu0 0
        %805 = vmatprep.subr.bf16.mxu0 0
        %806 = vmatpush1.bf16.xpose.msra.mxu0 0
        %807 = vmatprep.subr.bf16.mxu0 0
        %808 = vmatpush1.bf16.xpose.msra.mxu0 0
        %809 = vmatprep.subr.bf16.mxu0 0
        %810 = vmatpush1.bf16.xpose.msra.mxu0 0
        %811 = vmatprep.subr.bf16.mxu0 0
        %812 = vmatpush1.bf16.xpose.msra.mxu0 0
        %813 = vmatprep.subr.bf16.mxu0 0
        %814 = vmatpush1.bf16.xpose.msra.mxu0 0
        %815 = vmatprep.mubr.bf16.mxu0 0
        %816 = vmatmul.mubr.bf16.gmra.mrb[0].mxu0 %v778
        %v817 = vpop.f32.mrb[0].mxu0
        %v818 = vadd.f32 0.0, %v817
        %v819 = vpop.f32.mrb[0].mxu0
        %v820 = vpop.f32.mrb[0].mxu0
        %v821 = vpop.f32.mrb[0].mxu0
        %822 = vdwg.mxu0
        %v823 = vmul.f32 %v818, 0.35355338
        %v824 = vsel %vm457, %v823, -inf
        %825 = vmax.xlane.f32.xlu0 %v824
        %v826 = vpop.xlane.xlu0 %825
        %v827 = vsub.f32 %v823, %v826
        %v828 = vmul.f32 %v827, 1.442695
        %v829 = vpow.pop %v828
        %v830 = vsel %vm457, %v829, 0.0
        %831 = vadd.xlane.f32.xlu0 %v830
        %v832 = vpop.xlane.xlu0 %831
        %v833 = vrcp.pop %v832
        %v834 = vmul.f32 %v829, %v833
        %v835 = vpack.c.bf16 %v834, %v834
        %836 = vrot.lane.b32.xlu0 %v453, 64
        %v837 = vpop.permute.xlu0 %836
        %v839 = vsel %vm457, %v835, 0
        %v842 = vsel %vm522, %v837, 0
        %844 = vmatprep.subr.bf16.mxu0 0
        %845 = vmatpush1.bf16.msra.mxu0 %v842
        %846 = vmatprep.subr.bf16.mxu0 0
        %847 = vmatpush1.bf16.msra.mxu0 0
        %848 = vmatprep.subr.bf16.mxu0 0
        %849 = vmatpush1.bf16.msra.mxu0 0
        %850 = vmatprep.subr.bf16.mxu0 0
        %851 = vmatpush1.bf16.msra.mxu0 0
        %852 = vmatprep.subr.bf16.mxu0 0
        %853 = vmatpush1.bf16.msra.mxu0 0
        %854 = vmatprep.subr.bf16.mxu0 0
        %855 = vmatpush1.bf16.msra.mxu0 0
        %856 = vmatprep.subr.bf16.mxu0 0
        %857 = vmatpush1.bf16.msra.mxu0 0
        %858 = vmatprep.subr.bf16.mxu0 0
        %859 = vmatpush1.bf16.msra.mxu0 0
        %860 = vmatprep.subr.bf16.mxu0 0
        %861 = vmatpush1.bf16.msra.mxu0 0
        %862 = vmatprep.subr.bf16.mxu0 0
        %863 = vmatpush1.bf16.msra.mxu0 0
        %864 = vmatprep.subr.bf16.mxu0 0
        %865 = vmatpush1.bf16.msra.mxu0 0
        %866 = vmatprep.subr.bf16.mxu0 0
        %867 = vmatpush1.bf16.msra.mxu0 0
        %868 = vmatprep.subr.bf16.mxu0 0
        %869 = vmatpush1.bf16.msra.mxu0 0
        %870 = vmatprep.subr.bf16.mxu0 0
        %871 = vmatpush1.bf16.msra.mxu0 0
        %872 = vmatprep.subr.bf16.mxu0 0
        %873 = vmatpush1.bf16.msra.mxu0 0
        %874 = vmatprep.subr.bf16.mxu0 0
        %875 = vmatpush1.bf16.msra.mxu0 0
        %876 = vmatprep.mubr.bf16.mxu0 0
        %877 = vmatmul.mubr.bf16.gmra.mrb[0].mxu0 %v839
        %v878 = vpop.f32.mrb[0].mxu0
        %v879 = vadd.f32 0.0, %v878
        %v880 = vpop.f32.mrb[0].mxu0
        %v881 = vpop.f32.mrb[0].mxu0
        %v882 = vpop.f32.mrb[0].mxu0
        %883 = vdwg.mxu0
        %v884 = vpack.c.bf16 %v879, %v879
        %v886 = vsel %vm457, %v884, 0
        %v889 = vsel %vm522, %v443, 0
        %891 = vmatprep.subr.bf16.mxu0 0
        %892 = vmatpush1.bf16.msra.mxu0 %v889
        %893 = vmatprep.subr.bf16.mxu0 0
        %894 = vmatpush1.bf16.msra.mxu0 0
        %895 = vmatprep.subr.bf16.mxu0 0
        %896 = vmatpush1.bf16.msra.mxu0 0
        %897 = vmatprep.subr.bf16.mxu0 0
        %898 = vmatpush1.bf16.msra.mxu0 0
        %899 = vmatprep.subr.bf16.mxu0 0
        %900 = vmatpush1.bf16.msra.mxu0 0
        %901 = vmatprep.subr.bf16.mxu0 0
        %902 = vmatpush1.bf16.msra.mxu0 0
        %903 = vmatprep.subr.bf16.mxu0 0
        %904 = vmatpush1.bf16.msra.mxu0 0
        %905 = vmatprep.subr.bf16.mxu0 0
        %906 = vmatpush1.bf16.msra.mxu0 0
        %907 = vmatprep.subr.bf16.mxu0 0
        %908 = vmatpush1.bf16.msra.mxu0 0
        %909 = vmatprep.subr.bf16.mxu0 0
        %910 = vmatpush1.bf16.msra.mxu0 0
        %911 = vmatprep.subr.bf16.mxu0 0
        %912 = vmatpush1.bf16.msra.mxu0 0
        %913 = vmatprep.subr.bf16.mxu0 0
        %914 = vmatpush1.bf16.msra.mxu0 0
        %915 = vmatprep.subr.bf16.mxu0 0
        %916 = vmatpush1.bf16.msra.mxu0 0
        %917 = vmatprep.subr.bf16.mxu0 0
        %918 = vmatpush1.bf16.msra.mxu0 0
        %919 = vmatprep.subr.bf16.mxu0 0
        %920 = vmatpush1.bf16.msra.mxu0 0
        %921 = vmatprep.subr.bf16.mxu0 0
        %922 = vmatpush1.bf16.msra.mxu0 0
        %923 = vmatprep.mubr.bf16.mxu0 0
        %924 = vmatmul.mubr.bf16.gmra.mrb[0].mxu0 %v886
        %v925 = vpop.f32.mrb[0].mxu0
        %v926 = vadd.f32 0.0, %v925
        %v927 = vpop.f32.mrb[0].mxu0
        %v928 = vpop.f32.mrb[0].mxu0
        %v929 = vpop.f32.mrb[0].mxu0
        %930 = vdwg.mxu0
        %v931 = vadd.f32 %v772, %v926
        %932 = vrot.lane.b32.xlu0 %v453, 56
        %v933 = vpop.permute.xlu0 %932
        %934 = vrot.lane.b32.xlu0 %v453, 48
        %v935 = vpop.permute.xlu0 %934
        %v937 = vsel %vm457, %v933, 0
        %v940 = vsel %vm457, %v935, 0
        %942 = vmatprep.subr.bf16.mxu0 0
        %943 = vmatpush1.bf16.xpose.msra.mxu0 %v940
        %944 = vmatprep.subr.bf16.mxu0 0
        %945 = vmatpush1.bf16.xpose.msra.mxu0 0
        %946 = vmatprep.subr.bf16.mxu0 0
        %947 = vmatpush1.bf16.xpose.msra.mxu0 0
        %948 = vmatprep.subr.bf16.mxu0 0
        %949 = vmatpush1.bf16.xpose.msra.mxu0 0
        %950 = vmatprep.subr.bf16.mxu0 0
        %951 = vmatpush1.bf16.xpose.msra.mxu0 0
        %952 = vmatprep.subr.bf16.mxu0 0
        %953 = vmatpush1.bf16.xpose.msra.mxu0 0
        %954 = vmatprep.subr.bf16.mxu0 0
        %955 = vmatpush1.bf16.xpose.msra.mxu0 0
        %956 = vmatprep.subr.bf16.mxu0 0
        %957 = vmatpush1.bf16.xpose.msra.mxu0 0
        %958 = vmatprep.subr.bf16.mxu0 0
        %959 = vmatpush1.bf16.xpose.msra.mxu0 0
        %960 = vmatprep.subr.bf16.mxu0 0
        %961 = vmatpush1.bf16.xpose.msra.mxu0 0
        %962 = vmatprep.subr.bf16.mxu0 0
        %963 = vmatpush1.bf16.xpose.msra.mxu0 0
        %964 = vmatprep.subr.bf16.mxu0 0
        %965 = vmatpush1.bf16.xpose.msra.mxu0 0
        %966 = vmatprep.subr.bf16.mxu0 0
        %967 = vmatpush1.bf16.xpose.msra.mxu0 0
        %968 = vmatprep.subr.bf16.mxu0 0
        %969 = vmatpush1.bf16.xpose.msra.mxu0 0
        %970 = vmatprep.subr.bf16.mxu0 0
        %971 = vmatpush1.bf16.xpose.msra.mxu0 0
        %972 = vmatprep.subr.bf16.mxu0 0
        %973 = vmatpush1.bf16.xpose.msra.mxu0 0
        %974 = vmatprep.mubr.bf16.mxu0 0
        %975 = vmatmul.mubr.bf16.gmra.mrb[0].mxu0 %v937
        %v976 = vpop.f32.mrb[0].mxu0
        %v977 = vadd.f32 0.0, %v976
        %v978 = vpop.f32.mrb[0].mxu0
        %v979 = vpop.f32.mrb[0].mxu0
        %v980 = vpop.f32.mrb[0].mxu0
        %981 = vdwg.mxu0
        %v982 = vmul.f32 %v977, 0.35355338
        %v983 = vsel %vm457, %v982, -inf
        %984 = vmax.xlane.f32.xlu0 %v983
        %v985 = vpop.xlane.xlu0 %984
        %v986 = vsub.f32 %v982, %v985
        %v987 = vmul.f32 %v986, 1.442695
        %v988 = vpow.pop %v987
        %v989 = vsel %vm457, %v988, 0.0
        %990 = vadd.xlane.f32.xlu0 %v989
        %v991 = vpop.xlane.xlu0 %990
        %v992 = vrcp.pop %v991
        %v993 = vmul.f32 %v988, %v992
        %v994 = vpack.c.bf16 %v993, %v993
        %995 = vrot.lane.b32.xlu0 %v453, 40
        %v996 = vpop.permute.xlu0 %995
        %v998 = vsel %vm457, %v994, 0
        %v1001 = vsel %vm522, %v996, 0
        %1003 = vmatprep.subr.bf16.mxu0 0
        %1004 = vmatpush1.bf16.msra.mxu0 %v1001
        %1005 = vmatprep.subr.bf16.mxu0 0
        %1006 = vmatpush1.bf16.msra.mxu0 0
        %1007 = vmatprep.subr.bf16.mxu0 0
        %1008 = vmatpush1.bf16.msra.mxu0 0
        %1009 = vmatprep.subr.bf16.mxu0 0
        %1010 = vmatpush1.bf16.msra.mxu0 0
        %1011 = vmatprep.subr.bf16.mxu0 0
        %1012 = vmatpush1.bf16.msra.mxu0 0
        %1013 = vmatprep.subr.bf16.mxu0 0
        %1014 = vmatpush1.bf16.msra.mxu0 0
        %1015 = vmatprep.subr.bf16.mxu0 0
        %1016 = vmatpush1.bf16.msra.mxu0 0
        %1017 = vmatprep.subr.bf16.mxu0 0
        %1018 = vmatpush1.bf16.msra.mxu0 0
        %1019 = vmatprep.subr.bf16.mxu0 0
        %1020 = vmatpush1.bf16.msra.mxu0 0
        %1021 = vmatprep.subr.bf16.mxu0 0
        %1022 = vmatpush1.bf16.msra.mxu0 0
        %1023 = vmatprep.subr.bf16.mxu0 0
        %1024 = vmatpush1.bf16.msra.mxu0 0
        %1025 = vmatprep.subr.bf16.mxu0 0
        %1026 = vmatpush1.bf16.msra.mxu0 0
        %1027 = vmatprep.subr.bf16.mxu0 0
        %1028 = vmatpush1.bf16.msra.mxu0 0
        %1029 = vmatprep.subr.bf16.mxu0 0
        %1030 = vmatpush1.bf16.msra.mxu0 0
        %1031 = vmatprep.subr.bf16.mxu0 0
        %1032 = vmatpush1.bf16.msra.mxu0 0
        %1033 = vmatprep.subr.bf16.mxu0 0
        %1034 = vmatpush1.bf16.msra.mxu0 0
        %1035 = vmatprep.mubr.bf16.mxu0 0
        %1036 = vmatmul.mubr.bf16.gmra.mrb[0].mxu0 %v998
        %v1037 = vpop.f32.mrb[0].mxu0
        %v1038 = vadd.f32 0.0, %v1037
        %v1039 = vpop.f32.mrb[0].mxu0
        %v1040 = vpop.f32.mrb[0].mxu0
        %v1041 = vpop.f32.mrb[0].mxu0
        %1042 = vdwg.mxu0
        %v1043 = vpack.c.bf16 %v1038, %v1038
        %v1045 = vsel %vm457, %v1043, 0
        %v1048 = vsel %vm522, %v444, 0
        %1050 = vmatprep.subr.bf16.mxu0 0
        %1051 = vmatpush1.bf16.msra.mxu0 %v1048
        %1052 = vmatprep.subr.bf16.mxu0 0
        %1053 = vmatpush1.bf16.msra.mxu0 0
        %1054 = vmatprep.subr.bf16.mxu0 0
        %1055 = vmatpush1.bf16.msra.mxu0 0
        %1056 = vmatprep.subr.bf16.mxu0 0
        %1057 = vmatpush1.bf16.msra.mxu0 0
        %1058 = vmatprep.subr.bf16.mxu0 0
        %1059 = vmatpush1.bf16.msra.mxu0 0
        %1060 = vmatprep.subr.bf16.mxu0 0
        %1061 = vmatpush1.bf16.msra.mxu0 0
        %1062 = vmatprep.subr.bf16.mxu0 0
        %1063 = vmatpush1.bf16.msra.mxu0 0
        %1064 = vmatprep.subr.bf16.mxu0 0
        %1065 = vmatpush1.bf16.msra.mxu0 0
        %1066 = vmatprep.subr.bf16.mxu0 0
        %1067 = vmatpush1.bf16.msra.mxu0 0
        %1068 = vmatprep.subr.bf16.mxu0 0
        %1069 = vmatpush1.bf16.msra.mxu0 0
        %1070 = vmatprep.subr.bf16.mxu0 0
        %1071 = vmatpush1.bf16.msra.mxu0 0
        %1072 = vmatprep.subr.bf16.mxu0 0
        %1073 = vmatpush1.bf16.msra.mxu0 0
        %1074 = vmatprep.subr.bf16.mxu0 0
        %1075 = vmatpush1.bf16.msra.mxu0 0
        %1076 = vmatprep.subr.bf16.mxu0 0
        %1077 = vmatpush1.bf16.msra.mxu0 0
        %1078 = vmatprep.subr.bf16.mxu0 0
        %1079 = vmatpush1.bf16.msra.mxu0 0
        %1080 = vmatprep.subr.bf16.mxu0 0
        %1081 = vmatpush1.bf16.msra.mxu0 0
        %1082 = vmatprep.mubr.bf16.mxu0 0
        %1083 = vmatmul.mubr.bf16.gmra.mrb[0].mxu0 %v1045
        %v1084 = vpop.f32.mrb[0].mxu0
        %v1085 = vadd.f32 0.0, %v1084
        %v1086 = vpop.f32.mrb[0].mxu0
        %v1087 = vpop.f32.mrb[0].mxu0
        %v1088 = vpop.f32.mrb[0].mxu0
        %1089 = vdwg.mxu0
        %v1090 = vadd.f32 %v931, %v1085
        %v1091 = vsel %vm397, %v1090, 0.0
        %v1092 = vrot.slane %v1091, 4
        %v1093 = vadd.f32 %v1091, %v1092
        %v1094 = vrot.slane %v1093, 2
        %v1095 = vadd.f32 %v1093, %v1094
        %v1096 = vrot.slane %v1095, 1
        %v1097 = vadd.f32 %v1095, %v1096
        %v1098 = vmul.f32 %v1097, 0.125
        %v1099 = vpack.c.bf16 %v1098, %v1098
        %v1100 = vld [vmem:[%s7] sm:$0xf]
        %v1101 = vld [vmem:[%s7 + $0x4] sm:$0xf]
        %v1102 = vld [vmem:[%s7 + $0x8] sm:$0xf]
        %v1103 = vld [vmem:[%s7 + $0xc] sm:$0xf]
        %v1104 = vld [vmem:[%s8] sm:$0x1]
        %v1109 = vunpack.c.l.b16 %v1100
        %v1110 = vunpack.c.l.b16 %v1101
        %v1111 = vunpack.c.l.b16 %v1102
        %v1112 = vunpack.c.l.b16 %v1103
        %v1113 = vpack.c.b16 %v1110, %v1109
        %v1114 = vpack.c.b16 %v1112, %v1111
        %v1118 = vsel %vm397, %v1099, 0
        %1120 = vmatprep.subr.bf16.mxu0 0
        %1121 = vmatpush1.bf16.msra.mxu0 %v1113
        %1122 = vmatprep.subr.bf16.mxu0 0
        %1123 = vmatpush1.bf16.msra.mxu0 %v1114
        %1124 = vmatprep.subr.bf16.mxu0 0
        %1125 = vmatpush1.bf16.msra.mxu0 0
        %1126 = vmatprep.subr.bf16.mxu0 0
        %1127 = vmatpush1.bf16.msra.mxu0 0
        %1128 = vmatprep.subr.bf16.mxu0 0
        %1129 = vmatpush1.bf16.msra.mxu0 0
        %1130 = vmatprep.subr.bf16.mxu0 0
        %1131 = vmatpush1.bf16.msra.mxu0 0
        %1132 = vmatprep.subr.bf16.mxu0 0
        %1133 = vmatpush1.bf16.msra.mxu0 0
        %1134 = vmatprep.subr.bf16.mxu0 0
        %1135 = vmatpush1.bf16.msra.mxu0 0
        %1136 = vmatprep.subr.bf16.mxu0 0
        %1137 = vmatpush1.bf16.msra.mxu0 0
        %1138 = vmatprep.subr.bf16.mxu0 0
        %1139 = vmatpush1.bf16.msra.mxu0 0
        %1140 = vmatprep.subr.bf16.mxu0 0
        %1141 = vmatpush1.bf16.msra.mxu0 0
        %1142 = vmatprep.subr.bf16.mxu0 0
        %1143 = vmatpush1.bf16.msra.mxu0 0
        %1144 = vmatprep.subr.bf16.mxu0 0
        %1145 = vmatpush1.bf16.msra.mxu0 0
        %1146 = vmatprep.subr.bf16.mxu0 0
        %1147 = vmatpush1.bf16.msra.mxu0 0
        %1148 = vmatprep.subr.bf16.mxu0 0
        %1149 = vmatpush1.bf16.msra.mxu0 0
        %1150 = vmatprep.subr.bf16.mxu0 0
        %1151 = vmatpush1.bf16.msra.mxu0 0
        %1152 = vmatprep.mubr.bf16.mxu0 0
        %1153 = vmatmul.mubr.bf16.gmra.mrb[0].mxu0 %v1118
        %v1154 = vpop.f32.mrb[0].mxu0
        %v1155 = vadd.f32 %v1104, %v1154
        %v1156 = vpop.f32.mrb[0].mxu0
        %v1157 = vpop.f32.mrb[0].mxu0
        %v1158 = vpop.f32.mrb[0].mxu0
        %1159 = vdwg.mxu0
        %vm1160 = vcmask 253952
        %1161 = vst.msk [vmem:[%s344] sm:$0x1] %vm1160, %v1155
        %s1162 = sand.u32 %s235, 1
        %s1163 = scalar_lea.sflag [#allocation3], %s1162
        %s1164 = sand.u32 %s235, 1
        %s1165 = scalar_lea.vmem [#allocation2], %s1164
        // Predicated region
        $region57: #{collapsing_transformer_forward.11} parent=55 // pred_check
          %p1166 = pneg %p245
        $region58: #{collapsing_transformer_forward.11} parent=55 // pred_check_branch
          %1168 = sbr.rel (%p1166) target = $region60
        $region59: #{collapsing_transformer_forward.11} parent=55 // pred_region
          %s1170 = ssub.s32 16, 16
          %1171 = vsyncadd %s1163, %s1170
          %s1172 = smul.addr %s23, 16
          %s1173 = scalar_lea.hbm %s9, %s1172
          %s1175 = sshll.u32 %s1165, 4
          %s1176 = int_to_ptr.vmem [resolvable:$true] %s1175
          %1178 = dma.vmem_to_hbm [thread:$0]  %s1176, 16, %s1173, %s1163
        $region60: #{collapsing_transformer_forward.11} parent=55 // pred_fallthru
          _
      $region56: #{collapsing_transformer_forward.11} parent=5 // pred_fallthru
        _
      %p1179 = scmp.le.s32.totalorder 2, %s18
      // Predicated region
      $region61: #{collapsing_transformer_forward.11} parent=5 // pred_check
        %p1180 = pneg %p1179
      $region62: #{collapsing_transformer_forward.11} parent=5 // pred_check_branch
        %1182 = sbr.rel (%p1180) target = $region64
      $region63: #{collapsing_transformer_forward.11} parent=5 // pred_region
        %s1183 = ssub.s32 %s18, 2
        // Predicated region
        $region65: #{collapsing_transformer_forward.11} parent=63 // pred_check
          %p1184 = pneg %p251
        $region66: #{collapsing_transformer_forward.11} parent=63 // pred_check_branch
          %1186 = sbr.rel (%p1184) target = $region68
        $region67: #{collapsing_transformer_forward.11} parent=63 // pred_region
          %s1187 = sand.u32 %s236, 1
          %s1188 = scalar_lea.sflag [#allocation3], %s1187
          %s1189 = sand.u32 %s236, 1
          %s1190 = scalar_lea.vmem [#allocation2], %s1189
          %1191 = dma.done %s1188, 16
        $region68: #{collapsing_transformer_forward.11} parent=63 // pred_fallthru
          _
      $region64: #{collapsing_transformer_forward.11} parent=5 // pred_fallthru
        _
    $region6: #{collapsing_transformer_forward.11} parent=1 // loop_footer
      %s22 = sadd.s32 1, %s18
    $region7: #{collapsing_transformer_forward.11} parent=1 // loop_footer_branch
      %17 = sbr.rel target = $region3
    $region8: #{collapsing_transformer_forward.11} parent=1 // loop_exit
      _
    %1192 = vsyncpa [#allocation3], 1
    %s1193 = scalar_lea.sflag [#allocation3], 1
    %1194 = vsyncpa %s1193, 1

</llo_original>
